<compile_context>
chip_gen: v7x
topology: tpu7x:2x2x1
jax: 0.10.0
libtpu: 0.0.40
codegen_flags: <defaults>
</compile_context>

<pallas_src>
import jax
import jax.numpy as jnp
from jax import lax
from jax.experimental import pallas as pl
from jax.experimental.pallas import tpu as pltpu

BN_EPS = 0.8                            # nn.BatchNorm3d(in_features, 0.8) -> eps
VMEM_LIMIT_BYTES = 32 * 1024 * 1024     # fits v5e/v6e (128 MiB) and v7x (64 MiB)


# ---------------------------------------------------------------------------
# Kernels
# ---------------------------------------------------------------------------
def _conv_stats_kernel(x0_ref, x1_ref, x2_ref, w_ref, y_ref, st_ref):
    """3x3x3 'same' Conv3d for one (n, d) output slice + partial batch stats.

    x{k}_ref: (Hp, Wp, C) zero-padded input slab at padded depth index d + k
    w_ref:    (27, C, C)  weights, k = kd*9 + kh*3 + kw, laid out (Cin, Cout)
    y_ref:    (H*W, C)    pre-BN conv output for this slice (bias omitted:
                          a per-channel bias cancels under training-mode BN)
    st_ref:   (2, C)      per-slice partial [sum(y), sum(y*y)]
    """
    Hp, Wp, C = x0_ref.shape
    H, W = Hp - 2, Wp - 2
    acc = jnp.zeros((H * W, C), jnp.float32)
    slabs = (x0_ref, x1_ref, x2_ref)
    k = 0
    for kd in range(3):
        slab = slabs[kd][...]                              # (Hp, Wp, C) in VMEM
        for kh in range(3):
            for kw in range(3):
                win = slab[kh:kh + H, kw:kw + W, :]        # shifted window
                acc = acc + jnp.dot(win.reshape(H * W, C), w_ref[k],
                                    preferred_element_type=jnp.float32)
                k += 1
    y_ref[...] = acc
    st_ref[0:1, :] = jnp.sum(acc, axis=0, keepdims=True)
    st_ref[1:2, :] = jnp.sum(acc * acc, axis=0, keepdims=True)


def _bn_prelu_kernel(y_ref, scale_ref, shift_ref, alpha_ref, o_ref):
    yn = y_ref[...] * scale_ref[...] + shift_ref[...]      # folded BN affine
    o_ref[...] = jnp.where(yn >= 0.0, yn, yn * alpha_ref[...])


def _bn_residual_kernel(y_ref, scale_ref, shift_ref, x_ref, o_ref):
    o_ref[...] = x_ref[...] + (y_ref[...] * scale_ref[...] + shift_ref[...])


# ---------------------------------------------------------------------------
# pallas_call wrappers
# ---------------------------------------------------------------------------
def _slab_index_map(kd):
    def imap(n, d):
        return (n, d + kd, 0, 0, 0)
    return imap


def _conv3d_with_stats(x_pad, w27):
    """x_pad: (N, D+2, H+2, W+2, C) zero-padded NDHWC input; w27: (27, C, C)."""
    N, Dp, Hp, Wp, C = x_pad.shape
    D, H, W = Dp - 2, Hp - 2, Wp - 2
    HW = H * W

    slab_specs = [
        pl.BlockSpec((None, None, Hp, Wp, C), _slab_index_map(kd))
        for kd in range(3)
    ]
    w_spec = pl.BlockSpec((27, C, C), lambda n, d: (0, 0, 0))

    flops = 2 * N * D * HW * 27 * C * C
    bytes_accessed = 4 * (3 * x_pad.size + w27.size + N * D * HW * C + N * D * 2 * C)

    y, st = pl.pallas_call(
        _conv_stats_kernel,
        out_shape=(jax.ShapeDtypeStruct((N, D, HW, C), jnp.float32),
                   jax.ShapeDtypeStruct((N, D, 2, C), jnp.float32)),
        grid=(N, D),
        in_specs=[slab_specs[0], slab_specs[1], slab_specs[2], w_spec],
        out_specs=(pl.BlockSpec((None, None, HW, C), lambda n, d: (n, d, 0, 0)),
                   pl.BlockSpec((None, None, 2, C), lambda n, d: (n, d, 0, 0))),
        compiler_params=pltpu.CompilerParams(
            dimension_semantics=("parallel", "parallel"),
            vmem_limit_bytes=VMEM_LIMIT_BYTES),
        cost_estimate=pl.CostEstimate(flops=flops, transcendentals=0,
                                      bytes_accessed=bytes_accessed),
    )(x_pad, x_pad, x_pad, w27)
    return y, st


def _bn_prelu(y2d, scale_row, shift_row, alpha_row):
    R, K = y2d.shape
    Rb = 8 if R % 8 == 0 else R
    row_spec = pl.BlockSpec((Rb, K), lambda r: (r, 0))
    par_spec = pl.BlockSpec((1, K), lambda r: (0, 0))
    return pl.pallas_call(
        _bn_prelu_kernel,
        out_shape=jax.ShapeDtypeStruct((R, K), jnp.float32),
        grid=(R // Rb,),
        in_specs=[row_spec, par_spec, par_spec, par_spec],
        out_specs=row_spec,
        compiler_params=pltpu.CompilerParams(
            dimension_semantics=("parallel",),
            vmem_limit_bytes=VMEM_LIMIT_BYTES),
    )(y2d, scale_row, shift_row, alpha_row)


def _bn_residual(y2d, scale_row, shift_row, x2d):
    R, K = y2d.shape
    Rb = 8 if R % 8 == 0 else R
    row_spec = pl.BlockSpec((Rb, K), lambda r: (r, 0))
    par_spec = pl.BlockSpec((1, K), lambda r: (0, 0))
    return pl.pallas_call(
        _bn_residual_kernel,
        out_shape=jax.ShapeDtypeStruct((R, K), jnp.float32),
        grid=(R // Rb,),
        in_specs=[row_spec, par_spec, par_spec, row_spec],
        out_specs=row_spec,
        compiler_params=pltpu.CompilerParams(
            dimension_semantics=("parallel",),
            vmem_limit_bytes=VMEM_LIMIT_BYTES),
    )(y2d, scale_row, shift_row, x2d)


def _fold_bn(stats, gamma, beta, count, hw):
    """Partial [sum, sum^2] -> tiled per-channel (scale, shift) rows."""
    s = jnp.sum(stats, axis=(0, 1))                        # (2, C)
    mean = s[0] / count
    var = s[1] / count - mean * mean                       # biased batch var
    scale = gamma * lax.rsqrt(var + BN_EPS)
    shift = beta - mean * scale
    c = gamma.shape[0]
    return (jnp.tile(scale, hw).reshape(1, hw * c),
            jnp.tile(shift, hw).reshape(1, hw * c))


# ---------------------------------------------------------------------------
# Full residual block
# ---------------------------------------------------------------------------
def _residual_block_impl(x_ncdhw, params):
    N, C, D, H, W = x_ncdhw.shape
    P = N * D * H * W
    K = H * W * C
    R = N * D

    x_cl = jnp.transpose(x_ncdhw, (0, 2, 3, 4, 1)).astype(jnp.float32)   # NDHWC
    pad = ((0, 0), (1, 1), (1, 1), (1, 1), (0, 0))

    # conv1 (+ stats) -> folded BN1 + PReLU (lane-dense pass)
    y1, st1 = _conv3d_with_stats(jnp.pad(x_cl, pad), params["w1"])
    scale1, shift1 = _fold_bn(st1, params["g1"], params["be1"], P, H * W)
    alpha_row = jnp.full((1, K), params["alpha"], jnp.float32)
    z2d = _bn_prelu(y1.reshape(R, K), scale1, shift1, alpha_row)

    # conv2 (+ stats) -> folded BN2 + residual add (lane-dense pass)
    z_pad = jnp.pad(z2d.reshape(N, D, H, W, C), pad)
    y2, st2 = _conv3d_with_stats(z_pad, params["w2"])
    scale2, shift2 = _fold_bn(st2, params["g2"], params["be2"], P, H * W)
    out2d = _bn_residual(y2.reshape(R, K), scale2, shift2, x_cl.reshape(R, K))

    out = out2d.reshape(N, D, H, W, C)
    return jnp.transpose(out, (0, 4, 1, 2, 3))             # back to NCDHW


residual_block = jax.jit(_residual_block_impl)


def pack_conv3d_weight(w):
    """PyTorch Conv3d weight (Cout, Cin, 3, 3, 3) -> (27, Cin, Cout)."""
    c_out, c_in = w.shape[0], w.shape[1]
    return jnp.transpose(w, (2, 3, 4, 1, 0)).reshape(27, c_in, c_out)


# ---------------------------------------------------------------------------
# Pure-JAX reference (faithful to the PyTorch module, incl. conv bias)
# ---------------------------------------------------------------------------
def reference(x, w1, b1, g1, be1, a, w2, b2, g2, be2):
    def conv(x, w, b):
        y = lax.conv_general_dilated(
            x, w, window_strides=(1, 1, 1), padding="SAME",
            dimension_numbers=("NCDHW", "OIDHW", "NCDHW"))
        return y + b.reshape(1, -1, 1, 1, 1)

    def bn(x, g, be):
        mean = jnp.mean(x, axis=(0, 2, 3, 4), keepdims=True)
        var = jnp.mean(jnp.square(x - mean), axis=(0, 2, 3, 4), keepdims=True)
        return ((x - mean) * lax.rsqrt(var + BN_EPS)
                * g.reshape(1, -1, 1, 1, 1) + be.reshape(1, -1, 1, 1, 1))

    y = conv(x, w1, b1)
    y = bn(y, g1, be1)
    y = jnp.where(y >= 0, y, a * y)
    y = conv(y, w2, b2)
    y = bn(y, g2, be2)
    return x + y


# ---------------------------------------------------------------------------
if __name__ == "__main__":
    key = jax.random.PRNGKey(0)
    N, C, D, H, W = 2, 4, 8, 8, 8          # in_features = 4
    k = jax.random.split(key, 5)

    x = jax.random.normal(k[0], (N, C, D, H, W), jnp.float32)
    # synthetic parameters with the module's __init__ shapes
    w1 = jax.random.normal(k[1], (C, C, 3, 3, 3), jnp.float32) * 0.1
    b1 = jax.random.normal(k[2], (C,), jnp.float32) * 0.1
    w2 = jax.random.normal(k[3], (C, C, 3, 3, 3), jnp.float32) * 0.1
    b2 = jax.random.normal(k[4], (C,), jnp.float32) * 0.1
    g1 = jnp.ones((C,), jnp.float32)       # BatchNorm affine init
    be1 = jnp.zeros((C,), jnp.float32)
    g2 = jnp.ones((C,), jnp.float32)
    be2 = jnp.zeros((C,), jnp.float32)
    prelu_a = 0.25                         # nn.PReLU() default

    # NOTE: conv biases b1/b2 are intentionally NOT consumed by the kernel
    # path — a per-channel bias cancels exactly under training-mode BatchNorm
    # mean subtraction (they are still used by the reference).
    params = dict(
        w1=pack_conv3d_weight(w1), w2=pack_conv3d_weight(w2),
        g1=g1, be1=be1, g2=g2, be2=be2,
        alpha=jnp.float32(prelu_a),
    )

    out = jax.block_until_ready(residual_block(x, params))

    ref = reference(x, w1, b1, g1, be1, prelu_a, w2, b2, g2, be2)
    assert out.shape == x.shape and out.dtype == jnp.float32
    max_err = float(jnp.max(jnp.abs(out - ref)))
    assert jnp.allclose(out, ref, atol=2e-4, rtol=2e-4), max_err
    print("KERNEL_OK")
</pallas_src>

<mosaic_0001>
module attributes {stable_mosaic.version = 11 : i64} {
  func.func @_conv_stats_kernel(%arg0: i32, %arg1: i32, %arg2: memref<1x1x10x10x4xf32, #tpu.memory_space<vmem>>, %arg3: memref<1x1x10x10x4xf32, #tpu.memory_space<vmem>>, %arg4: memref<1x1x10x10x4xf32, #tpu.memory_space<vmem>>, %arg5: memref<27x4x4xf32, #tpu.memory_space<vmem>>, %arg6: memref<1x1x64x4xf32, #tpu.memory_space<vmem>>, %arg7: memref<1x1x2x4xf32, #tpu.memory_space<vmem>>) attributes {dimension_semantics = [#tpu.dimension_semantics<parallel>, #tpu.dimension_semantics<parallel>], iteration_bounds = array<i64: 2, 8>, scalar_prefetch = 0 : i64, scratch_operands = 0 : i64, tpu.core_type = #tpu.core_type<tc>, window_params = [{transform_indices = @transform_0, window_bounds = array<i64: 1, 1, 10, 10, 4>}, {transform_indices = @transform_1, window_bounds = array<i64: 1, 1, 10, 10, 4>}, {transform_indices = @transform_2, window_bounds = array<i64: 1, 1, 10, 10, 4>}, {pipeline_mode = #tpu.pipeline_mode<synchronous>, transform_indices = @transform_3, window_bounds = array<i64: 27, 4, 4>}, {transform_indices = @transform_4, window_bounds = array<i64: 1, 1, 64, 4>}, {transform_indices = @transform_5, window_bounds = array<i64: 1, 1, 2, 4>}]} {
    %cst = arith.constant 0.000000e+00 : f32
    %0 = vector.broadcast %cst : f32 to vector<64x4xf32>
    %c0 = arith.constant 0 : index
    %c0_0 = arith.constant 0 : index
    %c0_1 = arith.constant 0 : index
    %c0_2 = arith.constant 0 : index
    %c0_3 = arith.constant 0 : index
    %1 = vector.load %arg2[%c0, %c0_0, %c0_1, %c0_2, %c0_3] : memref<1x1x10x10x4xf32, #tpu.memory_space<vmem>>, vector<1x1x10x10x4xf32>
    %2 = vector.shape_cast %1 : vector<1x1x10x10x4xf32> to vector<10x10x4xf32>
    %3 = vector.extract_strided_slice %2 {offsets = [0, 0, 0], sizes = [8, 8, 4], strides = [1, 1, 1]} : vector<10x10x4xf32> to vector<8x8x4xf32>
    %4 = vector.shape_cast %3 : vector<8x8x4xf32> to vector<64x4xf32>
    %c0_4 = arith.constant 0 : index
    %c0_5 = arith.constant 0 : index
    %c0_6 = arith.constant 0 : index
    %5 = vector.load %arg5[%c0_4, %c0_5, %c0_6] : memref<27x4x4xf32, #tpu.memory_space<vmem>>, vector<1x4x4xf32>
    %6 = vector.shape_cast %5 : vector<1x4x4xf32> to vector<4x4xf32>
    %cst_7 = arith.constant dense<0.000000e+00> : vector<64x4xf32>
    %7 = tpu.matmul %4, %6, %cst_7 {dimension_numbers = #tpu.dot_dimension_numbers<[1], [0], [0], [1], [0, 0, 1, 1], [], []>} : vector<64x4xf32>, vector<4x4xf32>, vector<64x4xf32> -> vector<64x4xf32>
    %8 = arith.addf %0, %7 : vector<64x4xf32>
    %9 = vector.extract_strided_slice %2 {offsets = [0, 1, 0], sizes = [8, 8, 4], strides = [1, 1, 1]} : vector<10x10x4xf32> to vector<8x8x4xf32>
    %10 = vector.shape_cast %9 : vector<8x8x4xf32> to vector<64x4xf32>
    %c1 = arith.constant 1 : index
    %c0_8 = arith.constant 0 : index
    %c0_9 = arith.constant 0 : index
    %11 = vector.load %arg5[%c1, %c0_8, %c0_9] : memref<27x4x4xf32, #tpu.memory_space<vmem>>, vector<1x4x4xf32>
    %12 = vector.shape_cast %11 : vector<1x4x4xf32> to vector<4x4xf32>
    %cst_10 = arith.constant dense<0.000000e+00> : vector<64x4xf32>
    %13 = tpu.matmul %10, %12, %cst_10 {dimension_numbers = #tpu.dot_dimension_numbers<[1], [0], [0], [1], [0, 0, 1, 1], [], []>} : vector<64x4xf32>, vector<4x4xf32>, vector<64x4xf32> -> vector<64x4xf32>
    %14 = arith.addf %8, %13 : vector<64x4xf32>
    %15 = vector.extract_strided_slice %2 {offsets = [0, 2, 0], sizes = [8, 8, 4], strides = [1, 1, 1]} : vector<10x10x4xf32> to vector<8x8x4xf32>
    %16 = vector.shape_cast %15 : vector<8x8x4xf32> to vector<64x4xf32>
    %c2 = arith.constant 2 : index
    %c0_11 = arith.constant 0 : index
    %c0_12 = arith.constant 0 : index
    %17 = vector.load %arg5[%c2, %c0_11, %c0_12] : memref<27x4x4xf32, #tpu.memory_space<vmem>>, vector<1x4x4xf32>
    %18 = vector.shape_cast %17 : vector<1x4x4xf32> to vector<4x4xf32>
    %cst_13 = arith.constant dense<0.000000e+00> : vector<64x4xf32>
    %19 = tpu.matmul %16, %18, %cst_13 {dimension_numbers = #tpu.dot_dimension_numbers<[1], [0], [0], [1], [0, 0, 1, 1], [], []>} : vector<64x4xf32>, vector<4x4xf32>, vector<64x4xf32> -> vector<64x4xf32>
    %20 = arith.addf %14, %19 : vector<64x4xf32>
    %21 = vector.extract_strided_slice %2 {offsets = [1, 0, 0], sizes = [8, 8, 4], strides = [1, 1, 1]} : vector<10x10x4xf32> to vector<8x8x4xf32>
    %22 = vector.shape_cast %21 : vector<8x8x4xf32> to vector<64x4xf32>
    %c3 = arith.constant 3 : index
    %c0_14 = arith.constant 0 : index
    %c0_15 = arith.constant 0 : index
    %23 = vector.load %arg5[%c3, %c0_14, %c0_15] : memref<27x4x4xf32, #tpu.memory_space<vmem>>, vector<1x4x4xf32>
    %24 = vector.shape_cast %23 : vector<1x4x4xf32> to vector<4x4xf32>
    %cst_16 = arith.constant dense<0.000000e+00> : vector<64x4xf32>
    %25 = tpu.matmul %22, %24, %cst_16 {dimension_numbers = #tpu.dot_dimension_numbers<[1], [0], [0], [1], [0, 0, 1, 1], [], []>} : vector<64x4xf32>, vector<4x4xf32>, vector<64x4xf32> -> vector<64x4xf32>
    %26 = arith.addf %20, %25 : vector<64x4xf32>
    %27 = vector.extract_strided_slice %2 {offsets = [1, 1, 0], sizes = [8, 8, 4], strides = [1, 1, 1]} : vector<10x10x4xf32> to vector<8x8x4xf32>
    %28 = vector.shape_cast %27 : vector<8x8x4xf32> to vector<64x4xf32>
    %c4 = arith.constant 4 : index
    %c0_17 = arith.constant 0 : index
    %c0_18 = arith.constant 0 : index
    %29 = vector.load %arg5[%c4, %c0_17, %c0_18] : memref<27x4x4xf32, #tpu.memory_space<vmem>>, vector<1x4x4xf32>
    %30 = vector.shape_cast %29 : vector<1x4x4xf32> to vector<4x4xf32>
    %cst_19 = arith.constant dense<0.000000e+00> : vector<64x4xf32>
    %31 = tpu.matmul %28, %30, %cst_19 {dimension_numbers = #tpu.dot_dimension_numbers<[1], [0], [0], [1], [0, 0, 1, 1], [], []>} : vector<64x4xf32>, vector<4x4xf32>, vector<64x4xf32> -> vector<64x4xf32>
    %32 = arith.addf %26, %31 : vector<64x4xf32>
    %33 = vector.extract_strided_slice %2 {offsets = [1, 2, 0], sizes = [8, 8, 4], strides = [1, 1, 1]} : vector<10x10x4xf32> to vector<8x8x4xf32>
    %34 = vector.shape_cast %33 : vector<8x8x4xf32> to vector<64x4xf32>
    %c5 = arith.constant 5 : index
    %c0_20 = arith.constant 0 : index
    %c0_21 = arith.constant 0 : index
    %35 = vector.load %arg5[%c5, %c0_20, %c0_21] : memref<27x4x4xf32, #tpu.memory_space<vmem>>, vector<1x4x4xf32>
    %36 = vector.shape_cast %35 : vector<1x4x4xf32> to vector<4x4xf32>
    %cst_22 = arith.constant dense<0.000000e+00> : vector<64x4xf32>
    %37 = tpu.matmul %34, %36, %cst_22 {dimension_numbers = #tpu.dot_dimension_numbers<[1], [0], [0], [1], [0, 0, 1, 1], [], []>} : vector<64x4xf32>, vector<4x4xf32>, vector<64x4xf32> -> vector<64x4xf32>
    %38 = arith.addf %32, %37 : vector<64x4xf32>
    %39 = vector.extract_strided_slice %2 {offsets = [2, 0, 0], sizes = [8, 8, 4], strides = [1, 1, 1]} : vector<10x10x4xf32> to vector<8x8x4xf32>
    %40 = vector.shape_cast %39 : vector<8x8x4xf32> to vector<64x4xf32>
    %c6 = arith.constant 6 : index
    %c0_23 = arith.constant 0 : index
    %c0_24 = arith.constant 0 : index
    %41 = vector.load %arg5[%c6, %c0_23, %c0_24] : memref<27x4x4xf32, #tpu.memory_space<vmem>>, vector<1x4x4xf32>
    %42 = vector.shape_cast %41 : vector<1x4x4xf32> to vector<4x4xf32>
    %cst_25 = arith.constant dense<0.000000e+00> : vector<64x4xf32>
    %43 = tpu.matmul %40, %42, %cst_25 {dimension_numbers = #tpu.dot_dimension_numbers<[1], [0], [0], [1], [0, 0, 1, 1], [], []>} : vector<64x4xf32>, vector<4x4xf32>, vector<64x4xf32> -> vector<64x4xf32>
    %44 = arith.addf %38, %43 : vector<64x4xf32>
    %45 = vector.extract_strided_slice %2 {offsets = [2, 1, 0], sizes = [8, 8, 4], strides = [1, 1, 1]} : vector<10x10x4xf32> to vector<8x8x4xf32>
    %46 = vector.shape_cast %45 : vector<8x8x4xf32> to vector<64x4xf32>
    %c7 = arith.constant 7 : index
    %c0_26 = arith.constant 0 : index
    %c0_27 = arith.constant 0 : index
    %47 = vector.load %arg5[%c7, %c0_26, %c0_27] : memref<27x4x4xf32, #tpu.memory_space<vmem>>, vector<1x4x4xf32>
    %48 = vector.shape_cast %47 : vector<1x4x4xf32> to vector<4x4xf32>
    %cst_28 = arith.constant dense<0.000000e+00> : vector<64x4xf32>
    %49 = tpu.matmul %46, %48, %cst_28 {dimension_numbers = #tpu.dot_dimension_numbers<[1], [0], [0], [1], [0, 0, 1, 1], [], []>} : vector<64x4xf32>, vector<4x4xf32>, vector<64x4xf32> -> vector<64x4xf32>
    %50 = arith.addf %44, %49 : vector<64x4xf32>
    %51 = vector.extract_strided_slice %2 {offsets = [2, 2, 0], sizes = [8, 8, 4], strides = [1, 1, 1]} : vector<10x10x4xf32> to vector<8x8x4xf32>
    %52 = vector.shape_cast %51 : vector<8x8x4xf32> to vector<64x4xf32>
    %c8 = arith.constant 8 : index
    %c0_29 = arith.constant 0 : index
    %c0_30 = arith.constant 0 : index
    %53 = vector.load %arg5[%c8, %c0_29, %c0_30] : memref<27x4x4xf32, #tpu.memory_space<vmem>>, vector<1x4x4xf32>
    %54 = vector.shape_cast %53 : vector<1x4x4xf32> to vector<4x4xf32>
    %cst_31 = arith.constant dense<0.000000e+00> : vector<64x4xf32>
    %55 = tpu.matmul %52, %54, %cst_31 {dimension_numbers = #tpu.dot_dimension_numbers<[1], [0], [0], [1], [0, 0, 1, 1], [], []>} : vector<64x4xf32>, vector<4x4xf32>, vector<64x4xf32> -> vector<64x4xf32>
    %56 = arith.addf %50, %55 : vector<64x4xf32>
    %c0_32 = arith.constant 0 : index
    %c0_33 = arith.constant 0 : index
    %c0_34 = arith.constant 0 : index
    %c0_35 = arith.constant 0 : index
    %c0_36 = arith.constant 0 : index
    %57 = vector.load %arg3[%c0_32, %c0_33, %c0_34, %c0_35, %c0_36] : memref<1x1x10x10x4xf32, #tpu.memory_space<vmem>>, vector<1x1x10x10x4xf32>
    %58 = vector.shape_cast %57 : vector<1x1x10x10x4xf32> to vector<10x10x4xf32>
    %59 = vector.extract_strided_slice %58 {offsets = [0, 0, 0], sizes = [8, 8, 4], strides = [1, 1, 1]} : vector<10x10x4xf32> to vector<8x8x4xf32>
    %60 = vector.shape_cast %59 : vector<8x8x4xf32> to vector<64x4xf32>
    %c9 = arith.constant 9 : index
    %c0_37 = arith.constant 0 : index
    %c0_38 = arith.constant 0 : index
    %61 = vector.load %arg5[%c9, %c0_37, %c0_38] : memref<27x4x4xf32, #tpu.memory_space<vmem>>, vector<1x4x4xf32>
    %62 = vector.shape_cast %61 : vector<1x4x4xf32> to vector<4x4xf32>
    %cst_39 = arith.constant dense<0.000000e+00> : vector<64x4xf32>
    %63 = tpu.matmul %60, %62, %cst_39 {dimension_numbers = #tpu.dot_dimension_numbers<[1], [0], [0], [1], [0, 0, 1, 1], [], []>} : vector<64x4xf32>, vector<4x4xf32>, vector<64x4xf32> -> vector<64x4xf32>
    %64 = arith.addf %56, %63 : vector<64x4xf32>
    %65 = vector.extract_strided_slice %58 {offsets = [0, 1, 0], sizes = [8, 8, 4], strides = [1, 1, 1]} : vector<10x10x4xf32> to vector<8x8x4xf32>
    %66 = vector.shape_cast %65 : vector<8x8x4xf32> to vector<64x4xf32>
    %c10 = arith.constant 10 : index
    %c0_40 = arith.constant 0 : index
    %c0_41 = arith.constant 0 : index
    %67 = vector.load %arg5[%c10, %c0_40, %c0_41] : memref<27x4x4xf32, #tpu.memory_space<vmem>>, vector<1x4x4xf32>
    %68 = vector.shape_cast %67 : vector<1x4x4xf32> to vector<4x4xf32>
    %cst_42 = arith.constant dense<0.000000e+00> : vector<64x4xf32>
    %69 = tpu.matmul %66, %68, %cst_42 {dimension_numbers = #tpu.dot_dimension_numbers<[1], [0], [0], [1], [0, 0, 1, 1], [], []>} : vector<64x4xf32>, vector<4x4xf32>, vector<64x4xf32> -> vector<64x4xf32>
    %70 = arith.addf %64, %69 : vector<64x4xf32>
    %71 = vector.extract_strided_slice %58 {offsets = [0, 2, 0], sizes = [8, 8, 4], strides = [1, 1, 1]} : vector<10x10x4xf32> to vector<8x8x4xf32>
    %72 = vector.shape_cast %71 : vector<8x8x4xf32> to vector<64x4xf32>
    %c11 = arith.constant 11 : index
    %c0_43 = arith.constant 0 : index
    %c0_44 = arith.constant 0 : index
    %73 = vector.load %arg5[%c11, %c0_43, %c0_44] : memref<27x4x4xf32, #tpu.memory_space<vmem>>, vector<1x4x4xf32>
    %74 = vector.shape_cast %73 : vector<1x4x4xf32> to vector<4x4xf32>
    %cst_45 = arith.constant dense<0.000000e+00> : vector<64x4xf32>
    %75 = tpu.matmul %72, %74, %cst_45 {dimension_numbers = #tpu.dot_dimension_numbers<[1], [0], [0], [1], [0, 0, 1, 1], [], []>} : vector<64x4xf32>, vector<4x4xf32>, vector<64x4xf32> -> vector<64x4xf32>
    %76 = arith.addf %70, %75 : vector<64x4xf32>
    %77 = vector.extract_strided_slice %58 {offsets = [1, 0, 0], sizes = [8, 8, 4], strides = [1, 1, 1]} : vector<10x10x4xf32> to vector<8x8x4xf32>
    %78 = vector.shape_cast %77 : vector<8x8x4xf32> to vector<64x4xf32>
    %c12 = arith.constant 12 : index
    %c0_46 = arith.constant 0 : index
    %c0_47 = arith.constant 0 : index
    %79 = vector.load %arg5[%c12, %c0_46, %c0_47] : memref<27x4x4xf32, #tpu.memory_space<vmem>>, vector<1x4x4xf32>
    %80 = vector.shape_cast %79 : vector<1x4x4xf32> to vector<4x4xf32>
    %cst_48 = arith.constant dense<0.000000e+00> : vector<64x4xf32>
    %81 = tpu.matmul %78, %80, %cst_48 {dimension_numbers = #tpu.dot_dimension_numbers<[1], [0], [0], [1], [0, 0, 1, 1], [], []>} : vector<64x4xf32>, vector<4x4xf32>, vector<64x4xf32> -> vector<64x4xf32>
    %82 = arith.addf %76, %81 : vector<64x4xf32>
    %83 = vector.extract_strided_slice %58 {offsets = [1, 1, 0], sizes = [8, 8, 4], strides = [1, 1, 1]} : vector<10x10x4xf32> to vector<8x8x4xf32>
    %84 = vector.shape_cast %83 : vector<8x8x4xf32> to vector<64x4xf32>
    %c13 = arith.constant 13 : index
    %c0_49 = arith.constant 0 : index
    %c0_50 = arith.constant 0 : index
    %85 = vector.load %arg5[%c13, %c0_49, %c0_50] : memref<27x4x4xf32, #tpu.memory_space<vmem>>, vector<1x4x4xf32>
    %86 = vector.shape_cast %85 : vector<1x4x4xf32> to vector<4x4xf32>
    %cst_51 = arith.constant dense<0.000000e+00> : vector<64x4xf32>
    %87 = tpu.matmul %84, %86, %cst_51 {dimension_numbers = #tpu.dot_dimension_numbers<[1], [0], [0], [1], [0, 0, 1, 1], [], []>} : vector<64x4xf32>, vector<4x4xf32>, vector<64x4xf32> -> vector<64x4xf32>
    %88 = arith.addf %82, %87 : vector<64x4xf32>
    %89 = vector.extract_strided_slice %58 {offsets = [1, 2, 0], sizes = [8, 8, 4], strides = [1, 1, 1]} : vector<10x10x4xf32> to vector<8x8x4xf32>
    %90 = vector.shape_cast %89 : vector<8x8x4xf32> to vector<64x4xf32>
    %c14 = arith.constant 14 : index
    %c0_52 = arith.constant 0 : index
    %c0_53 = arith.constant 0 : index
    %91 = vector.load %arg5[%c14, %c0_52, %c0_53] : memref<27x4x4xf32, #tpu.memory_space<vmem>>, vector<1x4x4xf32>
    %92 = vector.shape_cast %91 : vector<1x4x4xf32> to vector<4x4xf32>
    %cst_54 = arith.constant dense<0.000000e+00> : vector<64x4xf32>
    %93 = tpu.matmul %90, %92, %cst_54 {dimension_numbers = #tpu.dot_dimension_numbers<[1], [0], [0], [1], [0, 0, 1, 1], [], []>} : vector<64x4xf32>, vector<4x4xf32>, vector<64x4xf32> -> vector<64x4xf32>
    %94 = arith.addf %88, %93 : vector<64x4xf32>
    %95 = vector.extract_strided_slice %58 {offsets = [2, 0, 0], sizes = [8, 8, 4], strides = [1, 1, 1]} : vector<10x10x4xf32> to vector<8x8x4xf32>
    %96 = vector.shape_cast %95 : vector<8x8x4xf32> to vector<64x4xf32>
    %c15 = arith.constant 15 : index
    %c0_55 = arith.constant 0 : index
    %c0_56 = arith.constant 0 : index
    %97 = vector.load %arg5[%c15, %c0_55, %c0_56] : memref<27x4x4xf32, #tpu.memory_space<vmem>>, vector<1x4x4xf32>
    %98 = vector.shape_cast %97 : vector<1x4x4xf32> to vector<4x4xf32>
    %cst_57 = arith.constant dense<0.000000e+00> : vector<64x4xf32>
    %99 = tpu.matmul %96, %98, %cst_57 {dimension_numbers = #tpu.dot_dimension_numbers<[1], [0], [0], [1], [0, 0, 1, 1], [], []>} : vector<64x4xf32>, vector<4x4xf32>, vector<64x4xf32> -> vector<64x4xf32>
    %100 = arith.addf %94, %99 : vector<64x4xf32>
    %101 = vector.extract_strided_slice %58 {offsets = [2, 1, 0], sizes = [8, 8, 4], strides = [1, 1, 1]} : vector<10x10x4xf32> to vector<8x8x4xf32>
    %102 = vector.shape_cast %101 : vector<8x8x4xf32> to vector<64x4xf32>
    %c16 = arith.constant 16 : index
    %c0_58 = arith.constant 0 : index
    %c0_59 = arith.constant 0 : index
    %103 = vector.load %arg5[%c16, %c0_58, %c0_59] : memref<27x4x4xf32, #tpu.memory_space<vmem>>, vector<1x4x4xf32>
    %104 = vector.shape_cast %103 : vector<1x4x4xf32> to vector<4x4xf32>
    %cst_60 = arith.constant dense<0.000000e+00> : vector<64x4xf32>
    %105 = tpu.matmul %102, %104, %cst_60 {dimension_numbers = #tpu.dot_dimension_numbers<[1], [0], [0], [1], [0, 0, 1, 1], [], []>} : vector<64x4xf32>, vector<4x4xf32>, vector<64x4xf32> -> vector<64x4xf32>
    %106 = arith.addf %100, %105 : vector<64x4xf32>
    %107 = vector.extract_strided_slice %58 {offsets = [2, 2, 0], sizes = [8, 8, 4], strides = [1, 1, 1]} : vector<10x10x4xf32> to vector<8x8x4xf32>
    %108 = vector.shape_cast %107 : vector<8x8x4xf32> to vector<64x4xf32>
    %c17 = arith.constant 17 : index
    %c0_61 = arith.constant 0 : index
    %c0_62 = arith.constant 0 : index
    %109 = vector.load %arg5[%c17, %c0_61, %c0_62] : memref<27x4x4xf32, #tpu.memory_space<vmem>>, vector<1x4x4xf32>
    %110 = vector.shape_cast %109 : vector<1x4x4xf32> to vector<4x4xf32>
    %cst_63 = arith.constant dense<0.000000e+00> : vector<64x4xf32>
    %111 = tpu.matmul %108, %110, %cst_63 {dimension_numbers = #tpu.dot_dimension_numbers<[1], [0], [0], [1], [0, 0, 1, 1], [], []>} : vector<64x4xf32>, vector<4x4xf32>, vector<64x4xf32> -> vector<64x4xf32>
    %112 = arith.addf %106, %111 : vector<64x4xf32>
    %c0_64 = arith.constant 0 : index
    %c0_65 = arith.constant 0 : index
    %c0_66 = arith.constant 0 : index
    %c0_67 = arith.constant 0 : index
    %c0_68 = arith.constant 0 : index
    %113 = vector.load %arg4[%c0_64, %c0_65, %c0_66, %c0_67, %c0_68] : memref<1x1x10x10x4xf32, #tpu.memory_space<vmem>>, vector<1x1x10x10x4xf32>
    %114 = vector.shape_cast %113 : vector<1x1x10x10x4xf32> to vector<10x10x4xf32>
    %115 = vector.extract_strided_slice %114 {offsets = [0, 0, 0], sizes = [8, 8, 4], strides = [1, 1, 1]} : vector<10x10x4xf32> to vector<8x8x4xf32>
    %116 = vector.shape_cast %115 : vector<8x8x4xf32> to vector<64x4xf32>
    %c18 = arith.constant 18 : index
    %c0_69 = arith.constant 0 : index
    %c0_70 = arith.constant 0 : index
    %117 = vector.load %arg5[%c18, %c0_69, %c0_70] : memref<27x4x4xf32, #tpu.memory_space<vmem>>, vector<1x4x4xf32>
    %118 = vector.shape_cast %117 : vector<1x4x4xf32> to vector<4x4xf32>
    %cst_71 = arith.constant dense<0.000000e+00> : vector<64x4xf32>
    %119 = tpu.matmul %116, %118, %cst_71 {dimension_numbers = #tpu.dot_dimension_numbers<[1], [0], [0], [1], [0, 0, 1, 1], [], []>} : vector<64x4xf32>, vector<4x4xf32>, vector<64x4xf32> -> vector<64x4xf32>
    %120 = arith.addf %112, %119 : vector<64x4xf32>
    %121 = vector.extract_strided_slice %114 {offsets = [0, 1, 0], sizes = [8, 8, 4], strides = [1, 1, 1]} : vector<10x10x4xf32> to vector<8x8x4xf32>
    %122 = vector.shape_cast %121 : vector<8x8x4xf32> to vector<64x4xf32>
    %c19 = arith.constant 19 : index
    %c0_72 = arith.constant 0 : index
    %c0_73 = arith.constant 0 : index
    %123 = vector.load %arg5[%c19, %c0_72, %c0_73] : memref<27x4x4xf32, #tpu.memory_space<vmem>>, vector<1x4x4xf32>
    %124 = vector.shape_cast %123 : vector<1x4x4xf32> to vector<4x4xf32>
    %cst_74 = arith.constant dense<0.000000e+00> : vector<64x4xf32>
    %125 = tpu.matmul %122, %124, %cst_74 {dimension_numbers = #tpu.dot_dimension_numbers<[1], [0], [0], [1], [0, 0, 1, 1], [], []>} : vector<64x4xf32>, vector<4x4xf32>, vector<64x4xf32> -> vector<64x4xf32>
    %126 = arith.addf %120, %125 : vector<64x4xf32>
    %127 = vector.extract_strided_slice %114 {offsets = [0, 2, 0], sizes = [8, 8, 4], strides = [1, 1, 1]} : vector<10x10x4xf32> to vector<8x8x4xf32>
    %128 = vector.shape_cast %127 : vector<8x8x4xf32> to vector<64x4xf32>
    %c20 = arith.constant 20 : index
    %c0_75 = arith.constant 0 : index
    %c0_76 = arith.constant 0 : index
    %129 = vector.load %arg5[%c20, %c0_75, %c0_76] : memref<27x4x4xf32, #tpu.memory_space<vmem>>, vector<1x4x4xf32>
    %130 = vector.shape_cast %129 : vector<1x4x4xf32> to vector<4x4xf32>
    %cst_77 = arith.constant dense<0.000000e+00> : vector<64x4xf32>
    %131 = tpu.matmul %128, %130, %cst_77 {dimension_numbers = #tpu.dot_dimension_numbers<[1], [0], [0], [1], [0, 0, 1, 1], [], []>} : vector<64x4xf32>, vector<4x4xf32>, vector<64x4xf32> -> vector<64x4xf32>
    %132 = arith.addf %126, %131 : vector<64x4xf32>
    %133 = vector.extract_strided_slice %114 {offsets = [1, 0, 0], sizes = [8, 8, 4], strides = [1, 1, 1]} : vector<10x10x4xf32> to vector<8x8x4xf32>
    %134 = vector.shape_cast %133 : vector<8x8x4xf32> to vector<64x4xf32>
    %c21 = arith.constant 21 : index
    %c0_78 = arith.constant 0 : index
    %c0_79 = arith.constant 0 : index
    %135 = vector.load %arg5[%c21, %c0_78, %c0_79] : memref<27x4x4xf32, #tpu.memory_space<vmem>>, vector<1x4x4xf32>
    %136 = vector.shape_cast %135 : vector<1x4x4xf32> to vector<4x4xf32>
    %cst_80 = arith.constant dense<0.000000e+00> : vector<64x4xf32>
    %137 = tpu.matmul %134, %136, %cst_80 {dimension_numbers = #tpu.dot_dimension_numbers<[1], [0], [0], [1], [0, 0, 1, 1], [], []>} : vector<64x4xf32>, vector<4x4xf32>, vector<64x4xf32> -> vector<64x4xf32>
    %138 = arith.addf %132, %137 : vector<64x4xf32>
    %139 = vector.extract_strided_slice %114 {offsets = [1, 1, 0], sizes = [8, 8, 4], strides = [1, 1, 1]} : vector<10x10x4xf32> to vector<8x8x4xf32>
    %140 = vector.shape_cast %139 : vector<8x8x4xf32> to vector<64x4xf32>
    %c22 = arith.constant 22 : index
    %c0_81 = arith.constant 0 : index
    %c0_82 = arith.constant 0 : index
    %141 = vector.load %arg5[%c22, %c0_81, %c0_82] : memref<27x4x4xf32, #tpu.memory_space<vmem>>, vector<1x4x4xf32>
    %142 = vector.shape_cast %141 : vector<1x4x4xf32> to vector<4x4xf32>
    %cst_83 = arith.constant dense<0.000000e+00> : vector<64x4xf32>
    %143 = tpu.matmul %140, %142, %cst_83 {dimension_numbers = #tpu.dot_dimension_numbers<[1], [0], [0], [1], [0, 0, 1, 1], [], []>} : vector<64x4xf32>, vector<4x4xf32>, vector<64x4xf32> -> vector<64x4xf32>
    %144 = arith.addf %138, %143 : vector<64x4xf32>
    %145 = vector.extract_strided_slice %114 {offsets = [1, 2, 0], sizes = [8, 8, 4], strides = [1, 1, 1]} : vector<10x10x4xf32> to vector<8x8x4xf32>
    %146 = vector.shape_cast %145 : vector<8x8x4xf32> to vector<64x4xf32>
    %c23 = arith.constant 23 : index
    %c0_84 = arith.constant 0 : index
    %c0_85 = arith.constant 0 : index
    %147 = vector.load %arg5[%c23, %c0_84, %c0_85] : memref<27x4x4xf32, #tpu.memory_space<vmem>>, vector<1x4x4xf32>
    %148 = vector.shape_cast %147 : vector<1x4x4xf32> to vector<4x4xf32>
    %cst_86 = arith.constant dense<0.000000e+00> : vector<64x4xf32>
    %149 = tpu.matmul %146, %148, %cst_86 {dimension_numbers = #tpu.dot_dimension_numbers<[1], [0], [0], [1], [0, 0, 1, 1], [], []>} : vector<64x4xf32>, vector<4x4xf32>, vector<64x4xf32> -> vector<64x4xf32>
    %150 = arith.addf %144, %149 : vector<64x4xf32>
    %151 = vector.extract_strided_slice %114 {offsets = [2, 0, 0], sizes = [8, 8, 4], strides = [1, 1, 1]} : vector<10x10x4xf32> to vector<8x8x4xf32>
    %152 = vector.shape_cast %151 : vector<8x8x4xf32> to vector<64x4xf32>
    %c24 = arith.constant 24 : index
    %c0_87 = arith.constant 0 : index
    %c0_88 = arith.constant 0 : index
    %153 = vector.load %arg5[%c24, %c0_87, %c0_88] : memref<27x4x4xf32, #tpu.memory_space<vmem>>, vector<1x4x4xf32>
    %154 = vector.shape_cast %153 : vector<1x4x4xf32> to vector<4x4xf32>
    %cst_89 = arith.constant dense<0.000000e+00> : vector<64x4xf32>
    %155 = tpu.matmul %152, %154, %cst_89 {dimension_numbers = #tpu.dot_dimension_numbers<[1], [0], [0], [1], [0, 0, 1, 1], [], []>} : vector<64x4xf32>, vector<4x4xf32>, vector<64x4xf32> -> vector<64x4xf32>
    %156 = arith.addf %150, %155 : vector<64x4xf32>
    %157 = vector.extract_strided_slice %114 {offsets = [2, 1, 0], sizes = [8, 8, 4], strides = [1, 1, 1]} : vector<10x10x4xf32> to vector<8x8x4xf32>
    %158 = vector.shape_cast %157 : vector<8x8x4xf32> to vector<64x4xf32>
    %c25 = arith.constant 25 : index
    %c0_90 = arith.constant 0 : index
    %c0_91 = arith.constant 0 : index
    %159 = vector.load %arg5[%c25, %c0_90, %c0_91] : memref<27x4x4xf32, #tpu.memory_space<vmem>>, vector<1x4x4xf32>
    %160 = vector.shape_cast %159 : vector<1x4x4xf32> to vector<4x4xf32>
    %cst_92 = arith.constant dense<0.000000e+00> : vector<64x4xf32>
    %161 = tpu.matmul %158, %160, %cst_92 {dimension_numbers = #tpu.dot_dimension_numbers<[1], [0], [0], [1], [0, 0, 1, 1], [], []>} : vector<64x4xf32>, vector<4x4xf32>, vector<64x4xf32> -> vector<64x4xf32>
    %162 = arith.addf %156, %161 : vector<64x4xf32>
    %163 = vector.extract_strided_slice %114 {offsets = [2, 2, 0], sizes = [8, 8, 4], strides = [1, 1, 1]} : vector<10x10x4xf32> to vector<8x8x4xf32>
    %164 = vector.shape_cast %163 : vector<8x8x4xf32> to vector<64x4xf32>
    %c26 = arith.constant 26 : index
    %c0_93 = arith.constant 0 : index
    %c0_94 = arith.constant 0 : index
    %165 = vector.load %arg5[%c26, %c0_93, %c0_94] : memref<27x4x4xf32, #tpu.memory_space<vmem>>, vector<1x4x4xf32>
    %166 = vector.shape_cast %165 : vector<1x4x4xf32> to vector<4x4xf32>
    %cst_95 = arith.constant dense<0.000000e+00> : vector<64x4xf32>
    %167 = tpu.matmul %164, %166, %cst_95 {dimension_numbers = #tpu.dot_dimension_numbers<[1], [0], [0], [1], [0, 0, 1, 1], [], []>} : vector<64x4xf32>, vector<4x4xf32>, vector<64x4xf32> -> vector<64x4xf32>
    %168 = arith.addf %162, %167 : vector<64x4xf32>
    %c0_96 = arith.constant 0 : index
    %c0_97 = arith.constant 0 : index
    %c0_98 = arith.constant 0 : index
    %c0_99 = arith.constant 0 : index
    %169 = vector.load %arg6[%c0_96, %c0_97, %c0_98, %c0_99] : memref<1x1x64x4xf32, #tpu.memory_space<vmem>>, vector<1x1x64x4xf32>
    %170 = vector.shape_cast %169 : vector<1x1x64x4xf32> to vector<64x4xf32>
    %171 = vector.shape_cast %168 : vector<64x4xf32> to vector<1x1x64x4xf32>
    tpu.vector_store %arg6[%c0_96, %c0_97, %c0_98, %c0_99], %171 {strides = array<i32>} : memref<1x1x64x4xf32, #tpu.memory_space<vmem>>, vector<1x1x64x4xf32>,
    %cst_100 = arith.constant dense<0.000000e+00> : vector<4xf32>
    %172 = vector.multi_reduction <add>, %168, %cst_100 [0] : vector<64x4xf32> to vector<4xf32>
    %173 = vector.shape_cast %172 : vector<4xf32> to vector<1x4xf32>
    %c0_101 = arith.constant 0 : index
    %c0_102 = arith.constant 0 : index
    %c0_103 = arith.constant 0 : index
    %c0_104 = arith.constant 0 : index
    %174 = vector.load %arg7[%c0_101, %c0_102, %c0_103, %c0_104] : memref<1x1x2x4xf32, #tpu.memory_space<vmem>>, vector<1x1x1x4xf32>
    %175 = vector.shape_cast %174 : vector<1x1x1x4xf32> to vector<1x4xf32>
    %176 = vector.shape_cast %173 : vector<1x4xf32> to vector<1x1x1x4xf32>
    tpu.vector_store %arg7[%c0_101, %c0_102, %c0_103, %c0_104], %176 {strides = array<i32>} : memref<1x1x2x4xf32, #tpu.memory_space<vmem>>, vector<1x1x1x4xf32>,
    %177 = arith.mulf %168, %168 : vector<64x4xf32>
    %cst_105 = arith.constant dense<0.000000e+00> : vector<4xf32>
    %178 = vector.multi_reduction <add>, %177, %cst_105 [0] : vector<64x4xf32> to vector<4xf32>
    %179 = vector.shape_cast %178 : vector<4xf32> to vector<1x4xf32>
    %c0_106 = arith.constant 0 : index
    %c0_107 = arith.constant 0 : index
    %c1_108 = arith.constant 1 : index
    %c0_109 = arith.constant 0 : index
    %180 = vector.load %arg7[%c0_106, %c0_107, %c1_108, %c0_109] : memref<1x1x2x4xf32, #tpu.memory_space<vmem>>, vector<1x1x1x4xf32>
    %181 = vector.shape_cast %180 : vector<1x1x1x4xf32> to vector<1x4xf32>
    %182 = vector.shape_cast %179 : vector<1x4xf32> to vector<1x1x1x4xf32>
    tpu.vector_store %arg7[%c0_106, %c0_107, %c1_108, %c0_109], %182 {strides = array<i32>} : memref<1x1x2x4xf32, #tpu.memory_space<vmem>>, vector<1x1x1x4xf32>,
    return
  }
  func.func @transform_0(%arg0: i32, %arg1: i32) -> (i32, i32, i32, i32, i32) {
    %c0_i32 = arith.constant 0 : i32
    %0 = arith.addi %arg1, %c0_i32 : i32
    %c0_i32_0 = arith.constant 0 : i32
    %c0_i32_1 = arith.constant 0 : i32
    %c0_i32_2 = arith.constant 0 : i32
    %c0_i32_3 = arith.constant 0 : i32
    return %arg0, %0, %c0_i32_0, %c0_i32_1, %c0_i32_2 : i32, i32, i32, i32, i32
  }
  func.func @transform_1(%arg0: i32, %arg1: i32) -> (i32, i32, i32, i32, i32) {
    %c1_i32 = arith.constant 1 : i32
    %0 = arith.addi %arg1, %c1_i32 : i32
    %c0_i32 = arith.constant 0 : i32
    %c0_i32_0 = arith.constant 0 : i32
    %c0_i32_1 = arith.constant 0 : i32
    %c0_i32_2 = arith.constant 0 : i32
    return %arg0, %0, %c0_i32, %c0_i32_0, %c0_i32_1 : i32, i32, i32, i32, i32
  }
  func.func @transform_2(%arg0: i32, %arg1: i32) -> (i32, i32, i32, i32, i32) {
    %c2_i32 = arith.constant 2 : i32
    %0 = arith.addi %arg1, %c2_i32 : i32
    %c0_i32 = arith.constant 0 : i32
    %c0_i32_0 = arith.constant 0 : i32
    %c0_i32_1 = arith.constant 0 : i32
    %c0_i32_2 = arith.constant 0 : i32
    return %arg0, %0, %c0_i32, %c0_i32_0, %c0_i32_1 : i32, i32, i32, i32, i32
  }
  func.func @transform_3(%arg0: i32, %arg1: i32) -> (i32, i32, i32) {
    %c0_i32 = arith.constant 0 : i32
    %c0_i32_0 = arith.constant 0 : i32
    %c0_i32_1 = arith.constant 0 : i32
    %c0_i32_2 = arith.constant 0 : i32
    return %c0_i32, %c0_i32_0, %c0_i32_1 : i32, i32, i32
  }
  func.func @transform_4(%arg0: i32, %arg1: i32) -> (i32, i32, i32, i32) {
    %c0_i32 = arith.constant 0 : i32
    %c0_i32_0 = arith.constant 0 : i32
    %c0_i32_1 = arith.constant 0 : i32
    return %arg0, %arg1, %c0_i32, %c0_i32_0 : i32, i32, i32, i32
  }
  func.func @transform_5(%arg0: i32, %arg1: i32) -> (i32, i32, i32, i32) {
    %c0_i32 = arith.constant 0 : i32
    %c0_i32_0 = arith.constant 0 : i32
    %c0_i32_1 = arith.constant 0 : i32
    return %arg0, %arg1, %c0_i32, %c0_i32_0 : i32, i32, i32, i32
  }
}

module attributes {stable_mosaic.version = 11 : i64} {
  func.func @_bn_prelu_kernel(%arg0: i32, %arg1: memref<8x256xf32, #tpu.memory_space<vmem>>, %arg2: memref<1x256xf32, #tpu.memory_space<vmem>>, %arg3: memref<1x256xf32, #tpu.memory_space<vmem>>, %arg4: memref<1x256xf32, #tpu.memory_space<vmem>>, %arg5: memref<8x256xf32, #tpu.memory_space<vmem>>) attributes {dimension_semantics = [#tpu.dimension_semantics<parallel>], iteration_bounds = array<i64: 2>, scalar_prefetch = 0 : i64, scratch_operands = 0 : i64, tpu.core_type = #tpu.core_type<tc>, window_params = [{transform_indices = @transform_0, window_bounds = array<i64: 8, 256>}, {pipeline_mode = #tpu.pipeline_mode<synchronous>, transform_indices = @transform_1, window_bounds = array<i64: 1, 256>}, {pipeline_mode = #tpu.pipeline_mode<synchronous>, transform_indices = @transform_2, window_bounds = array<i64: 1, 256>}, {pipeline_mode = #tpu.pipeline_mode<synchronous>, transform_indices = @transform_3, window_bounds = array<i64: 1, 256>}, {transform_indices = @transform_4, window_bounds = array<i64: 8, 256>}]} {
    %c0 = arith.constant 0 : index
    %c0_0 = arith.constant 0 : index
    %0 = vector.load %arg1[%c0, %c0_0] : memref<8x256xf32, #tpu.memory_space<vmem>>, vector<8x256xf32>
    %c0_1 = arith.constant 0 : index
    %c0_2 = arith.constant 0 : index
    %1 = vector.load %arg2[%c0_1, %c0_2] : memref<1x256xf32, #tpu.memory_space<vmem>>, vector<1x256xf32>
    %2 = vector.broadcast %1 : vector<1x256xf32> to vector<8x256xf32>
    %3 = arith.mulf %0, %2 : vector<8x256xf32>
    %c0_3 = arith.constant 0 : index
    %c0_4 = arith.constant 0 : index
    %4 = vector.load %arg3[%c0_3, %c0_4] : memref<1x256xf32, #tpu.memory_space<vmem>>, vector<1x256xf32>
    %5 = vector.broadcast %4 : vector<1x256xf32> to vector<8x256xf32>
    %6 = arith.addf %3, %5 : vector<8x256xf32>
    %cst = arith.constant 0.000000e+00 : f32
    %7 = vector.broadcast %cst : f32 to vector<8x256xf32>
    %8 = arith.cmpf oge, %6, %7 : vector<8x256xf32>
    %c0_5 = arith.constant 0 : index
    %c0_6 = arith.constant 0 : index
    %9 = vector.load %arg4[%c0_5, %c0_6] : memref<1x256xf32, #tpu.memory_space<vmem>>, vector<1x256xf32>
    %10 = vector.broadcast %9 : vector<1x256xf32> to vector<8x256xf32>
    %11 = arith.mulf %6, %10 : vector<8x256xf32>
    %12 = arith.select %8, %6, %11 : vector<8x256xi1>, vector<8x256xf32>
    %c0_7 = arith.constant 0 : index
    %c0_8 = arith.constant 0 : index
    %13 = vector.load %arg5[%c0_7, %c0_8] : memref<8x256xf32, #tpu.memory_space<vmem>>, vector<8x256xf32>
    tpu.vector_store %arg5[%c0_7, %c0_8], %12 {strides = array<i32>} : memref<8x256xf32, #tpu.memory_space<vmem>>, vector<8x256xf32>,
    return
  }
  func.func @transform_0(%arg0: i32) -> (i32, i32) {
    %c0_i32 = arith.constant 0 : i32
    %c0_i32_0 = arith.constant 0 : i32
    return %arg0, %c0_i32 : i32, i32
  }
  func.func @transform_1(%arg0: i32) -> (i32, i32) {
    %c0_i32 = arith.constant 0 : i32
    %c0_i32_0 = arith.constant 0 : i32
    %c0_i32_1 = arith.constant 0 : i32
    return %c0_i32, %c0_i32_0 : i32, i32
  }
  func.func @transform_2(%arg0: i32) -> (i32, i32) {
    %c0_i32 = arith.constant 0 : i32
    %c0_i32_0 = arith.constant 0 : i32
    %c0_i32_1 = arith.constant 0 : i32
    return %c0_i32, %c0_i32_0 : i32, i32
  }
  func.func @transform_3(%arg0: i32) -> (i32, i32) {
    %c0_i32 = arith.constant 0 : i32
    %c0_i32_0 = arith.constant 0 : i32
    %c0_i32_1 = arith.constant 0 : i32
    return %c0_i32, %c0_i32_0 : i32, i32
  }
  func.func @transform_4(%arg0: i32) -> (i32, i32) {
    %c0_i32 = arith.constant 0 : i32
    %c0_i32_0 = arith.constant 0 : i32
    return %arg0, %c0_i32 : i32, i32
  }
}

module attributes {stable_mosaic.version = 11 : i64} {
  func.func @_bn_residual_kernel(%arg0: i32, %arg1: memref<8x256xf32, #tpu.memory_space<vmem>>, %arg2: memref<1x256xf32, #tpu.memory_space<vmem>>, %arg3: memref<1x256xf32, #tpu.memory_space<vmem>>, %arg4: memref<8x256xf32, #tpu.memory_space<vmem>>, %arg5: memref<8x256xf32, #tpu.memory_space<vmem>>) attributes {dimension_semantics = [#tpu.dimension_semantics<parallel>], iteration_bounds = array<i64: 2>, scalar_prefetch = 0 : i64, scratch_operands = 0 : i64, tpu.core_type = #tpu.core_type<tc>, window_params = [{transform_indices = @transform_0, window_bounds = array<i64: 8, 256>}, {pipeline_mode = #tpu.pipeline_mode<synchronous>, transform_indices = @transform_1, window_bounds = array<i64: 1, 256>}, {pipeline_mode = #tpu.pipeline_mode<synchronous>, transform_indices = @transform_2, window_bounds = array<i64: 1, 256>}, {transform_indices = @transform_3, window_bounds = array<i64: 8, 256>}, {transform_indices = @transform_4, window_bounds = array<i64: 8, 256>}]} {
    %c0 = arith.constant 0 : index
    %c0_0 = arith.constant 0 : index
    %0 = vector.load %arg4[%c0, %c0_0] : memref<8x256xf32, #tpu.memory_space<vmem>>, vector<8x256xf32>
    %c0_1 = arith.constant 0 : index
    %c0_2 = arith.constant 0 : index
    %1 = vector.load %arg1[%c0_1, %c0_2] : memref<8x256xf32, #tpu.memory_space<vmem>>, vector<8x256xf32>
    %c0_3 = arith.constant 0 : index
    %c0_4 = arith.constant 0 : index
    %2 = vector.load %arg2[%c0_3, %c0_4] : memref<1x256xf32, #tpu.memory_space<vmem>>, vector<1x256xf32>
    %3 = vector.broadcast %2 : vector<1x256xf32> to vector<8x256xf32>
    %4 = arith.mulf %1, %3 : vector<8x256xf32>
    %c0_5 = arith.constant 0 : index
    %c0_6 = arith.constant 0 : index
    %5 = vector.load %arg3[%c0_5, %c0_6] : memref<1x256xf32, #tpu.memory_space<vmem>>, vector<1x256xf32>
    %6 = vector.broadcast %5 : vector<1x256xf32> to vector<8x256xf32>
    %7 = arith.addf %4, %6 : vector<8x256xf32>
    %8 = arith.addf %0, %7 : vector<8x256xf32>
    %c0_7 = arith.constant 0 : index
    %c0_8 = arith.constant 0 : index
    %9 = vector.load %arg5[%c0_7, %c0_8] : memref<8x256xf32, #tpu.memory_space<vmem>>, vector<8x256xf32>
    tpu.vector_store %arg5[%c0_7, %c0_8], %8 {strides = array<i32>} : memref<8x256xf32, #tpu.memory_space<vmem>>, vector<8x256xf32>,
    return
  }
  func.func @transform_0(%arg0: i32) -> (i32, i32) {
    %c0_i32 = arith.constant 0 : i32
    %c0_i32_0 = arith.constant 0 : i32
    return %arg0, %c0_i32 : i32, i32
  }
  func.func @transform_1(%arg0: i32) -> (i32, i32) {
    %c0_i32 = arith.constant 0 : i32
    %c0_i32_0 = arith.constant 0 : i32
    %c0_i32_1 = arith.constant 0 : i32
    return %c0_i32, %c0_i32_0 : i32, i32
  }
  func.func @transform_2(%arg0: i32) -> (i32, i32) {
    %c0_i32 = arith.constant 0 : i32
    %c0_i32_0 = arith.constant 0 : i32
    %c0_i32_1 = arith.constant 0 : i32
    return %c0_i32, %c0_i32_0 : i32, i32
  }
  func.func @transform_3(%arg0: i32) -> (i32, i32) {
    %c0_i32 = arith.constant 0 : i32
    %c0_i32_0 = arith.constant 0 : i32
    return %arg0, %c0_i32 : i32, i32
  }
  func.func @transform_4(%arg0: i32) -> (i32, i32) {
    %c0_i32 = arith.constant 0 : i32
    %c0_i32_0 = arith.constant 0 : i32
    return %arg0, %c0_i32 : i32, i32
  }
}

</mosaic_0001>

<llo_original>
// kernel: tile.23
$region0: #{tile.23}
  #allocation0 [shape = 's32[1]{0}', space=sflag, size = 0x4, scoped, tag = 'scoped memory for tile.23']
  %s0 = inlined_call_operand.vmem [shape: f32[4], index: 0, kind: input, shape index: {}]
  %s1 = inlined_call_operand.vmem [shape: f32[64,4], index: 1, kind: output, shape index: {}]
  // Predicated region
  $region2: #{tile.23} parent=0 // pred_check
    _
  $region3: #{tile.23} parent=0 // pred_check_branch
    %3 = sbr.rel (0) target = $region5
  $region4: #{tile.23} parent=0 // pred_region
    _
  $region5: #{tile.23} parent=0 // pred_fallthru
    _
  %v4 = vld [vmem:[%s0] ss:$0 sm:$0xff]
  %5 = vst [vmem:[%s1] sm:$0xff] %v4
  %s6 = scalar_lea.vmem %s1, 8
  %7 = vst [vmem:[%s6] sm:$0xff] %v4
  %s8 = scalar_lea.vmem %s1, 16
  %9 = vst [vmem:[%s8] sm:$0xff] %v4
  %s10 = scalar_lea.vmem %s1, 24
  %11 = vst [vmem:[%s10] sm:$0xff] %v4
  %s12 = scalar_lea.vmem %s1, 32
  %13 = vst [vmem:[%s12] sm:$0xff] %v4
  %s14 = scalar_lea.vmem %s1, 40
  %15 = vst [vmem:[%s14] sm:$0xff] %v4
  %s16 = scalar_lea.vmem %s1, 48
  %17 = vst [vmem:[%s16] sm:$0xff] %v4
  %s18 = scalar_lea.vmem %s1, 56
  %19 = vst [vmem:[%s18] sm:$0xff] %v4

// kernel: tile.24
$region0: #{tile.24}
  %s0 = inlined_call_operand.vmem [shape: f32[64,4], index: 0, kind: input, shape index: {}]
  %s1 = inlined_call_operand.vmem [shape: f32[1,256], index: 1, kind: output, shape index: {}]
  $region1: #{tile.24} parent=0
    #allocation0 [shape = 'u8[8192]{0}', space=vmem, size = 0x2000, scoped, tag = 'scoped mem for output reshape']
    %v2 = vld [vmem:[%s0] sm:$0x1]
    %s3 = scalar_lea.vmem %s0, 31
    %v4 = vld [vmem:[%s3] sm:$0x2]
    %vm5 = vcmask 1041409
    %v6 = vsel %vm5, %v4, %v2
    %vm7 = vcmask 31744
    %8 = vst.msk [vmem:[#allocation0] ss:$8 sm:$0x3] %vm7, %v6
    %s9 = scalar_lea.vmem %s0, 31
    %v10 = vld [vmem:[%s9] sm:$0x1]
    %s11 = scalar_lea.vmem %s0, 62
    %v12 = vld [vmem:[%s11] sm:$0x2]
    %vm13 = vcmask 1041409
    %v14 = vsel %vm13, %v12, %v10
    %15 = vrot.lane.b32.xlu0 %v14, 124
    %v16 = vpop.permute.xlu0 %15
    %vm17 = vcmask 1048544
    %18 = vst.msk [vmem:[#allocation0] ss:$8 sm:$0x3] %vm17, %v16
    %s19 = scalar_lea.vmem %s0, 30
    %v20 = vld [vmem:[%s19] sm:$0x1]
    %s21 = scalar_lea.vmem %s0, 61
    %v22 = vld [vmem:[%s21] sm:$0x2]
    %vm23 = vcmask 1041409
    %v24 = vsel %vm23, %v22, %v20
    %25 = vrot.lane.b32.xlu0 %v24, 120
    %v26 = vpop.permute.xlu0 %25
    %vm27 = vcmask 1015744
    %28 = vst.msk [vmem:[#allocation0] ss:$8 sm:$0x3] %vm27, %v26
    %s29 = scalar_lea.vmem %s0, 29
    %v30 = vld [vmem:[%s29] sm:$0x1]
    %s31 = scalar_lea.vmem %s0, 60
    %v32 = vld [vmem:[%s31] sm:$0x2]
    %vm33 = vcmask 1041409
    %v34 = vsel %vm33, %v32, %v30
    %35 = vrot.lane.b32.xlu0 %v34, 116
    %v36 = vpop.permute.xlu0 %35
    %vm37 = vcmask 982944
    %38 = vst.msk [vmem:[#allocation0] ss:$8 sm:$0x3] %vm37, %v36
    %s39 = scalar_lea.vmem %s0, 28
    %v40 = vld [vmem:[%s39] sm:$0x1]
    %s41 = scalar_lea.vmem %s0, 59
    %v42 = vld [vmem:[%s41] sm:$0x2]
    %vm43 = vcmask 1041409
    %v44 = vsel %vm43, %v42, %v40
    %45 = vrot.lane.b32.xlu0 %v44, 112
    %v46 = vpop.permute.xlu0 %45
    %vm47 = vcmask 950144
    %48 = vst.msk [vmem:[#allocation0] ss:$8 sm:$0x3] %vm47, %v46
    %s49 = scalar_lea.vmem %s0, 27
    %v50 = vld [vmem:[%s49] sm:$0x1]
    %s51 = scalar_lea.vmem %s0, 58
    %v52 = vld [vmem:[%s51] sm:$0x2]
    %vm53 = vcmask 1041409
    %v54 = vsel %vm53, %v52, %v50
    %55 = vrot.lane.b32.xlu0 %v54, 108
    %v56 = vpop.permute.xlu0 %55
    %vm57 = vcmask 917344
    %58 = vst.msk [vmem:[#allocation0] ss:$8 sm:$0x3] %vm57, %v56
    %s59 = scalar_lea.vmem %s0, 26
    %v60 = vld [vmem:[%s59] sm:$0x1]
    %s61 = scalar_lea.vmem %s0, 57
    %v62 = vld [vmem:[%s61] sm:$0x2]
    %vm63 = vcmask 1041409
    %v64 = vsel %vm63, %v62, %v60
    %65 = vrot.lane.b32.xlu0 %v64, 104
    %v66 = vpop.permute.xlu0 %65
    %vm67 = vcmask 884544
    %68 = vst.msk [vmem:[#allocation0] ss:$8 sm:$0x3] %vm67, %v66
    %s69 = scalar_lea.vmem %s0, 25
    %v70 = vld [vmem:[%s69] sm:$0x1]
    %s71 = scalar_lea.vmem %s0, 56
    %v72 = vld [vmem:[%s71] sm:$0x2]
    %vm73 = vcmask 1041409
    %v74 = vsel %vm73, %v72, %v70
    %75 = vrot.lane.b32.xlu0 %v74, 100
    %v76 = vpop.permute.xlu0 %75
    %vm77 = vcmask 851744
    %78 = vst.msk [vmem:[#allocation0] ss:$8 sm:$0x3] %vm77, %v76
    %s79 = scalar_lea.vmem %s0, 24
    %v80 = vld [vmem:[%s79] sm:$0x1]
    %s81 = scalar_lea.vmem %s0, 55
    %v82 = vld [vmem:[%s81] sm:$0x2]
    %vm83 = vcmask 1041409
    %v84 = vsel %vm83, %v82, %v80
    %85 = vrot.lane.b32.xlu0 %v84, 96
    %v86 = vpop.permute.xlu0 %85
    %vm87 = vcmask 818944
    %88 = vst.msk [vmem:[#allocation0] ss:$8 sm:$0x3] %vm87, %v86
    %s89 = scalar_lea.vmem %s0, 23
    %v90 = vld [vmem:[%s89] sm:$0x1]
    %s91 = scalar_lea.vmem %s0, 54
    %v92 = vld [vmem:[%s91] sm:$0x2]
    %vm93 = vcmask 1041409
    %v94 = vsel %vm93, %v92, %v90
    %95 = vrot.lane.b32.xlu0 %v94, 92
    %v96 = vpop.permute.xlu0 %95
    %vm97 = vcmask 786144
    %98 = vst.msk [vmem:[#allocation0] ss:$8 sm:$0x3] %vm97, %v96
    %s99 = scalar_lea.vmem %s0, 22
    %v100 = vld [vmem:[%s99] sm:$0x1]
    %s101 = scalar_lea.vmem %s0, 53
    %v102 = vld [vmem:[%s101] sm:$0x2]
    %vm103 = vcmask 1041409
    %v104 = vsel %vm103, %v102, %v100
    %105 = vrot.lane.b32.xlu0 %v104, 88
    %v106 = vpop.permute.xlu0 %105
    %vm107 = vcmask 753344
    %108 = vst.msk [vmem:[#allocation0] ss:$8 sm:$0x3] %vm107, %v106
    %s109 = scalar_lea.vmem %s0, 21
    %v110 = vld [vmem:[%s109] sm:$0x1]
    %s111 = scalar_lea.vmem %s0, 52
    %v112 = vld [vmem:[%s111] sm:$0x2]
    %vm113 = vcmask 1041409
    %v114 = vsel %vm113, %v112, %v110
    %115 = vrot.lane.b32.xlu0 %v114, 84
    %v116 = vpop.permute.xlu0 %115
    %vm117 = vcmask 720544
    %118 = vst.msk [vmem:[#allocation0] ss:$8 sm:$0x3] %vm117, %v116
    %s119 = scalar_lea.vmem %s0, 20
    %v120 = vld [vmem:[%s119] sm:$0x1]
    %s121 = scalar_lea.vmem %s0, 51
    %v122 = vld [vmem:[%s121] sm:$0x2]
    %vm123 = vcmask 1041409
    %v124 = vsel %vm123, %v122, %v120
    %125 = vrot.lane.b32.xlu0 %v124, 80
    %v126 = vpop.permute.xlu0 %125
    %vm127 = vcmask 687744
    %128 = vst.msk [vmem:[#allocation0] ss:$8 sm:$0x3] %vm127, %v126
    %s129 = scalar_lea.vmem %s0, 19
    %v130 = vld [vmem:[%s129] sm:$0x1]
    %s131 = scalar_lea.vmem %s0, 50
    %v132 = vld [vmem:[%s131] sm:$0x2]
    %vm133 = vcmask 1041409
    %v134 = vsel %vm133, %v132, %v130
    %135 = vrot.lane.b32.xlu0 %v134, 76
    %v136 = vpop.permute.xlu0 %135
    %vm137 = vcmask 654944
    %138 = vst.msk [vmem:[#allocation0] ss:$8 sm:$0x3] %vm137, %v136
    %s139 = scalar_lea.vmem %s0, 18
    %v140 = vld [vmem:[%s139] sm:$0x1]
    %s141 = scalar_lea.vmem %s0, 49
    %v142 = vld [vmem:[%s141] sm:$0x2]
    %vm143 = vcmask 1041409
    %v144 = vsel %vm143, %v142, %v140
    %145 = vrot.lane.b32.xlu0 %v144, 72
    %v146 = vpop.permute.xlu0 %145
    %vm147 = vcmask 622144
    %148 = vst.msk [vmem:[#allocation0] ss:$8 sm:$0x3] %vm147, %v146
    %s149 = scalar_lea.vmem %s0, 17
    %v150 = vld [vmem:[%s149] sm:$0x1]
    %s151 = scalar_lea.vmem %s0, 48
    %v152 = vld [vmem:[%s151] sm:$0x2]
    %vm153 = vcmask 1041409
    %v154 = vsel %vm153, %v152, %v150
    %155 = vrot.lane.b32.xlu0 %v154, 68
    %v156 = vpop.permute.xlu0 %155
    %vm157 = vcmask 589344
    %158 = vst.msk [vmem:[#allocation0] ss:$8 sm:$0x3] %vm157, %v156
    %s159 = scalar_lea.vmem %s0, 16
    %v160 = vld [vmem:[%s159] sm:$0x1]
    %s161 = scalar_lea.vmem %s0, 47
    %v162 = vld [vmem:[%s161] sm:$0x2]
    %vm163 = vcmask 1041409
    %v164 = vsel %vm163, %v162, %v160
    %165 = vrot.lane.b32.xlu0 %v164, 64
    %v166 = vpop.permute.xlu0 %165
    %vm167 = vcmask 556544
    %168 = vst.msk [vmem:[#allocation0] ss:$8 sm:$0x3] %vm167, %v166
    %s169 = scalar_lea.vmem %s0, 15
    %v170 = vld [vmem:[%s169] sm:$0x1]
    %s171 = scalar_lea.vmem %s0, 46
    %v172 = vld [vmem:[%s171] sm:$0x2]
    %vm173 = vcmask 1041409
    %v174 = vsel %vm173, %v172, %v170
    %175 = vrot.lane.b32.xlu0 %v174, 60
    %v176 = vpop.permute.xlu0 %175
    %vm177 = vcmask 523744
    %178 = vst.msk [vmem:[#allocation0] ss:$8 sm:$0x3] %vm177, %v176
    %s179 = scalar_lea.vmem %s0, 14
    %v180 = vld [vmem:[%s179] sm:$0x1]
    %s181 = scalar_lea.vmem %s0, 45
    %v182 = vld [vmem:[%s181] sm:$0x2]
    %vm183 = vcmask 1041409
    %v184 = vsel %vm183, %v182, %v180
    %185 = vrot.lane.b32.xlu0 %v184, 56
    %v186 = vpop.permute.xlu0 %185
    %vm187 = vcmask 490944
    %188 = vst.msk [vmem:[#allocation0] ss:$8 sm:$0x3] %vm187, %v186
    %s189 = scalar_lea.vmem %s0, 13
    %v190 = vld [vmem:[%s189] sm:$0x1]
    %s191 = scalar_lea.vmem %s0, 44
    %v192 = vld [vmem:[%s191] sm:$0x2]
    %vm193 = vcmask 1041409
    %v194 = vsel %vm193, %v192, %v190
    %195 = vrot.lane.b32.xlu0 %v194, 52
    %v196 = vpop.permute.xlu0 %195
    %vm197 = vcmask 458144
    %198 = vst.msk [vmem:[#allocation0] ss:$8 sm:$0x3] %vm197, %v196
    %s199 = scalar_lea.vmem %s0, 12
    %v200 = vld [vmem:[%s199] sm:$0x1]
    %s201 = scalar_lea.vmem %s0, 43
    %v202 = vld [vmem:[%s201] sm:$0x2]
    %vm203 = vcmask 1041409
    %v204 = vsel %vm203, %v202, %v200
    %205 = vrot.lane.b32.xlu0 %v204, 48
    %v206 = vpop.permute.xlu0 %205
    %vm207 = vcmask 425344
    %208 = vst.msk [vmem:[#allocation0] ss:$8 sm:$0x3] %vm207, %v206
    %s209 = scalar_lea.vmem %s0, 11
    %v210 = vld [vmem:[%s209] sm:$0x1]
    %s211 = scalar_lea.vmem %s0, 42
    %v212 = vld [vmem:[%s211] sm:$0x2]
    %vm213 = vcmask 1041409
    %v214 = vsel %vm213, %v212, %v210
    %215 = vrot.lane.b32.xlu0 %v214, 44
    %v216 = vpop.permute.xlu0 %215
    %vm217 = vcmask 392544
    %218 = vst.msk [vmem:[#allocation0] ss:$8 sm:$0x3] %vm217, %v216
    %s219 = scalar_lea.vmem %s0, 10
    %v220 = vld [vmem:[%s219] sm:$0x1]
    %s221 = scalar_lea.vmem %s0, 41
    %v222 = vld [vmem:[%s221] sm:$0x2]
    %vm223 = vcmask 1041409
    %v224 = vsel %vm223, %v222, %v220
    %225 = vrot.lane.b32.xlu0 %v224, 40
    %v226 = vpop.permute.xlu0 %225
    %vm227 = vcmask 359744
    %228 = vst.msk [vmem:[#allocation0] ss:$8 sm:$0x3] %vm227, %v226
    %s229 = scalar_lea.vmem %s0, 9
    %v230 = vld [vmem:[%s229] sm:$0x1]
    %s231 = scalar_lea.vmem %s0, 40
    %v232 = vld [vmem:[%s231] sm:$0x2]
    %vm233 = vcmask 1041409
    %v234 = vsel %vm233, %v232, %v230
    %235 = vrot.lane.b32.xlu0 %v234, 36
    %v236 = vpop.permute.xlu0 %235
    %vm237 = vcmask 326944
    %238 = vst.msk [vmem:[#allocation0] ss:$8 sm:$0x3] %vm237, %v236
    %s239 = scalar_lea.vmem %s0, 8
    %v240 = vld [vmem:[%s239] sm:$0x1]
    %s241 = scalar_lea.vmem %s0, 39
    %v242 = vld [vmem:[%s241] sm:$0x2]
    %vm243 = vcmask 1041409
    %v244 = vsel %vm243, %v242, %v240
    %245 = vrot.lane.b32.xlu0 %v244, 32
    %v246 = vpop.permute.xlu0 %245
    %vm247 = vcmask 294144
    %248 = vst.msk [vmem:[#allocation0] ss:$8 sm:$0x3] %vm247, %v246
    %s249 = scalar_lea.vmem %s0, 7
    %v250 = vld [vmem:[%s249] sm:$0x1]
    %s251 = scalar_lea.vmem %s0, 38
    %v252 = vld [vmem:[%s251] sm:$0x2]
    %vm253 = vcmask 1041409
    %v254 = vsel %vm253, %v252, %v250
    %255 = vrot.lane.b32.xlu0 %v254, 28
    %v256 = vpop.permute.xlu0 %255
    %vm257 = vcmask 261344
    %258 = vst.msk [vmem:[#allocation0] ss:$8 sm:$0x3] %vm257, %v256
    %s259 = scalar_lea.vmem %s0, 6
    %v260 = vld [vmem:[%s259] sm:$0x1]
    %s261 = scalar_lea.vmem %s0, 37
    %v262 = vld [vmem:[%s261] sm:$0x2]
    %vm263 = vcmask 1041409
    %v264 = vsel %vm263, %v262, %v260
    %265 = vrot.lane.b32.xlu0 %v264, 24
    %v266 = vpop.permute.xlu0 %265
    %vm267 = vcmask 228544
    %268 = vst.msk [vmem:[#allocation0] ss:$8 sm:$0x3] %vm267, %v266
    %s269 = scalar_lea.vmem %s0, 5
    %v270 = vld [vmem:[%s269] sm:$0x1]
    %s271 = scalar_lea.vmem %s0, 36
    %v272 = vld [vmem:[%s271] sm:$0x2]
    %vm273 = vcmask 1041409
    %v274 = vsel %vm273, %v272, %v270
    %275 = vrot.lane.b32.xlu0 %v274, 20
    %v276 = vpop.permute.xlu0 %275
    %vm277 = vcmask 195744
    %278 = vst.msk [vmem:[#allocation0] ss:$8 sm:$0x3] %vm277, %v276
    %s279 = scalar_lea.vmem %s0, 4
    %v280 = vld [vmem:[%s279] sm:$0x1]
    %s281 = scalar_lea.vmem %s0, 35
    %v282 = vld [vmem:[%s281] sm:$0x2]
    %vm283 = vcmask 1041409
    %v284 = vsel %vm283, %v282, %v280
    %285 = vrot.lane.b32.xlu0 %v284, 16
    %v286 = vpop.permute.xlu0 %285
    %vm287 = vcmask 162944
    %288 = vst.msk [vmem:[#allocation0] ss:$8 sm:$0x3] %vm287, %v286
    %s289 = scalar_lea.vmem %s0, 3
    %v290 = vld [vmem:[%s289] sm:$0x1]
    %s291 = scalar_lea.vmem %s0, 34
    %v292 = vld [vmem:[%s291] sm:$0x2]
    %vm293 = vcmask 1041409
    %v294 = vsel %vm293, %v292, %v290
    %295 = vrot.lane.b32.xlu0 %v294, 12
    %v296 = vpop.permute.xlu0 %295
    %vm297 = vcmask 130144
    %298 = vst.msk [vmem:[#allocation0] ss:$8 sm:$0x3] %vm297, %v296
    %s299 = scalar_lea.vmem %s0, 2
    %v300 = vld [vmem:[%s299] sm:$0x1]
    %s301 = scalar_lea.vmem %s0, 33
    %v302 = vld [vmem:[%s301] sm:$0x2]
    %vm303 = vcmask 1041409
    %v304 = vsel %vm303, %v302, %v300
    %305 = vrot.lane.b32.xlu0 %v304, 8
    %v306 = vpop.permute.xlu0 %305
    %vm307 = vcmask 97344
    %308 = vst.msk [vmem:[#allocation0] ss:$8 sm:$0x3] %vm307, %v306
    %s309 = scalar_lea.vmem %s0, 1
    %v310 = vld [vmem:[%s309] sm:$0x1]
    %s311 = scalar_lea.vmem %s0, 32
    %v312 = vld [vmem:[%s311] sm:$0x2]
    %vm313 = vcmask 1041409
    %v314 = vsel %vm313, %v312, %v310
    %315 = vrot.lane.b32.xlu0 %v314, 4
    %v316 = vpop.permute.xlu0 %315
    %vm317 = vcmask 64544
    %318 = vst.msk [vmem:[#allocation0] ss:$8 sm:$0x3] %vm317, %v316
    %s320 = sshllo.u32 0, 1
    %v322 = vld [vmem:[#allocation0] sm:%s320]
    %s323 = sshllo.u32 0, 1
    %324 = vst [vmem:[%s1] sm:%s323] %v322
    %s325 = scalar_lea.vmem [#allocation0], 8
    %v326 = vld [vmem:[%s325] sm:%s320]
    %s327 = sshllo.u32 0, 1
    %s328 = scalar_lea.vmem %s1, 1
    %329 = vst [vmem:[%s328] sm:%s327] %v326

// kernel: _residual_block_impl.5
$region0: #{_residual_block_impl.5}
  #allocation0 [shape = 'u32[]', space=smem, size = 0x4, offset = 0x4, fixed_abs, tag = 'smem constant byte address 0x4 - core index']
  #allocation1 [shape = 'u32[144,128]{1,0:T(1,128)}', space=vmem, size = 0x12000, scoped, tag = 'internal scratch']
  %s0 = inlined_call_operand.vmem [shape: f32[16,256], index: 0, kind: input, shape index: {}]
  %s1 = inlined_call_operand.vmem [shape: f32[1,256], index: 1, kind: input, shape index: {}]
  %s2 = inlined_call_operand.vmem [shape: f32[1,256], index: 2, kind: input, shape index: {}]
  %s3 = inlined_call_operand.vmem [shape: f32[1,256], index: 3, kind: input, shape index: {}]
  %s4 = inlined_call_operand.vmem [shape: f32[16,256], index: 4, kind: output, shape index: {}]
  %s5 = sld [smem:[#allocation0]]
  $region49: #{_residual_block_impl.5} parent=0
    _
  %s7 = ssub.s32 1, %s5
  %s8 = scalar_select 0, %s7, %s5
  loop: start=0, step=1, limit=4
  $region2: #{_residual_block_impl.5} parent=0 // loop_pre_header
    _
  $region3: #{_residual_block_impl.5} parent=0 // loop_header
    %s10 = sphi 0, %s14
    %p11 = scmp.ge.s32.totalorder %s10, 4
    %s20 = sphi 0, %s22
    %s23 = sphi 0, %s20
    %s24 = sphi 0, %s23
    %s40 = sphi 0, %s24
    %s44 = sphi 0, %s44
    %s46 = sphi 0, %s44
    %s47 = sphi 0, %s46
    %s61 = sphi 0, %s47
    %s65 = sphi 0, %s65
    %s67 = sphi 0, %s65
    %s68 = sphi 0, %s67
    %s82 = sphi 0, %s68
    %s86 = sphi 0, %s86
    %s88 = sphi 0, %s86
    %s89 = sphi 0, %s88
    %s103 = sphi 0, %s89
    %s109 = sphi 0, %s111
    %s112 = sphi 0, %s109
    %s113 = sphi 0, %s112
    %s129 = sphi 0, %s113
  $region4: #{_residual_block_impl.5} parent=0 // loop_header_branch
    %13 = sbr.rel (%p11) target = $region8
  $region5: #{_residual_block_impl.5} parent=0 // loop_body
    %s15 = ssub.s32 %s10, 1
    %s16 = ssub.s32 %s10, 2
    %s17 = sadd.s32 %s10, 1
    %s18 = ssub.s32 %s10, %s17
    %p19 = scmp.eq.s32.totalorder %s18, 0
    %s21 = sadd.s32 %s20, 1
    %s22 = scalar_select %p19, %s20, %s21
    %p25 = pneg %p19
    %p26 = scmp.eq.s32.totalorder %s10, 1
    %p27 = por %p25, %p26
    %p28 = scmp.ne.s32.totalorder %s20, %s23
    %p29 = scmp.eq.s32.totalorder %s10, 0
    %p30 = por %p28, %p29
    %p31 = scmp.ne.s32.totalorder %s20, %s23
    %p32 = scmp.eq.s32.totalorder %s15, 1
    %p33 = por %p31, %p32
    %p34 = scmp.ne.s32.totalorder %s23, %s24
    %p35 = scmp.eq.s32.totalorder %s15, 0
    %p36 = por %p34, %p35
    %p37 = scmp.ne.s32.totalorder %s23, %s24
    %p38 = scmp.eq.s32.totalorder %s16, 1
    %p39 = por %p37, %p38
    %p41 = scmp.ne.s32.totalorder %s24, %s40
    %p42 = scmp.eq.s32.totalorder %s16, 0
    %p43 = por %p41, %p42
    %s45 = sadd.s32 %s44, 1
    %p48 = scmp.eq.s32.totalorder %s10, 1
    %p49 = scmp.ne.s32.totalorder %s44, %s46
    %p50 = scmp.eq.s32.totalorder %s10, 0
    %p51 = por %p49, %p50
    %p52 = scmp.ne.s32.totalorder %s44, %s46
    %p53 = scmp.eq.s32.totalorder %s15, 1
    %p54 = por %p52, %p53
    %p55 = scmp.ne.s32.totalorder %s46, %s47
    %p56 = scmp.eq.s32.totalorder %s15, 0
    %p57 = por %p55, %p56
    %p58 = scmp.ne.s32.totalorder %s46, %s47
    %p59 = scmp.eq.s32.totalorder %s16, 1
    %p60 = por %p58, %p59
    %p62 = scmp.ne.s32.totalorder %s47, %s61
    %p63 = scmp.eq.s32.totalorder %s16, 0
    %p64 = por %p62, %p63
    %s66 = sadd.s32 %s65, 1
    %p69 = scmp.eq.s32.totalorder %s10, 1
    %p70 = scmp.ne.s32.totalorder %s65, %s67
    %p71 = scmp.eq.s32.totalorder %s10, 0
    %p72 = por %p70, %p71
    %p73 = scmp.ne.s32.totalorder %s65, %s67
    %p74 = scmp.eq.s32.totalorder %s15, 1
    %p75 = por %p73, %p74
    %p76 = scmp.ne.s32.totalorder %s67, %s68
    %p77 = scmp.eq.s32.totalorder %s15, 0
    %p78 = por %p76, %p77
    %p79 = scmp.ne.s32.totalorder %s67, %s68
    %p80 = scmp.eq.s32.totalorder %s16, 1
    %p81 = por %p79, %p80
    %p83 = scmp.ne.s32.totalorder %s68, %s82
    %p84 = scmp.eq.s32.totalorder %s16, 0
    %p85 = por %p83, %p84
    %s87 = sadd.s32 %s86, 1
    %p90 = scmp.eq.s32.totalorder %s10, 1
    %p91 = scmp.ne.s32.totalorder %s86, %s88
    %p92 = scmp.eq.s32.totalorder %s10, 0
    %p93 = por %p91, %p92
    %p94 = scmp.ne.s32.totalorder %s86, %s88
    %p95 = scmp.eq.s32.totalorder %s15, 1
    %p96 = por %p94, %p95
    %p97 = scmp.ne.s32.totalorder %s88, %s89
    %p98 = scmp.eq.s32.totalorder %s15, 0
    %p99 = por %p97, %p98
    %p100 = scmp.ne.s32.totalorder %s88, %s89
    %p101 = scmp.eq.s32.totalorder %s16, 1
    %p102 = por %p100, %p101
    %p104 = scmp.ne.s32.totalorder %s89, %s103
    %p105 = scmp.eq.s32.totalorder %s16, 0
    %p106 = por %p104, %p105
    %s107 = ssub.s32 %s10, %s17
    %p108 = scmp.eq.s32.totalorder %s107, 0
    %s110 = sadd.s32 %s109, 1
    %s111 = scalar_select %p108, %s109, %s110
    %p114 = pneg %p108
    %p115 = scmp.eq.s32.totalorder %s10, 1
    %p116 = por %p114, %p115
    %p117 = scmp.ne.s32.totalorder %s109, %s112
    %p118 = scmp.eq.s32.totalorder %s10, 0
    %p119 = por %p117, %p118
    %p120 = scmp.ne.s32.totalorder %s109, %s112
    %p121 = scmp.eq.s32.totalorder %s15, 1
    %p122 = por %p120, %p121
    %p123 = scmp.ne.s32.totalorder %s112, %s113
    %p124 = scmp.eq.s32.totalorder %s15, 0
    %p125 = por %p123, %p124
    %p126 = scmp.ne.s32.totalorder %s112, %s113
    %p127 = scmp.eq.s32.totalorder %s16, 1
    %p128 = por %p126, %p127
    %p130 = scmp.ne.s32.totalorder %s113, %s129
    %p131 = scmp.eq.s32.totalorder %s16, 0
    %p132 = por %p130, %p131
    %p133 = scmp.le.s32.totalorder 1, %s10
    %p134 = scmp.lt.s32.totalorder %s10, 3
    %p135 = pnand %p133, %p134
    %p136 = pneg %p135
    // Predicated region
    $region9: #{_residual_block_impl.5} parent=5 // pred_check
      _
    $region10: #{_residual_block_impl.5} parent=5 // pred_check_branch
      %138 = sbr.rel (%p135) target = $region12
    $region11: #{_residual_block_impl.5} parent=5 // pred_region
      %s139 = ssub.s32 %s10, 1
      // Predicated region
      $region13: #{_residual_block_impl.5} parent=11 // pred_check
        %p140 = pneg %p57
      $region14: #{_residual_block_impl.5} parent=11 // pred_check_branch
        %142 = sbr.rel (%p140) target = $region16
      $region15: #{_residual_block_impl.5} parent=11 // pred_region
        _
      $region16: #{_residual_block_impl.5} parent=11 // pred_fallthru
        _
      // Predicated region
      $region17: #{_residual_block_impl.5} parent=11 // pred_check
        %p143 = pneg %p78
      $region18: #{_residual_block_impl.5} parent=11 // pred_check_branch
        %145 = sbr.rel (%p143) target = $region20
      $region19: #{_residual_block_impl.5} parent=11 // pred_region
        _
      $region20: #{_residual_block_impl.5} parent=11 // pred_fallthru
        _
      // Predicated region
      $region21: #{_residual_block_impl.5} parent=11 // pred_check
        %p146 = pneg %p99
      $region22: #{_residual_block_impl.5} parent=11 // pred_check_branch
        %148 = sbr.rel (%p146) target = $region24
      $region23: #{_residual_block_impl.5} parent=11 // pred_region
        _
      $region24: #{_residual_block_impl.5} parent=11 // pred_fallthru
        _
    $region12: #{_residual_block_impl.5} parent=5 // pred_fallthru
      _
    %p149 = scmp.lt.s32.totalorder %s10, 2
    // Predicated region
    $region25: #{_residual_block_impl.5} parent=5 // pred_check
      %p150 = pneg %p149
    $region26: #{_residual_block_impl.5} parent=5 // pred_check_branch
      %152 = sbr.rel (%p150) target = $region28
    $region27: #{_residual_block_impl.5} parent=5 // pred_region
      // Predicated region
      $region29: #{_residual_block_impl.5} parent=27 // pred_check
        %p153 = pneg %p30
      $region30: #{_residual_block_impl.5} parent=27 // pred_check_branch
        %155 = sbr.rel (%p153) target = $region32
      $region31: #{_residual_block_impl.5} parent=27 // pred_region
        %p156 = scmp.lt.s32.totalorder %s10, 1
        %s157 = scalar_select %p156, %s10, 1
        %s158 = smul.addr %s157, 2
        %s159 = smul.addr %s158, 8
        %s160 = scalar_lea.vmem %s0, %s159
      $region32: #{_residual_block_impl.5} parent=27 // pred_fallthru
        _
    $region28: #{_residual_block_impl.5} parent=5 // pred_fallthru
      _
    %p161 = scmp.le.s32.totalorder 1, %s10
    %p162 = scmp.lt.s32.totalorder %s10, 3
    %p163 = pnand %p161, %p162
    %p164 = pneg %p163
    // Predicated region
    $region33: #{_residual_block_impl.5} parent=5 // pred_check
      _
    $region34: #{_residual_block_impl.5} parent=5 // pred_check_branch
      %166 = sbr.rel (%p163) target = $region36
    $region35: #{_residual_block_impl.5} parent=5 // pred_region
      %s167 = ssub.s32 %s10, 1
      %p168 = scmp.lt.s32.totalorder %s15, 1
      %s169 = scalar_select %p168, %s15, 1
      %s170 = smul.addr %s169, 2
      %s171 = smul.addr %s170, 8
      %s172 = scalar_lea.vmem %s0, %s171
      %p173 = pneg %p36
      %p174 = pneg %p33
      %p175 = pneg %p57
      %p176 = pneg %p54
      %p177 = pneg %p78
      %p178 = pneg %p75
      %p179 = pneg %p99
      %p180 = pneg %p96
      %p181 = pneg %p125
      %p182 = pneg %p122
      %p183 = scmp.lt.s32.totalorder %s15, 1
      %s184 = scalar_select %p183, %s15, 1
      %s185 = smul.addr %s184, 2
      %s186 = smul.addr %s185, 8
      %s187 = scalar_lea.vmem %s4, %s186
      %p188 = scmp.lt.s32.totalorder %s15, 1
      %s189 = scalar_select %p188, %s15, 1
      %s190 = smul.addr %s189, 2
      %s191 = smul.addr %s190, 8
      %s192 = scalar_lea.vmem %s0, %s191
      %p193 = scmp.lt.s32.totalorder %s15, 1
      %s194 = scalar_select %p193, %s15, 1
      %s195 = smul.addr %s194, 2
      %s196 = smul.addr %s195, 8
      %s197 = scalar_lea.vmem %s4, %s196
      %v198 = vld [vmem:[%s192] sm:$0xff]
      %v199 = vld [vmem:[%s192 + $0x8] sm:$0xff]
      %v200 = vld [vmem:[%s1] sm:$0x3]
      %v202 = vlaneseq
      %v203 = vshrl.u32 %v202, 7
      %v204 = vsub.s32 0, %v203
      %v205 = vrot.slane %v200, %v204
      %v206 = vlaneseq
      %v207 = vshrl.u32 %v206, 7
      %v208 = vsub.s32 1, %v207
      %v209 = vrot.slane %v200, %v208
      %v212 = vmul.f32 %v198, %v205
      %v213 = vmul.f32 %v199, %v209
      %v214 = vld [vmem:[%s2] sm:$0x3]
      %v216 = vlaneseq
      %v217 = vshrl.u32 %v216, 7
      %v218 = vsub.s32 0, %v217
      %v219 = vrot.slane %v214, %v218
      %v220 = vlaneseq
      %v221 = vshrl.u32 %v220, 7
      %v222 = vsub.s32 1, %v221
      %v223 = vrot.slane %v214, %v222
      %v226 = vadd.f32 %v212, %v219
      %v227 = vadd.f32 %v213, %v223
      %vm228 = vcmp.ge.f32.partialorder %v226, 0.0
      %vm229 = vcmp.ge.f32.partialorder %v227, 0.0
      %v230 = vld [vmem:[%s3] sm:$0x3]
      %v232 = vlaneseq
      %v233 = vshrl.u32 %v232, 7
      %v234 = vsub.s32 0, %v233
      %v235 = vrot.slane %v230, %v234
      %v236 = vlaneseq
      %v237 = vshrl.u32 %v236, 7
      %v238 = vsub.s32 1, %v237
      %v239 = vrot.slane %v230, %v238
      %v242 = vmul.f32 %v226, %v235
      %v243 = vmul.f32 %v227, %v239
      %v244 = vsel %vm228, %v226, %v242
      %v245 = vsel %vm229, %v227, %v243
      %246 = vst [vmem:[%s197] sm:$0xff] %v244
      %247 = vst [vmem:[%s197 + $0x8] sm:$0xff] %v245
      %p248 = scmp.lt.s32.totalorder %s15, 1
      %s249 = scalar_select %p248, %s15, 1
      %s250 = smul.addr %s249, 2
      %s251 = smul.addr %s250, 8
      %s252 = scalar_lea.vmem %s4, %s251
      // Predicated region
      $region37: #{_residual_block_impl.5} parent=35 // pred_check
        %p253 = pneg %p122
      $region38: #{_residual_block_impl.5} parent=35 // pred_check_branch
        %255 = sbr.rel (%p253) target = $region40
      $region39: #{_residual_block_impl.5} parent=35 // pred_region
        _
      $region40: #{_residual_block_impl.5} parent=35 // pred_fallthru
        _
    $region36: #{_residual_block_impl.5} parent=5 // pred_fallthru
      _
    %p256 = scmp.le.s32.totalorder 2, %s10
    // Predicated region
    $region41: #{_residual_block_impl.5} parent=5 // pred_check
      %p257 = pneg %p256
    $region42: #{_residual_block_impl.5} parent=5 // pred_check_branch
      %259 = sbr.rel (%p257) target = $region44
    $region43: #{_residual_block_impl.5} parent=5 // pred_region
      %s260 = ssub.s32 %s10, 2
      // Predicated region
      $region45: #{_residual_block_impl.5} parent=43 // pred_check
        %p261 = pneg %p128
      $region46: #{_residual_block_impl.5} parent=43 // pred_check_branch
        %263 = sbr.rel (%p261) target = $region48
      $region47: #{_residual_block_impl.5} parent=43 // pred_region
        %p264 = scmp.lt.s32.totalorder %s16, 1
        %s265 = scalar_select %p264, %s16, 1
        %s266 = smul.addr %s265, 2
        %s267 = smul.addr %s266, 8
        %s268 = scalar_lea.vmem %s4, %s267
      $region48: #{_residual_block_impl.5} parent=43 // pred_fallthru
        _
    $region44: #{_residual_block_impl.5} parent=5 // pred_fallthru
      _
  $region6: #{_residual_block_impl.5} parent=0 // loop_footer
    %s14 = sadd.s32 1, %s10
  $region7: #{_residual_block_impl.5} parent=0 // loop_footer_branch
    %9 = sbr.rel target = $region3
  $region8: #{_residual_block_impl.5} parent=0 // loop_exit
    _

// kernel: _residual_block_impl.4
$region0: #{_residual_block_impl.4}
  #allocation0 [shape = 'u32[]', space=smem, size = 0x4, offset = 0x4, fixed_abs, tag = 'smem constant byte address 0x4 - core index']
  #allocation1 [shape = 'u32[144,128]{1,0:T(1,128)}', space=vmem, size = 0x12000, scoped, tag = 'internal scratch']
  %s0 = inlined_call_operand.vmem [shape: f32[2,10,10,10,4], index: 0, kind: input, shape index: {}, may-alias: {0,1,2}]
  %s1 = inlined_call_operand.vmem [shape: f32[2,10,10,10,4], index: 1, kind: input, shape index: {}, may-alias: {0,1,2}]
  %s2 = inlined_call_operand.vmem [shape: f32[2,10,10,10,4], index: 2, kind: input, shape index: {}, may-alias: {0,1,2}]
  %s3 = inlined_call_operand.vmem [shape: f32[27,4,4], index: 3, kind: input, shape index: {}]
  %s4 = inlined_call_operand.vmem [shape: f32[2,8,64,4], index: 4, kind: output, shape index: {0}]
  %s5 = inlined_call_operand.vmem [shape: f32[2,8,2,4], index: 5, kind: output, shape index: {1}]
  %6 = xla_tuple %s4, %s5
  %s7 = sld [smem:[#allocation0]]
  $region57: #{_residual_block_impl.4} parent=0
    _
  %s9 = ssub.s32 1, %s7
  %s10 = scalar_select 0, %s9, %s7
  loop: start=0, step=1, limit=18
  $region2: #{_residual_block_impl.4} parent=0 // loop_pre_header
    _
  $region3: #{_residual_block_impl.4} parent=0 // loop_header
    %s12 = sphi 0, %s16
    %p13 = scmp.ge.s32.totalorder %s12, 18
    %s19 = sphi 0, %s31
    %s20 = sphi 0, %s27
    %s21 = sphi 0, %s19
    %s22 = sphi 0, %s20
    %s23 = sphi 0, %s21
    %s24 = sphi 0, %s22
    %s36 = sphi 0, %s38
    %s39 = sphi 0, %s36
    %s40 = sphi 0, %s39
    %s56 = sphi 0, %s40
    %s66 = sphi 0, %s68
    %s69 = sphi 0, %s66
    %s70 = sphi 0, %s69
    %s86 = sphi 0, %s70
    %s96 = sphi 0, %s98
    %s99 = sphi 0, %s96
    %s100 = sphi 0, %s99
    %s116 = sphi 0, %s100
    %s120 = sphi 0, %s120
    %s122 = sphi 0, %s120
    %s123 = sphi 0, %s122
    %s137 = sphi 0, %s123
    %s145 = sphi 0, %s147
    %s148 = sphi 0, %s145
    %s149 = sphi 0, %s148
    %s165 = sphi 0, %s149
    %s173 = sphi 0, %s175
    %s176 = sphi 0, %s173
    %s177 = sphi 0, %s176
    %s193 = sphi 0, %s177
  $region4: #{_residual_block_impl.4} parent=0 // loop_header_branch
    %15 = sbr.rel (%p13) target = $region8
  $region5: #{_residual_block_impl.4} parent=0 // loop_body
    %s17 = ssub.s32 %s12, 1
    %s18 = ssub.s32 %s12, 2
    %s25 = sadd.s32 1, %s20
    %p26 = scmp.ge.s32.totalorder %s25, 8
    %s27 = scalar_select %p26, 0, %s25
    %s28 = sadd.s32 1, %s19
    %s29 = scalar_select %p26, %s28, %s19
    %p30 = scmp.ge.s32.totalorder %s29, 2
    %s31 = scalar_select %p30, 0, %s29
    %s32 = ssub.s32 %s19, %s31
    %s33 = ssub.s32 %s20, %s27
    %s34 = sor.u32 %s32, %s33
    %p35 = scmp.eq.s32.totalorder %s34, 0
    %s37 = sadd.s32 %s36, 1
    %s38 = scalar_select %p35, %s36, %s37
    %p41 = pneg %p35
    %p42 = scmp.eq.s32.totalorder %s12, 15
    %p43 = por %p41, %p42
    %p44 = scmp.ne.s32.totalorder %s36, %s39
    %p45 = scmp.eq.s32.totalorder %s12, 0
    %p46 = por %p44, %p45
    %p47 = scmp.ne.s32.totalorder %s36, %s39
    %p48 = scmp.eq.s32.totalorder %s17, 15
    %p49 = por %p47, %p48
    %p50 = scmp.ne.s32.totalorder %s39, %s40
    %p51 = scmp.eq.s32.totalorder %s17, 0
    %p52 = por %p50, %p51
    %p53 = scmp.ne.s32.totalorder %s39, %s40
    %p54 = scmp.eq.s32.totalorder %s18, 15
    %p55 = por %p53, %p54
    %p57 = scmp.ne.s32.totalorder %s40, %s56
    %p58 = scmp.eq.s32.totalorder %s18, 0
    %p59 = por %p57, %p58
    %s60 = sadd.s32 %s20, 1
    %s61 = sadd.s32 %s27, 1
    %s62 = ssub.s32 %s19, %s31
    %s63 = ssub.s32 %s60, %s61
    %s64 = sor.u32 %s62, %s63
    %p65 = scmp.eq.s32.totalorder %s64, 0
    %s67 = sadd.s32 %s66, 1
    %s68 = scalar_select %p65, %s66, %s67
    %p71 = pneg %p65
    %p72 = scmp.eq.s32.totalorder %s12, 15
    %p73 = por %p71, %p72
    %p74 = scmp.ne.s32.totalorder %s66, %s69
    %p75 = scmp.eq.s32.totalorder %s12, 0
    %p76 = por %p74, %p75
    %p77 = scmp.ne.s32.totalorder %s66, %s69
    %p78 = scmp.eq.s32.totalorder %s17, 15
    %p79 = por %p77, %p78
    %p80 = scmp.ne.s32.totalorder %s69, %s70
    %p81 = scmp.eq.s32.totalorder %s17, 0
    %p82 = por %p80, %p81
    %p83 = scmp.ne.s32.totalorder %s69, %s70
    %p84 = scmp.eq.s32.totalorder %s18, 15
    %p85 = por %p83, %p84
    %p87 = scmp.ne.s32.totalorder %s70, %s86
    %p88 = scmp.eq.s32.totalorder %s18, 0
    %p89 = por %p87, %p88
    %s90 = sadd.s32 %s20, 2
    %s91 = sadd.s32 %s27, 2
    %s92 = ssub.s32 %s19, %s31
    %s93 = ssub.s32 %s90, %s91
    %s94 = sor.u32 %s92, %s93
    %p95 = scmp.eq.s32.totalorder %s94, 0
    %s97 = sadd.s32 %s96, 1
    %s98 = scalar_select %p95, %s96, %s97
    %p101 = pneg %p95
    %p102 = scmp.eq.s32.totalorder %s12, 15
    %p103 = por %p101, %p102
    %p104 = scmp.ne.s32.totalorder %s96, %s99
    %p105 = scmp.eq.s32.totalorder %s12, 0
    %p106 = por %p104, %p105
    %p107 = scmp.ne.s32.totalorder %s96, %s99
    %p108 = scmp.eq.s32.totalorder %s17, 15
    %p109 = por %p107, %p108
    %p110 = scmp.ne.s32.totalorder %s99, %s100
    %p111 = scmp.eq.s32.totalorder %s17, 0
    %p112 = por %p110, %p111
    %p113 = scmp.ne.s32.totalorder %s99, %s100
    %p114 = scmp.eq.s32.totalorder %s18, 15
    %p115 = por %p113, %p114
    %p117 = scmp.ne.s32.totalorder %s100, %s116
    %p118 = scmp.eq.s32.totalorder %s18, 0
    %p119 = por %p117, %p118
    %s121 = sadd.s32 %s120, 1
    %p124 = scmp.eq.s32.totalorder %s12, 15
    %p125 = scmp.ne.s32.totalorder %s120, %s122
    %p126 = scmp.eq.s32.totalorder %s12, 0
    %p127 = por %p125, %p126
    %p128 = scmp.ne.s32.totalorder %s120, %s122
    %p129 = scmp.eq.s32.totalorder %s17, 15
    %p130 = por %p128, %p129
    %p131 = scmp.ne.s32.totalorder %s122, %s123
    %p132 = scmp.eq.s32.totalorder %s17, 0
    %p133 = por %p131, %p132
    %p134 = scmp.ne.s32.totalorder %s122, %s123
    %p135 = scmp.eq.s32.totalorder %s18, 15
    %p136 = por %p134, %p135
    %p138 = scmp.ne.s32.totalorder %s123, %s137
    %p139 = scmp.eq.s32.totalorder %s18, 0
    %p140 = por %p138, %p139
    %s141 = ssub.s32 %s19, %s31
    %s142 = ssub.s32 %s20, %s27
    %s143 = sor.u32 %s141, %s142
    %p144 = scmp.eq.s32.totalorder %s143, 0
    %s146 = sadd.s32 %s145, 1
    %s147 = scalar_select %p144, %s145, %s146
    %p150 = pneg %p144
    %p151 = scmp.eq.s32.totalorder %s12, 15
    %p152 = por %p150, %p151
    %p153 = scmp.ne.s32.totalorder %s145, %s148
    %p154 = scmp.eq.s32.totalorder %s12, 0
    %p155 = por %p153, %p154
    %p156 = scmp.ne.s32.totalorder %s145, %s148
    %p157 = scmp.eq.s32.totalorder %s17, 15
    %p158 = por %p156, %p157
    %p159 = scmp.ne.s32.totalorder %s148, %s149
    %p160 = scmp.eq.s32.totalorder %s17, 0
    %p161 = por %p159, %p160
    %p162 = scmp.ne.s32.totalorder %s148, %s149
    %p163 = scmp.eq.s32.totalorder %s18, 15
    %p164 = por %p162, %p163
    %p166 = scmp.ne.s32.totalorder %s149, %s165
    %p167 = scmp.eq.s32.totalorder %s18, 0
    %p168 = por %p166, %p167
    %s169 = ssub.s32 %s19, %s31
    %s170 = ssub.s32 %s20, %s27
    %s171 = sor.u32 %s169, %s170
    %p172 = scmp.eq.s32.totalorder %s171, 0
    %s174 = sadd.s32 %s173, 1
    %s175 = scalar_select %p172, %s173, %s174
    %p178 = pneg %p172
    %p179 = scmp.eq.s32.totalorder %s12, 15
    %p180 = por %p178, %p179
    %p181 = scmp.ne.s32.totalorder %s173, %s176
    %p182 = scmp.eq.s32.totalorder %s12, 0
    %p183 = por %p181, %p182
    %p184 = scmp.ne.s32.totalorder %s173, %s176
    %p185 = scmp.eq.s32.totalorder %s17, 15
    %p186 = por %p184, %p185
    %p187 = scmp.ne.s32.totalorder %s176, %s177
    %p188 = scmp.eq.s32.totalorder %s17, 0
    %p189 = por %p187, %p188
    %p190 = scmp.ne.s32.totalorder %s176, %s177
    %p191 = scmp.eq.s32.totalorder %s18, 15
    %p192 = por %p190, %p191
    %p194 = scmp.ne.s32.totalorder %s177, %s193
    %p195 = scmp.eq.s32.totalorder %s18, 0
    %p196 = por %p194, %p195
    %p197 = scmp.le.s32.totalorder 1, %s12
    %p198 = scmp.lt.s32.totalorder %s12, 17
    %p199 = pnand %p197, %p198
    %p200 = pneg %p199
    // Predicated region
    $region9: #{_residual_block_impl.4} parent=5 // pred_check
      _
    $region10: #{_residual_block_impl.4} parent=5 // pred_check_branch
      %202 = sbr.rel (%p199) target = $region12
    $region11: #{_residual_block_impl.4} parent=5 // pred_region
      %s203 = ssub.s32 %s12, 1
      // Predicated region
      $region13: #{_residual_block_impl.4} parent=11 // pred_check
        %p204 = pneg %p133
      $region14: #{_residual_block_impl.4} parent=11 // pred_check_branch
        %206 = sbr.rel (%p204) target = $region16
      $region15: #{_residual_block_impl.4} parent=11 // pred_region
        _
      $region16: #{_residual_block_impl.4} parent=11 // pred_fallthru
        _
    $region12: #{_residual_block_impl.4} parent=5 // pred_fallthru
      _
    %p207 = scmp.lt.s32.totalorder %s12, 16
    // Predicated region
    $region17: #{_residual_block_impl.4} parent=5 // pred_check
      %p208 = pneg %p207
    $region18: #{_residual_block_impl.4} parent=5 // pred_check_branch
      %210 = sbr.rel (%p208) target = $region20
    $region19: #{_residual_block_impl.4} parent=5 // pred_region
      // Predicated region
      $region21: #{_residual_block_impl.4} parent=19 // pred_check
        %p211 = pneg %p46
      $region22: #{_residual_block_impl.4} parent=19 // pred_check_branch
        %213 = sbr.rel (%p211) target = $region24
      $region23: #{_residual_block_impl.4} parent=19 // pred_region
        %p214 = scmp.lt.s32.totalorder %s19, 1
        %s215 = scalar_select %p214, %s19, 1
        %p216 = scmp.lt.s32.totalorder %s20, 9
        %s217 = scalar_select %p216, %s20, 9
        %s218 = smul.addr %s217, 20
        %s219 = smul.addr %s215, 200
        %s220 = sadd.s32 %s218, %s219
        %s221 = smul.addr %s220, 8
        %s222 = scalar_lea.vmem %s0, %s221
      $region24: #{_residual_block_impl.4} parent=19 // pred_fallthru
        _
      // Predicated region
      $region25: #{_residual_block_impl.4} parent=19 // pred_check
        %p223 = pneg %p76
      $region26: #{_residual_block_impl.4} parent=19 // pred_check_branch
        %225 = sbr.rel (%p223) target = $region28
      $region27: #{_residual_block_impl.4} parent=19 // pred_region
        %s226 = sadd.s32 %s20, 1
        %p227 = scmp.lt.s32.totalorder %s19, 1
        %s228 = scalar_select %p227, %s19, 1
        %p229 = scmp.lt.s32.totalorder %s226, 9
        %s230 = scalar_select %p229, %s226, 9
        %s231 = smul.addr %s230, 20
        %s232 = smul.addr %s228, 200
        %s233 = sadd.s32 %s231, %s232
        %s234 = smul.addr %s233, 8
        %s235 = scalar_lea.vmem %s1, %s234
        %s236 = sadd.s32 %s20, 1
      $region28: #{_residual_block_impl.4} parent=19 // pred_fallthru
        _
      // Predicated region
      $region29: #{_residual_block_impl.4} parent=19 // pred_check
        %p237 = pneg %p106
      $region30: #{_residual_block_impl.4} parent=19 // pred_check_branch
        %239 = sbr.rel (%p237) target = $region32
      $region31: #{_residual_block_impl.4} parent=19 // pred_region
        %s240 = sadd.s32 %s20, 2
        %p241 = scmp.lt.s32.totalorder %s19, 1
        %s242 = scalar_select %p241, %s19, 1
        %p243 = scmp.lt.s32.totalorder %s240, 9
        %s244 = scalar_select %p243, %s240, 9
        %s245 = smul.addr %s244, 20
        %s246 = smul.addr %s242, 200
        %s247 = sadd.s32 %s245, %s246
        %s248 = smul.addr %s247, 8
        %s249 = scalar_lea.vmem %s2, %s248
        %s250 = sadd.s32 %s20, 2
      $region32: #{_residual_block_impl.4} parent=19 // pred_fallthru
        _
    $region20: #{_residual_block_impl.4} parent=5 // pred_fallthru
      _
    %p251 = scmp.le.s32.totalorder 1, %s12
    %p252 = scmp.lt.s32.totalorder %s12, 17
    %p253 = pnand %p251, %p252
    %p254 = pneg %p253
    // Predicated region
    $region33: #{_residual_block_impl.4} parent=5 // pred_check
      _
    $region34: #{_residual_block_impl.4} parent=5 // pred_check_branch
      %256 = sbr.rel (%p253) target = $region36
    $region35: #{_residual_block_impl.4} parent=5 // pred_region
      %s257 = ssub.s32 %s12, 1
      %p258 = scmp.lt.s32.totalorder %s21, 1
      %s259 = scalar_select %p258, %s21, 1
      %p260 = scmp.lt.s32.totalorder %s22, 9
      %s261 = scalar_select %p260, %s22, 9
      %s262 = smul.addr %s261, 20
      %s263 = smul.addr %s259, 200
      %s264 = sadd.s32 %s262, %s263
      %s265 = smul.addr %s264, 8
      %s266 = scalar_lea.vmem %s0, %s265
      %p267 = pneg %p52
      %p268 = pneg %p49
      %s269 = sadd.s32 %s22, 1
      %p270 = scmp.lt.s32.totalorder %s21, 1
      %s271 = scalar_select %p270, %s21, 1
      %p272 = scmp.lt.s32.totalorder %s269, 9
      %s273 = scalar_select %p272, %s269, 9
      %s274 = smul.addr %s273, 20
      %s275 = smul.addr %s271, 200
      %s276 = sadd.s32 %s274, %s275
      %s277 = smul.addr %s276, 8
      %s278 = scalar_lea.vmem %s1, %s277
      %p279 = pneg %p82
      %p280 = pneg %p79
      %s281 = sadd.s32 %s22, 2
      %p282 = scmp.lt.s32.totalorder %s21, 1
      %s283 = scalar_select %p282, %s21, 1
      %p284 = scmp.lt.s32.totalorder %s281, 9
      %s285 = scalar_select %p284, %s281, 9
      %s286 = smul.addr %s285, 20
      %s287 = smul.addr %s283, 200
      %s288 = sadd.s32 %s286, %s287
      %s289 = smul.addr %s288, 8
      %s290 = scalar_lea.vmem %s2, %s289
      %p291 = pneg %p112
      %p292 = pneg %p109
      %p293 = pneg %p133
      %p294 = pneg %p130
      %p295 = pneg %p161
      %p296 = pneg %p158
      %p297 = scmp.lt.s32.totalorder %s21, 1
      %s298 = scalar_select %p297, %s21, 1
      %p299 = scmp.lt.s32.totalorder %s22, 7
      %s300 = scalar_select %p299, %s22, 7
      %s301 = smul.addr %s300, 8
      %s302 = smul.addr %s298, 64
      %s303 = sadd.s32 %s301, %s302
      %s304 = smul.addr %s303, 8
      %s305 = scalar_lea.vmem %s4, %s304
      %p306 = pneg %p189
      %p307 = pneg %p186
      %p308 = scmp.lt.s32.totalorder %s21, 1
      %s309 = scalar_select %p308, %s21, 1
      %p310 = scmp.lt.s32.totalorder %s22, 7
      %s311 = scalar_select %p310, %s22, 7
      %s312 = smul.addr %s309, 8
      %s313 = sadd.s32 %s311, %s312
      %s314 = smul.addr %s313, 2
      %s315 = scalar_lea.vmem %s5, %s314
      %p316 = scmp.lt.s32.totalorder %s21, 1
      %s317 = scalar_select %p316, %s21, 1
      %p318 = scmp.lt.s32.totalorder %s22, 9
      %s319 = scalar_select %p318, %s22, 9
      %s320 = smul.addr %s319, 20
      %s321 = smul.addr %s317, 200
      %s322 = sadd.s32 %s320, %s321
      %s323 = smul.addr %s322, 8
      %s324 = scalar_lea.vmem %s0, %s323
      %s325 = sadd.s32 %s22, 1
      %p326 = scmp.lt.s32.totalorder %s21, 1
      %s327 = scalar_select %p326, %s21, 1
      %p328 = scmp.lt.s32.totalorder %s325, 9
      %s329 = scalar_select %p328, %s325, 9
      %s330 = smul.addr %s329, 20
      %s331 = smul.addr %s327, 200
      %s332 = sadd.s32 %s330, %s331
      %s333 = smul.addr %s332, 8
      %s334 = scalar_lea.vmem %s1, %s333
      %s335 = sadd.s32 %s22, 1
      %s336 = sadd.s32 %s22, 2
      %p337 = scmp.lt.s32.totalorder %s21, 1
      %s338 = scalar_select %p337, %s21, 1
      %p339 = scmp.lt.s32.totalorder %s336, 9
      %s340 = scalar_select %p339, %s336, 9
      %s341 = smul.addr %s340, 20
      %s342 = smul.addr %s338, 200
      %s343 = sadd.s32 %s341, %s342
      %s344 = smul.addr %s343, 8
      %s345 = scalar_lea.vmem %s2, %s344
      %s346 = sadd.s32 %s22, 2
      %p347 = scmp.lt.s32.totalorder %s21, 1
      %s348 = scalar_select %p347, %s21, 1
      %p349 = scmp.lt.s32.totalorder %s22, 7
      %s350 = scalar_select %p349, %s22, 7
      %s351 = smul.addr %s350, 8
      %s352 = smul.addr %s348, 64
      %s353 = sadd.s32 %s351, %s352
      %s354 = smul.addr %s353, 8
      %s355 = scalar_lea.vmem %s4, %s354
      %p356 = scmp.lt.s32.totalorder %s21, 1
      %s357 = scalar_select %p356, %s21, 1
      %p358 = scmp.lt.s32.totalorder %s22, 7
      %s359 = scalar_select %p358, %s22, 7
      %s360 = smul.addr %s357, 8
      %s361 = sadd.s32 %s359, %s360
      %s362 = smul.addr %s361, 2
      %s363 = scalar_lea.vmem %s5, %s362
      %v364 = vld [vmem:[%s324] sm:$0xff]
      %v365 = vld [vmem:[%s324 + $0x8] sm:$0x3]
      %v366 = vld [vmem:[%s324 + $0x10] sm:$0xff]
      %v367 = vld [vmem:[%s324 + $0x18] sm:$0x3]
      %v368 = vld [vmem:[%s324 + $0x20] sm:$0xff]
      %v369 = vld [vmem:[%s324 + $0x28] sm:$0x3]
      %v370 = vld [vmem:[%s324 + $0x30] sm:$0xff]
      %v371 = vld [vmem:[%s324 + $0x38] sm:$0x3]
      %v372 = vld [vmem:[%s324 + $0x40] sm:$0xff]
      %v373 = vld [vmem:[%s324 + $0x48] sm:$0x3]
      %v374 = vld [vmem:[%s324 + $0x50] sm:$0xff]
      %v375 = vld [vmem:[%s324 + $0x58] sm:$0x3]
      %v376 = vld [vmem:[%s324 + $0x60] sm:$0xff]
      %v377 = vld [vmem:[%s324 + $0x68] sm:$0x3]
      %v378 = vld [vmem:[%s324 + $0x70] sm:$0xff]
      %v379 = vld [vmem:[%s324 + $0x78] sm:$0x3]
      %v380 = vld [vmem:[%s324 + $0x80] sm:$0xff]
      %v381 = vld [vmem:[%s324 + $0x88] sm:$0x3]
      %v382 = vld [vmem:[%s324 + $0x90] sm:$0xff]
      %v383 = vld [vmem:[%s324 + $0x98] sm:$0x3]
      %v384 = vld [vmem:[%s3] sm:$0xf]
      %vm401 = vcmask 1046528
      %v402 = vrot.slane %v364, 1
      %v403 = vrot.slane %v365, 1
      %v404 = vsel %vm401, %v402, %v403
      %v405 = vrot.slane %v366, 1
      %v406 = vrot.slane %v367, 1
      %v407 = vsel %vm401, %v405, %v406
      %v408 = vrot.slane %v368, 1
      %v409 = vrot.slane %v369, 1
      %v410 = vsel %vm401, %v408, %v409
      %v411 = vrot.slane %v370, 1
      %v412 = vrot.slane %v371, 1
      %v413 = vsel %vm401, %v411, %v412
      %v414 = vrot.slane %v372, 1
      %v415 = vrot.slane %v373, 1
      %v416 = vsel %vm401, %v414, %v415
      %v417 = vrot.slane %v374, 1
      %v418 = vrot.slane %v375, 1
      %v419 = vsel %vm401, %v417, %v418
      %v420 = vrot.slane %v376, 1
      %v421 = vrot.slane %v377, 1
      %v422 = vsel %vm401, %v420, %v421
      %v423 = vrot.slane %v378, 1
      %v424 = vrot.slane %v379, 1
      %v425 = vsel %vm401, %v423, %v424
      %s426 = scalar_lea.vmem %s3, 4
      %v427 = vld [vmem:[%s426] sm:$0xf]
      %vm428 = vcmask 31744
      %v429 = vsel %vm428, %v404, 0
      %v431 = vsel %vm428, %v407, 0
      %v433 = vsel %vm428, %v410, 0
      %v435 = vsel %vm428, %v413, 0
      %v437 = vsel %vm428, %v416, 0
      %v439 = vsel %vm428, %v419, 0
      %v441 = vsel %vm428, %v422, 0
      %v443 = vsel %vm428, %v425, 0
      %vm445 = vcmask 1043456
      %v447 = vsel %vm445, %v427, 0
      %449 = vmatprep.subr.mxu0 0.0
      %450 = vmatpush1.msra.mxu0 %v447
      %451 = vmatprep.subr.mxu0 0.0
      %452 = vmatpush1.msra.mxu0 0.0
      %453 = vmatprep.subr.mxu0 0.0
      %454 = vmatpush1.msra.mxu0 0.0
      %455 = vmatprep.subr.mxu0 0.0
      %456 = vmatpush1.msra.mxu0 0.0
      %457 = vmatprep.subr.mxu0 0.0
      %458 = vmatpush1.msra.mxu0 0.0
      %459 = vmatprep.subr.mxu0 0.0
      %460 = vmatpush1.msra.mxu0 0.0
      %461 = vmatprep.subr.mxu0 0.0
      %462 = vmatpush1.msra.mxu0 0.0
      %463 = vmatprep.subr.mxu0 0.0
      %464 = vmatpush1.msra.mxu0 0.0
      %465 = vmatprep.subr.mxu0 0.0
      %466 = vmatpush1.msra.mxu0 0.0
      %467 = vmatprep.subr.mxu0 0.0
      %468 = vmatpush1.msra.mxu0 0.0
      %469 = vmatprep.subr.mxu0 0.0
      %470 = vmatpush1.msra.mxu0 0.0
      %471 = vmatprep.subr.mxu0 0.0
      %472 = vmatpush1.msra.mxu0 0.0
      %473 = vmatprep.subr.mxu0 0.0
      %474 = vmatpush1.msra.mxu0 0.0
      %475 = vmatprep.subr.mxu0 0.0
      %476 = vmatpush1.msra.mxu0 0.0
      %477 = vmatprep.subr.mxu0 0.0
      %478 = vmatpush1.msra.mxu0 0.0
      %479 = vmatprep.subr.mxu0 0.0
      %480 = vmatpush1.msra.mxu0 0.0
      %481 = vmatprep.subr.mxu0 0.0
      %482 = vmatpush1.msra.mxu0 0.0
      %483 = vmatprep.subr.mxu0 0.0
      %484 = vmatpush1.msra.mxu0 0.0
      %485 = vmatprep.subr.mxu0 0.0
      %486 = vmatpush1.msra.mxu0 0.0
      %487 = vmatprep.subr.mxu0 0.0
      %488 = vmatpush1.msra.mxu0 0.0
      %489 = vmatprep.subr.mxu0 0.0
      %490 = vmatpush1.msra.mxu0 0.0
      %491 = vmatprep.subr.mxu0 0.0
      %492 = vmatpush1.msra.mxu0 0.0
      %493 = vmatprep.subr.mxu0 0.0
      %494 = vmatpush1.msra.mxu0 0.0
      %495 = vmatprep.subr.mxu0 0.0
      %496 = vmatpush1.msra.mxu0 0.0
      %497 = vmatprep.subr.mxu0 0.0
      %498 = vmatpush1.msra.mxu0 0.0
      %499 = vmatprep.subr.mxu0 0.0
      %500 = vmatpush1.msra.mxu0 0.0
      %501 = vmatprep.subr.mxu0 0.0
      %502 = vmatpush1.msra.mxu0 0.0
      %503 = vmatprep.subr.mxu0 0.0
      %504 = vmatpush1.msra.mxu0 0.0
      %505 = vmatprep.subr.mxu0 0.0
      %506 = vmatpush1.msra.mxu0 0.0
      %507 = vmatprep.subr.mxu0 0.0
      %508 = vmatpush1.msra.mxu0 0.0
      %509 = vmatprep.subr.mxu0 0.0
      %510 = vmatpush1.msra.mxu0 0.0
      %511 = vmatprep.subr.mxu0 0.0
      %512 = vmatpush1.msra.mxu0 0.0
      %513 = vmatprep.mubr.f32.mxu0 0.0
      %514 = vmatmul.mubr.f32.gmra.mrb[0].mxu0 %v429
      %v515 = vpop.f32.mrb[0].mxu0
      %v516 = vadd.f32 0.0, %v515
      %v517 = vpop.f32.mrb[0].mxu0
      %518 = vmatprep.mubr.f32.mxu0 0.0
      %519 = vmatmul.mubr.f32.gmra.mrb[0].mxu0 %v431
      %v520 = vpop.f32.mrb[0].mxu0
      %v521 = vadd.f32 0.0, %v520
      %v522 = vpop.f32.mrb[0].mxu0
      %523 = vmatprep.mubr.f32.mxu0 0.0
      %524 = vmatmul.mubr.f32.gmra.mrb[0].mxu0 %v433
      %v525 = vpop.f32.mrb[0].mxu0
      %v526 = vadd.f32 0.0, %v525
      %v527 = vpop.f32.mrb[0].mxu0
      %528 = vmatprep.mubr.f32.mxu0 0.0
      %529 = vmatmul.mubr.f32.gmra.mrb[0].mxu0 %v435
      %v530 = vpop.f32.mrb[0].mxu0
      %v531 = vadd.f32 0.0, %v530
      %v532 = vpop.f32.mrb[0].mxu0
      %533 = vmatprep.mubr.f32.mxu0 0.0
      %534 = vmatmul.mubr.f32.gmra.mrb[0].mxu0 %v437
      %v535 = vpop.f32.mrb[0].mxu0
      %v536 = vadd.f32 0.0, %v535
      %v537 = vpop.f32.mrb[0].mxu0
      %538 = vmatprep.mubr.f32.mxu0 0.0
      %539 = vmatmul.mubr.f32.gmra.mrb[0].mxu0 %v439
      %v540 = vpop.f32.mrb[0].mxu0
      %v541 = vadd.f32 0.0, %v540
      %v542 = vpop.f32.mrb[0].mxu0
      %543 = vmatprep.mubr.f32.mxu0 0.0
      %544 = vmatmul.mubr.f32.gmra.mrb[0].mxu0 %v441
      %v545 = vpop.f32.mrb[0].mxu0
      %v546 = vadd.f32 0.0, %v545
      %v547 = vpop.f32.mrb[0].mxu0
      %548 = vmatprep.mubr.f32.mxu0 0.0
      %549 = vmatmul.mubr.f32.gmra.mrb[0].mxu0 %v443
      %v550 = vpop.f32.mrb[0].mxu0
      %v551 = vadd.f32 0.0, %v550
      %v552 = vpop.f32.mrb[0].mxu0
      %553 = vdwg.mxu0
      %v554 = vsel %vm428, %v364, 0
      %v556 = vsel %vm428, %v366, 0
      %v558 = vsel %vm428, %v368, 0
      %v560 = vsel %vm428, %v370, 0
      %v562 = vsel %vm428, %v372, 0
      %v564 = vsel %vm428, %v374, 0
      %v566 = vsel %vm428, %v376, 0
      %v568 = vsel %vm428, %v378, 0
      %v571 = vsel %vm445, %v384, 0
      %573 = vmatprep.subr.mxu0 0.0
      %574 = vmatpush1.msra.mxu0 %v571
      %575 = vmatprep.subr.mxu0 0.0
      %576 = vmatpush1.msra.mxu0 0.0
      %577 = vmatprep.subr.mxu0 0.0
      %578 = vmatpush1.msra.mxu0 0.0
      %579 = vmatprep.subr.mxu0 0.0
      %580 = vmatpush1.msra.mxu0 0.0
      %581 = vmatprep.subr.mxu0 0.0
      %582 = vmatpush1.msra.mxu0 0.0
      %583 = vmatprep.subr.mxu0 0.0
      %584 = vmatpush1.msra.mxu0 0.0
      %585 = vmatprep.subr.mxu0 0.0
      %586 = vmatpush1.msra.mxu0 0.0
      %587 = vmatprep.subr.mxu0 0.0
      %588 = vmatpush1.msra.mxu0 0.0
      %589 = vmatprep.subr.mxu0 0.0
      %590 = vmatpush1.msra.mxu0 0.0
      %591 = vmatprep.subr.mxu0 0.0
      %592 = vmatpush1.msra.mxu0 0.0
      %593 = vmatprep.subr.mxu0 0.0
      %594 = vmatpush1.msra.mxu0 0.0
      %595 = vmatprep.subr.mxu0 0.0
      %596 = vmatpush1.msra.mxu0 0.0
      %597 = vmatprep.subr.mxu0 0.0
      %598 = vmatpush1.msra.mxu0 0.0
      %599 = vmatprep.subr.mxu0 0.0
      %600 = vmatpush1.msra.mxu0 0.0
      %601 = vmatprep.subr.mxu0 0.0
      %602 = vmatpush1.msra.mxu0 0.0
      %603 = vmatprep.subr.mxu0 0.0
      %604 = vmatpush1.msra.mxu0 0.0
      %605 = vmatprep.subr.mxu0 0.0
      %606 = vmatpush1.msra.mxu0 0.0
      %607 = vmatprep.subr.mxu0 0.0
      %608 = vmatpush1.msra.mxu0 0.0
      %609 = vmatprep.subr.mxu0 0.0
      %610 = vmatpush1.msra.mxu0 0.0
      %611 = vmatprep.subr.mxu0 0.0
      %612 = vmatpush1.msra.mxu0 0.0
      %613 = vmatprep.subr.mxu0 0.0
      %614 = vmatpush1.msra.mxu0 0.0
      %615 = vmatprep.subr.mxu0 0.0
      %616 = vmatpush1.msra.mxu0 0.0
      %617 = vmatprep.subr.mxu0 0.0
      %618 = vmatpush1.msra.mxu0 0.0
      %619 = vmatprep.subr.mxu0 0.0
      %620 = vmatpush1.msra.mxu0 0.0
      %621 = vmatprep.subr.mxu0 0.0
      %622 = vmatpush1.msra.mxu0 0.0
      %623 = vmatprep.subr.mxu0 0.0
      %624 = vmatpush1.msra.mxu0 0.0
      %625 = vmatprep.subr.mxu0 0.0
      %626 = vmatpush1.msra.mxu0 0.0
      %627 = vmatprep.subr.mxu0 0.0
      %628 = vmatpush1.msra.mxu0 0.0
      %629 = vmatprep.subr.mxu0 0.0
      %630 = vmatpush1.msra.mxu0 0.0
      %631 = vmatprep.subr.mxu0 0.0
      %632 = vmatpush1.msra.mxu0 0.0
      %633 = vmatprep.subr.mxu0 0.0
      %634 = vmatpush1.msra.mxu0 0.0
      %635 = vmatprep.subr.mxu0 0.0
      %636 = vmatpush1.msra.mxu0 0.0
      %637 = vmatprep.mubr.f32.mxu0 0.0
      %638 = vmatmul.mubr.f32.gmra.mrb[0].mxu0 %v554
      %v639 = vpop.f32.mrb[0].mxu0
      %v640 = vadd.f32 %v516, %v639
      %v641 = vpop.f32.mrb[0].mxu0
      %642 = vmatprep.mubr.f32.mxu0 0.0
      %643 = vmatmul.mubr.f32.gmra.mrb[0].mxu0 %v556
      %v644 = vpop.f32.mrb[0].mxu0
      %v645 = vadd.f32 %v521, %v644
      %v646 = vpop.f32.mrb[0].mxu0
      %647 = vmatprep.mubr.f32.mxu0 0.0
      %648 = vmatmul.mubr.f32.gmra.mrb[0].mxu0 %v558
      %v649 = vpop.f32.mrb[0].mxu0
      %v650 = vadd.f32 %v526, %v649
      %v651 = vpop.f32.mrb[0].mxu0
      %652 = vmatprep.mubr.f32.mxu0 0.0
      %653 = vmatmul.mubr.f32.gmra.mrb[0].mxu0 %v560
      %v654 = vpop.f32.mrb[0].mxu0
      %v655 = vadd.f32 %v531, %v654
      %v656 = vpop.f32.mrb[0].mxu0
      %657 = vmatprep.mubr.f32.mxu0 0.0
      %658 = vmatmul.mubr.f32.gmra.mrb[0].mxu0 %v562
      %v659 = vpop.f32.mrb[0].mxu0
      %v660 = vadd.f32 %v536, %v659
      %v661 = vpop.f32.mrb[0].mxu0
      %662 = vmatprep.mubr.f32.mxu0 0.0
      %663 = vmatmul.mubr.f32.gmra.mrb[0].mxu0 %v564
      %v664 = vpop.f32.mrb[0].mxu0
      %v665 = vadd.f32 %v541, %v664
      %v666 = vpop.f32.mrb[0].mxu0
      %667 = vmatprep.mubr.f32.mxu0 0.0
      %668 = vmatmul.mubr.f32.gmra.mrb[0].mxu0 %v566
      %v669 = vpop.f32.mrb[0].mxu0
      %v670 = vadd.f32 %v546, %v669
      %v671 = vpop.f32.mrb[0].mxu0
      %672 = vmatprep.mubr.f32.mxu0 0.0
      %673 = vmatmul.mubr.f32.gmra.mrb[0].mxu0 %v568
      %v674 = vpop.f32.mrb[0].mxu0
      %v675 = vadd.f32 %v551, %v674
      %v676 = vpop.f32.mrb[0].mxu0
      %677 = vdwg.mxu0
      %vm678 = vcmask 1045504
      %v679 = vrot.slane %v364, 2
      %v680 = vrot.slane %v365, 2
      %v681 = vsel %vm678, %v679, %v680
      %v682 = vrot.slane %v366, 2
      %v683 = vrot.slane %v367, 2
      %v684 = vsel %vm678, %v682, %v683
      %v685 = vrot.slane %v368, 2
      %v686 = vrot.slane %v369, 2
      %v687 = vsel %vm678, %v685, %v686
      %v688 = vrot.slane %v370, 2
      %v689 = vrot.slane %v371, 2
      %v690 = vsel %vm678, %v688, %v689
      %v691 = vrot.slane %v372, 2
      %v692 = vrot.slane %v373, 2
      %v693 = vsel %vm678, %v691, %v692
      %v694 = vrot.slane %v374, 2
      %v695 = vrot.slane %v375, 2
      %v696 = vsel %vm678, %v694, %v695
      %v697 = vrot.slane %v376, 2
      %v698 = vrot.slane %v377, 2
      %v699 = vsel %vm678, %v697, %v698
      %v700 = vrot.slane %v378, 2
      %v701 = vrot.slane %v379, 2
      %v702 = vsel %vm678, %v700, %v701
      %s703 = scalar_lea.vmem %s3, 8
      %v704 = vld [vmem:[%s703] sm:$0xf]
      %v705 = vsel %vm428, %v681, 0
      %v707 = vsel %vm428, %v684, 0
      %v709 = vsel %vm428, %v687, 0
      %v711 = vsel %vm428, %v690, 0
      %v713 = vsel %vm428, %v693, 0
      %v715 = vsel %vm428, %v696, 0
      %v717 = vsel %vm428, %v699, 0
      %v719 = vsel %vm428, %v702, 0
      %v722 = vsel %vm445, %v704, 0
      %724 = vmatprep.subr.mxu0 0.0
      %725 = vmatpush1.msra.mxu0 %v722
      %726 = vmatprep.subr.mxu0 0.0
      %727 = vmatpush1.msra.mxu0 0.0
      %728 = vmatprep.subr.mxu0 0.0
      %729 = vmatpush1.msra.mxu0 0.0
      %730 = vmatprep.subr.mxu0 0.0
      %731 = vmatpush1.msra.mxu0 0.0
      %732 = vmatprep.subr.mxu0 0.0
      %733 = vmatpush1.msra.mxu0 0.0
      %734 = vmatprep.subr.mxu0 0.0
      %735 = vmatpush1.msra.mxu0 0.0
      %736 = vmatprep.subr.mxu0 0.0
      %737 = vmatpush1.msra.mxu0 0.0
      %738 = vmatprep.subr.mxu0 0.0
      %739 = vmatpush1.msra.mxu0 0.0
      %740 = vmatprep.subr.mxu0 0.0
      %741 = vmatpush1.msra.mxu0 0.0
      %742 = vmatprep.subr.mxu0 0.0
      %743 = vmatpush1.msra.mxu0 0.0
      %744 = vmatprep.subr.mxu0 0.0
      %745 = vmatpush1.msra.mxu0 0.0
      %746 = vmatprep.subr.mxu0 0.0
      %747 = vmatpush1.msra.mxu0 0.0
      %748 = vmatprep.subr.mxu0 0.0
      %749 = vmatpush1.msra.mxu0 0.0
      %750 = vmatprep.subr.mxu0 0.0
      %751 = vmatpush1.msra.mxu0 0.0
      %752 = vmatprep.subr.mxu0 0.0
      %753 = vmatpush1.msra.mxu0 0.0
      %754 = vmatprep.subr.mxu0 0.0
      %755 = vmatpush1.msra.mxu0 0.0
      %756 = vmatprep.subr.mxu0 0.0
      %757 = vmatpush1.msra.mxu0 0.0
      %758 = vmatprep.subr.mxu0 0.0
      %759 = vmatpush1.msra.mxu0 0.0
      %760 = vmatprep.subr.mxu0 0.0
      %761 = vmatpush1.msra.mxu0 0.0
      %762 = vmatprep.subr.mxu0 0.0
      %763 = vmatpush1.msra.mxu0 0.0
      %764 = vmatprep.subr.mxu0 0.0
      %765 = vmatpush1.msra.mxu0 0.0
      %766 = vmatprep.subr.mxu0 0.0
      %767 = vmatpush1.msra.mxu0 0.0
      %768 = vmatprep.subr.mxu0 0.0
      %769 = vmatpush1.msra.mxu0 0.0
      %770 = vmatprep.subr.mxu0 0.0
      %771 = vmatpush1.msra.mxu0 0.0
      %772 = vmatprep.subr.mxu0 0.0
      %773 = vmatpush1.msra.mxu0 0.0
      %774 = vmatprep.subr.mxu0 0.0
      %775 = vmatpush1.msra.mxu0 0.0
      %776 = vmatprep.subr.mxu0 0.0
      %777 = vmatpush1.msra.mxu0 0.0
      %778 = vmatprep.subr.mxu0 0.0
      %779 = vmatpush1.msra.mxu0 0.0
      %780 = vmatprep.subr.mxu0 0.0
      %781 = vmatpush1.msra.mxu0 0.0
      %782 = vmatprep.subr.mxu0 0.0
      %783 = vmatpush1.msra.mxu0 0.0
      %784 = vmatprep.subr.mxu0 0.0
      %785 = vmatpush1.msra.mxu0 0.0
      %786 = vmatprep.subr.mxu0 0.0
      %787 = vmatpush1.msra.mxu0 0.0
      %788 = vmatprep.mubr.f32.mxu0 0.0
      %789 = vmatmul.mubr.f32.gmra.mrb[0].mxu0 %v705
      %v790 = vpop.f32.mrb[0].mxu0
      %v791 = vadd.f32 0.0, %v790
      %v792 = vpop.f32.mrb[0].mxu0
      %793 = vmatprep.mubr.f32.mxu0 0.0
      %794 = vmatmul.mubr.f32.gmra.mrb[0].mxu0 %v707
      %v795 = vpop.f32.mrb[0].mxu0
      %v796 = vadd.f32 0.0, %v795
      %v797 = vpop.f32.mrb[0].mxu0
      %798 = vmatprep.mubr.f32.mxu0 0.0
      %799 = vmatmul.mubr.f32.gmra.mrb[0].mxu0 %v709
      %v800 = vpop.f32.mrb[0].mxu0
      %v801 = vadd.f32 0.0, %v800
      %v802 = vpop.f32.mrb[0].mxu0
      %803 = vmatprep.mubr.f32.mxu0 0.0
      %804 = vmatmul.mubr.f32.gmra.mrb[0].mxu0 %v711
      %v805 = vpop.f32.mrb[0].mxu0
      %v806 = vadd.f32 0.0, %v805
      %v807 = vpop.f32.mrb[0].mxu0
      %808 = vmatprep.mubr.f32.mxu0 0.0
      %809 = vmatmul.mubr.f32.gmra.mrb[0].mxu0 %v713
      %v810 = vpop.f32.mrb[0].mxu0
      %v811 = vadd.f32 0.0, %v810
      %v812 = vpop.f32.mrb[0].mxu0
      %813 = vmatprep.mubr.f32.mxu0 0.0
      %814 = vmatmul.mubr.f32.gmra.mrb[0].mxu0 %v715
      %v815 = vpop.f32.mrb[0].mxu0
      %v816 = vadd.f32 0.0, %v815
      %v817 = vpop.f32.mrb[0].mxu0
      %818 = vmatprep.mubr.f32.mxu0 0.0
      %819 = vmatmul.mubr.f32.gmra.mrb[0].mxu0 %v717
      %v820 = vpop.f32.mrb[0].mxu0
      %v821 = vadd.f32 0.0, %v820
      %v822 = vpop.f32.mrb[0].mxu0
      %823 = vmatprep.mubr.f32.mxu0 0.0
      %824 = vmatmul.mubr.f32.gmra.mrb[0].mxu0 %v719
      %v825 = vpop.f32.mrb[0].mxu0
      %v826 = vadd.f32 0.0, %v825
      %v827 = vpop.f32.mrb[0].mxu0
      %828 = vdwg.mxu0
      %v829 = vadd.f32 %v640, %v791
      %v830 = vadd.f32 %v645, %v796
      %v831 = vadd.f32 %v650, %v801
      %v832 = vadd.f32 %v655, %v806
      %v833 = vadd.f32 %v660, %v811
      %v834 = vadd.f32 %v665, %v816
      %v835 = vadd.f32 %v670, %v821
      %v836 = vadd.f32 %v675, %v826
      %s837 = scalar_lea.vmem %s3, 12
      %v838 = vld [vmem:[%s837] sm:$0xf]
      %v840 = vsel %vm428, %v380, 0
      %v843 = vsel %vm445, %v838, 0
      %845 = vmatprep.subr.mxu0 0.0
      %846 = vmatpush1.msra.mxu0 %v843
      %847 = vmatprep.subr.mxu0 0.0
      %848 = vmatpush1.msra.mxu0 0.0
      %849 = vmatprep.subr.mxu0 0.0
      %850 = vmatpush1.msra.mxu0 0.0
      %851 = vmatprep.subr.mxu0 0.0
      %852 = vmatpush1.msra.mxu0 0.0
      %853 = vmatprep.subr.mxu0 0.0
      %854 = vmatpush1.msra.mxu0 0.0
      %855 = vmatprep.subr.mxu0 0.0
      %856 = vmatpush1.msra.mxu0 0.0
      %857 = vmatprep.subr.mxu0 0.0
      %858 = vmatpush1.msra.mxu0 0.0
      %859 = vmatprep.subr.mxu0 0.0
      %860 = vmatpush1.msra.mxu0 0.0
      %861 = vmatprep.subr.mxu0 0.0
      %862 = vmatpush1.msra.mxu0 0.0
      %863 = vmatprep.subr.mxu0 0.0
      %864 = vmatpush1.msra.mxu0 0.0
      %865 = vmatprep.subr.mxu0 0.0
      %866 = vmatpush1.msra.mxu0 0.0
      %867 = vmatprep.subr.mxu0 0.0
      %868 = vmatpush1.msra.mxu0 0.0
      %869 = vmatprep.subr.mxu0 0.0
      %870 = vmatpush1.msra.mxu0 0.0
      %871 = vmatprep.subr.mxu0 0.0
      %872 = vmatpush1.msra.mxu0 0.0
      %873 = vmatprep.subr.mxu0 0.0
      %874 = vmatpush1.msra.mxu0 0.0
      %875 = vmatprep.subr.mxu0 0.0
      %876 = vmatpush1.msra.mxu0 0.0
      %877 = vmatprep.subr.mxu0 0.0
      %878 = vmatpush1.msra.mxu0 0.0
      %879 = vmatprep.subr.mxu0 0.0
      %880 = vmatpush1.msra.mxu0 0.0
      %881 = vmatprep.subr.mxu0 0.0
      %882 = vmatpush1.msra.mxu0 0.0
      %883 = vmatprep.subr.mxu0 0.0
      %884 = vmatpush1.msra.mxu0 0.0
      %885 = vmatprep.subr.mxu0 0.0
      %886 = vmatpush1.msra.mxu0 0.0
      %887 = vmatprep.subr.mxu0 0.0
      %888 = vmatpush1.msra.mxu0 0.0
      %889 = vmatprep.subr.mxu0 0.0
      %890 = vmatpush1.msra.mxu0 0.0
      %891 = vmatprep.subr.mxu0 0.0
      %892 = vmatpush1.msra.mxu0 0.0
      %893 = vmatprep.subr.mxu0 0.0
      %894 = vmatpush1.msra.mxu0 0.0
      %895 = vmatprep.subr.mxu0 0.0
      %896 = vmatpush1.msra.mxu0 0.0
      %897 = vmatprep.subr.mxu0 0.0
      %898 = vmatpush1.msra.mxu0 0.0
      %899 = vmatprep.subr.mxu0 0.0
      %900 = vmatpush1.msra.mxu0 0.0
      %901 = vmatprep.subr.mxu0 0.0
      %902 = vmatpush1.msra.mxu0 0.0
      %903 = vmatprep.subr.mxu0 0.0
      %904 = vmatpush1.msra.mxu0 0.0
      %905 = vmatprep.subr.mxu0 0.0
      %906 = vmatpush1.msra.mxu0 0.0
      %907 = vmatprep.subr.mxu0 0.0
      %908 = vmatpush1.msra.mxu0 0.0
      %909 = vmatprep.mubr.f32.mxu0 0.0
      %910 = vmatmul.mubr.f32.gmra.mrb[0].mxu0 %v556
      %v911 = vpop.f32.mrb[0].mxu0
      %v912 = vadd.f32 0.0, %v911
      %v913 = vpop.f32.mrb[0].mxu0
      %914 = vmatprep.mubr.f32.mxu0 0.0
      %915 = vmatmul.mubr.f32.gmra.mrb[0].mxu0 %v558
      %v916 = vpop.f32.mrb[0].mxu0
      %v917 = vadd.f32 0.0, %v916
      %v918 = vpop.f32.mrb[0].mxu0
      %919 = vmatprep.mubr.f32.mxu0 0.0
      %920 = vmatmul.mubr.f32.gmra.mrb[0].mxu0 %v560
      %v921 = vpop.f32.mrb[0].mxu0
      %v922 = vadd.f32 0.0, %v921
      %v923 = vpop.f32.mrb[0].mxu0
      %924 = vmatprep.mubr.f32.mxu0 0.0
      %925 = vmatmul.mubr.f32.gmra.mrb[0].mxu0 %v562
      %v926 = vpop.f32.mrb[0].mxu0
      %v927 = vadd.f32 0.0, %v926
      %v928 = vpop.f32.mrb[0].mxu0
      %929 = vmatprep.mubr.f32.mxu0 0.0
      %930 = vmatmul.mubr.f32.gmra.mrb[0].mxu0 %v564
      %v931 = vpop.f32.mrb[0].mxu0
      %v932 = vadd.f32 0.0, %v931
      %v933 = vpop.f32.mrb[0].mxu0
      %934 = vmatprep.mubr.f32.mxu0 0.0
      %935 = vmatmul.mubr.f32.gmra.mrb[0].mxu0 %v566
      %v936 = vpop.f32.mrb[0].mxu0
      %v937 = vadd.f32 0.0, %v936
      %v938 = vpop.f32.mrb[0].mxu0
      %939 = vmatprep.mubr.f32.mxu0 0.0
      %940 = vmatmul.mubr.f32.gmra.mrb[0].mxu0 %v568
      %v941 = vpop.f32.mrb[0].mxu0
      %v942 = vadd.f32 0.0, %v941
      %v943 = vpop.f32.mrb[0].mxu0
      %944 = vmatprep.mubr.f32.mxu0 0.0
      %945 = vmatmul.mubr.f32.gmra.mrb[0].mxu0 %v840
      %v946 = vpop.f32.mrb[0].mxu0
      %v947 = vadd.f32 0.0, %v946
      %v948 = vpop.f32.mrb[0].mxu0
      %949 = vdwg.mxu0
      %v950 = vadd.f32 %v829, %v912
      %v951 = vadd.f32 %v830, %v917
      %v952 = vadd.f32 %v831, %v922
      %v953 = vadd.f32 %v832, %v927
      %v954 = vadd.f32 %v833, %v932
      %v955 = vadd.f32 %v834, %v937
      %v956 = vadd.f32 %v835, %v942
      %v957 = vadd.f32 %v836, %v947
      %v959 = vrot.slane %v380, 1
      %v960 = vrot.slane %v381, 1
      %v961 = vsel %vm401, %v959, %v960
      %s962 = scalar_lea.vmem %s3, 16
      %v963 = vld [vmem:[%s962] sm:$0xf]
      %v964 = vsel %vm428, %v961, 0
      %v967 = vsel %vm445, %v963, 0
      %969 = vmatprep.subr.mxu0 0.0
      %970 = vmatpush1.msra.mxu0 %v967
      %971 = vmatprep.subr.mxu0 0.0
      %972 = vmatpush1.msra.mxu0 0.0
      %973 = vmatprep.subr.mxu0 0.0
      %974 = vmatpush1.msra.mxu0 0.0
      %975 = vmatprep.subr.mxu0 0.0
      %976 = vmatpush1.msra.mxu0 0.0
      %977 = vmatprep.subr.mxu0 0.0
      %978 = vmatpush1.msra.mxu0 0.0
      %979 = vmatprep.subr.mxu0 0.0
      %980 = vmatpush1.msra.mxu0 0.0
      %981 = vmatprep.subr.mxu0 0.0
      %982 = vmatpush1.msra.mxu0 0.0
      %983 = vmatprep.subr.mxu0 0.0
      %984 = vmatpush1.msra.mxu0 0.0
      %985 = vmatprep.subr.mxu0 0.0
      %986 = vmatpush1.msra.mxu0 0.0
      %987 = vmatprep.subr.mxu0 0.0
      %988 = vmatpush1.msra.mxu0 0.0
      %989 = vmatprep.subr.mxu0 0.0
      %990 = vmatpush1.msra.mxu0 0.0
      %991 = vmatprep.subr.mxu0 0.0
      %992 = vmatpush1.msra.mxu0 0.0
      %993 = vmatprep.subr.mxu0 0.0
      %994 = vmatpush1.msra.mxu0 0.0
      %995 = vmatprep.subr.mxu0 0.0
      %996 = vmatpush1.msra.mxu0 0.0
      %997 = vmatprep.subr.mxu0 0.0
      %998 = vmatpush1.msra.mxu0 0.0
      %999 = vmatprep.subr.mxu0 0.0
      %1000 = vmatpush1.msra.mxu0 0.0
      %1001 = vmatprep.subr.mxu0 0.0
      %1002 = vmatpush1.msra.mxu0 0.0
      %1003 = vmatprep.subr.mxu0 0.0
      %1004 = vmatpush1.msra.mxu0 0.0
      %1005 = vmatprep.subr.mxu0 0.0
      %1006 = vmatpush1.msra.mxu0 0.0
      %1007 = vmatprep.subr.mxu0 0.0
      %1008 = vmatpush1.msra.mxu0 0.0
      %1009 = vmatprep.subr.mxu0 0.0
      %1010 = vmatpush1.msra.mxu0 0.0
      %1011 = vmatprep.subr.mxu0 0.0
      %1012 = vmatpush1.msra.mxu0 0.0
      %1013 = vmatprep.subr.mxu0 0.0
      %1014 = vmatpush1.msra.mxu0 0.0
      %1015 = vmatprep.subr.mxu0 0.0
      %1016 = vmatpush1.msra.mxu0 0.0
      %1017 = vmatprep.subr.mxu0 0.0
      %1018 = vmatpush1.msra.mxu0 0.0
      %1019 = vmatprep.subr.mxu0 0.0
      %1020 = vmatpush1.msra.mxu0 0.0
      %1021 = vmatprep.subr.mxu0 0.0
      %1022 = vmatpush1.msra.mxu0 0.0
      %1023 = vmatprep.subr.mxu0 0.0
      %1024 = vmatpush1.msra.mxu0 0.0
      %1025 = vmatprep.subr.mxu0 0.0
      %1026 = vmatpush1.msra.mxu0 0.0
      %1027 = vmatprep.subr.mxu0 0.0
      %1028 = vmatpush1.msra.mxu0 0.0
      %1029 = vmatprep.subr.mxu0 0.0
      %1030 = vmatpush1.msra.mxu0 0.0
      %1031 = vmatprep.subr.mxu0 0.0
      %1032 = vmatpush1.msra.mxu0 0.0
      %1033 = vmatprep.mubr.f32.mxu0 0.0
      %1034 = vmatmul.mubr.f32.gmra.mrb[0].mxu0 %v431
      %v1035 = vpop.f32.mrb[0].mxu0
      %v1036 = vadd.f32 0.0, %v1035
      %v1037 = vpop.f32.mrb[0].mxu0
      %1038 = vmatprep.mubr.f32.mxu0 0.0
      %1039 = vmatmul.mubr.f32.gmra.mrb[0].mxu0 %v433
      %v1040 = vpop.f32.mrb[0].mxu0
      %v1041 = vadd.f32 0.0, %v1040
      %v1042 = vpop.f32.mrb[0].mxu0
      %1043 = vmatprep.mubr.f32.mxu0 0.0
      %1044 = vmatmul.mubr.f32.gmra.mrb[0].mxu0 %v435
      %v1045 = vpop.f32.mrb[0].mxu0
      %v1046 = vadd.f32 0.0, %v1045
      %v1047 = vpop.f32.mrb[0].mxu0
      %1048 = vmatprep.mubr.f32.mxu0 0.0
      %1049 = vmatmul.mubr.f32.gmra.mrb[0].mxu0 %v437
      %v1050 = vpop.f32.mrb[0].mxu0
      %v1051 = vadd.f32 0.0, %v1050
      %v1052 = vpop.f32.mrb[0].mxu0
      %1053 = vmatprep.mubr.f32.mxu0 0.0
      %1054 = vmatmul.mubr.f32.gmra.mrb[0].mxu0 %v439
      %v1055 = vpop.f32.mrb[0].mxu0
      %v1056 = vadd.f32 0.0, %v1055
      %v1057 = vpop.f32.mrb[0].mxu0
      %1058 = vmatprep.mubr.f32.mxu0 0.0
      %1059 = vmatmul.mubr.f32.gmra.mrb[0].mxu0 %v441
      %v1060 = vpop.f32.mrb[0].mxu0
      %v1061 = vadd.f32 0.0, %v1060
      %v1062 = vpop.f32.mrb[0].mxu0
      %1063 = vmatprep.mubr.f32.mxu0 0.0
      %1064 = vmatmul.mubr.f32.gmra.mrb[0].mxu0 %v443
      %v1065 = vpop.f32.mrb[0].mxu0
      %v1066 = vadd.f32 0.0, %v1065
      %v1067 = vpop.f32.mrb[0].mxu0
      %1068 = vmatprep.mubr.f32.mxu0 0.0
      %1069 = vmatmul.mubr.f32.gmra.mrb[0].mxu0 %v964
      %v1070 = vpop.f32.mrb[0].mxu0
      %v1071 = vadd.f32 0.0, %v1070
      %v1072 = vpop.f32.mrb[0].mxu0
      %1073 = vdwg.mxu0
      %v1074 = vadd.f32 %v950, %v1036
      %v1075 = vadd.f32 %v951, %v1041
      %v1076 = vadd.f32 %v952, %v1046
      %v1077 = vadd.f32 %v953, %v1051
      %v1078 = vadd.f32 %v954, %v1056
      %v1079 = vadd.f32 %v955, %v1061
      %v1080 = vadd.f32 %v956, %v1066
      %v1081 = vadd.f32 %v957, %v1071
      %v1082 = vrot.slane %v380, 2
      %v1083 = vrot.slane %v381, 2
      %v1084 = vsel %vm678, %v1082, %v1083
      %s1085 = scalar_lea.vmem %s3, 20
      %v1086 = vld [vmem:[%s1085] sm:$0xf]
      %v1087 = vsel %vm428, %v1084, 0
      %v1090 = vsel %vm445, %v1086, 0
      %1092 = vmatprep.subr.mxu0 0.0
      %1093 = vmatpush1.msra.mxu0 %v1090
      %1094 = vmatprep.subr.mxu0 0.0
      %1095 = vmatpush1.msra.mxu0 0.0
      %1096 = vmatprep.subr.mxu0 0.0
      %1097 = vmatpush1.msra.mxu0 0.0
      %1098 = vmatprep.subr.mxu0 0.0
      %1099 = vmatpush1.msra.mxu0 0.0
      %1100 = vmatprep.subr.mxu0 0.0
      %1101 = vmatpush1.msra.mxu0 0.0
      %1102 = vmatprep.subr.mxu0 0.0
      %1103 = vmatpush1.msra.mxu0 0.0
      %1104 = vmatprep.subr.mxu0 0.0
      %1105 = vmatpush1.msra.mxu0 0.0
      %1106 = vmatprep.subr.mxu0 0.0
      %1107 = vmatpush1.msra.mxu0 0.0
      %1108 = vmatprep.subr.mxu0 0.0
      %1109 = vmatpush1.msra.mxu0 0.0
      %1110 = vmatprep.subr.mxu0 0.0
      %1111 = vmatpush1.msra.mxu0 0.0
      %1112 = vmatprep.subr.mxu0 0.0
      %1113 = vmatpush1.msra.mxu0 0.0
      %1114 = vmatprep.subr.mxu0 0.0
      %1115 = vmatpush1.msra.mxu0 0.0
      %1116 = vmatprep.subr.mxu0 0.0
      %1117 = vmatpush1.msra.mxu0 0.0
      %1118 = vmatprep.subr.mxu0 0.0
      %1119 = vmatpush1.msra.mxu0 0.0
      %1120 = vmatprep.subr.mxu0 0.0
      %1121 = vmatpush1.msra.mxu0 0.0
      %1122 = vmatprep.subr.mxu0 0.0
      %1123 = vmatpush1.msra.mxu0 0.0
      %1124 = vmatprep.subr.mxu0 0.0
      %1125 = vmatpush1.msra.mxu0 0.0
      %1126 = vmatprep.subr.mxu0 0.0
      %1127 = vmatpush1.msra.mxu0 0.0
      %1128 = vmatprep.subr.mxu0 0.0
      %1129 = vmatpush1.msra.mxu0 0.0
      %1130 = vmatprep.subr.mxu0 0.0
      %1131 = vmatpush1.msra.mxu0 0.0
      %1132 = vmatprep.subr.mxu0 0.0
      %1133 = vmatpush1.msra.mxu0 0.0
      %1134 = vmatprep.subr.mxu0 0.0
      %1135 = vmatpush1.msra.mxu0 0.0
      %1136 = vmatprep.subr.mxu0 0.0
      %1137 = vmatpush1.msra.mxu0 0.0
      %1138 = vmatprep.subr.mxu0 0.0
      %1139 = vmatpush1.msra.mxu0 0.0
      %1140 = vmatprep.subr.mxu0 0.0
      %1141 = vmatpush1.msra.mxu0 0.0
      %1142 = vmatprep.subr.mxu0 0.0
      %1143 = vmatpush1.msra.mxu0 0.0
      %1144 = vmatprep.subr.mxu0 0.0
      %1145 = vmatpush1.msra.mxu0 0.0
      %1146 = vmatprep.subr.mxu0 0.0
      %1147 = vmatpush1.msra.mxu0 0.0
      %1148 = vmatprep.subr.mxu0 0.0
      %1149 = vmatpush1.msra.mxu0 0.0
      %1150 = vmatprep.subr.mxu0 0.0
      %1151 = vmatpush1.msra.mxu0 0.0
      %1152 = vmatprep.subr.mxu0 0.0
      %1153 = vmatpush1.msra.mxu0 0.0
      %1154 = vmatprep.subr.mxu0 0.0
      %1155 = vmatpush1.msra.mxu0 0.0
      %1156 = vmatprep.mubr.f32.mxu0 0.0
      %1157 = vmatmul.mubr.f32.gmra.mrb[0].mxu0 %v707
      %v1158 = vpop.f32.mrb[0].mxu0
      %v1159 = vadd.f32 0.0, %v1158
      %v1160 = vpop.f32.mrb[0].mxu0
      %1161 = vmatprep.mubr.f32.mxu0 0.0
      %1162 = vmatmul.mubr.f32.gmra.mrb[0].mxu0 %v709
      %v1163 = vpop.f32.mrb[0].mxu0
      %v1164 = vadd.f32 0.0, %v1163
      %v1165 = vpop.f32.mrb[0].mxu0
      %1166 = vmatprep.mubr.f32.mxu0 0.0
      %1167 = vmatmul.mubr.f32.gmra.mrb[0].mxu0 %v711
      %v1168 = vpop.f32.mrb[0].mxu0
      %v1169 = vadd.f32 0.0, %v1168
      %v1170 = vpop.f32.mrb[0].mxu0
      %1171 = vmatprep.mubr.f32.mxu0 0.0
      %1172 = vmatmul.mubr.f32.gmra.mrb[0].mxu0 %v713
      %v1173 = vpop.f32.mrb[0].mxu0
      %v1174 = vadd.f32 0.0, %v1173
      %v1175 = vpop.f32.mrb[0].mxu0
      %1176 = vmatprep.mubr.f32.mxu0 0.0
      %1177 = vmatmul.mubr.f32.gmra.mrb[0].mxu0 %v715
      %v1178 = vpop.f32.mrb[0].mxu0
      %v1179 = vadd.f32 0.0, %v1178
      %v1180 = vpop.f32.mrb[0].mxu0
      %1181 = vmatprep.mubr.f32.mxu0 0.0
      %1182 = vmatmul.mubr.f32.gmra.mrb[0].mxu0 %v717
      %v1183 = vpop.f32.mrb[0].mxu0
      %v1184 = vadd.f32 0.0, %v1183
      %v1185 = vpop.f32.mrb[0].mxu0
      %1186 = vmatprep.mubr.f32.mxu0 0.0
      %1187 = vmatmul.mubr.f32.gmra.mrb[0].mxu0 %v719
      %v1188 = vpop.f32.mrb[0].mxu0
      %v1189 = vadd.f32 0.0, %v1188
      %v1190 = vpop.f32.mrb[0].mxu0
      %1191 = vmatprep.mubr.f32.mxu0 0.0
      %1192 = vmatmul.mubr.f32.gmra.mrb[0].mxu0 %v1087
      %v1193 = vpop.f32.mrb[0].mxu0
      %v1194 = vadd.f32 0.0, %v1193
      %v1195 = vpop.f32.mrb[0].mxu0
      %1196 = vdwg.mxu0
      %v1197 = vadd.f32 %v1074, %v1159
      %v1198 = vadd.f32 %v1075, %v1164
      %v1199 = vadd.f32 %v1076, %v1169
      %v1200 = vadd.f32 %v1077, %v1174
      %v1201 = vadd.f32 %v1078, %v1179
      %v1202 = vadd.f32 %v1079, %v1184
      %v1203 = vadd.f32 %v1080, %v1189
      %v1204 = vadd.f32 %v1081, %v1194
      %s1205 = scalar_lea.vmem %s3, 24
      %v1206 = vld [vmem:[%s1205] sm:$0xf]
      %v1208 = vsel %vm428, %v382, 0
      %v1211 = vsel %vm445, %v1206, 0
      %1213 = vmatprep.subr.mxu0 0.0
      %1214 = vmatpush1.msra.mxu0 %v1211
      %1215 = vmatprep.subr.mxu0 0.0
      %1216 = vmatpush1.msra.mxu0 0.0
      %1217 = vmatprep.subr.mxu0 0.0
      %1218 = vmatpush1.msra.mxu0 0.0
      %1219 = vmatprep.subr.mxu0 0.0
      %1220 = vmatpush1.msra.mxu0 0.0
      %1221 = vmatprep.subr.mxu0 0.0
      %1222 = vmatpush1.msra.mxu0 0.0
      %1223 = vmatprep.subr.mxu0 0.0
      %1224 = vmatpush1.msra.mxu0 0.0
      %1225 = vmatprep.subr.mxu0 0.0
      %1226 = vmatpush1.msra.mxu0 0.0
      %1227 = vmatprep.subr.mxu0 0.0
      %1228 = vmatpush1.msra.mxu0 0.0
      %1229 = vmatprep.subr.mxu0 0.0
      %1230 = vmatpush1.msra.mxu0 0.0
      %1231 = vmatprep.subr.mxu0 0.0
      %1232 = vmatpush1.msra.mxu0 0.0
      %1233 = vmatprep.subr.mxu0 0.0
      %1234 = vmatpush1.msra.mxu0 0.0
      %1235 = vmatprep.subr.mxu0 0.0
      %1236 = vmatpush1.msra.mxu0 0.0
      %1237 = vmatprep.subr.mxu0 0.0
      %1238 = vmatpush1.msra.mxu0 0.0
      %1239 = vmatprep.subr.mxu0 0.0
      %1240 = vmatpush1.msra.mxu0 0.0
      %1241 = vmatprep.subr.mxu0 0.0
      %1242 = vmatpush1.msra.mxu0 0.0
      %1243 = vmatprep.subr.mxu0 0.0
      %1244 = vmatpush1.msra.mxu0 0.0
      %1245 = vmatprep.subr.mxu0 0.0
      %1246 = vmatpush1.msra.mxu0 0.0
      %1247 = vmatprep.subr.mxu0 0.0
      %1248 = vmatpush1.msra.mxu0 0.0
      %1249 = vmatprep.subr.mxu0 0.0
      %1250 = vmatpush1.msra.mxu0 0.0
      %1251 = vmatprep.subr.mxu0 0.0
      %1252 = vmatpush1.msra.mxu0 0.0
      %1253 = vmatprep.subr.mxu0 0.0
      %1254 = vmatpush1.msra.mxu0 0.0
      %1255 = vmatprep.subr.mxu0 0.0
      %1256 = vmatpush1.msra.mxu0 0.0
      %1257 = vmatprep.subr.mxu0 0.0
      %1258 = vmatpush1.msra.mxu0 0.0
      %1259 = vmatprep.subr.mxu0 0.0
      %1260 = vmatpush1.msra.mxu0 0.0
      %1261 = vmatprep.subr.mxu0 0.0
      %1262 = vmatpush1.msra.mxu0 0.0
      %1263 = vmatprep.subr.mxu0 0.0
      %1264 = vmatpush1.msra.mxu0 0.0
      %1265 = vmatprep.subr.mxu0 0.0
      %1266 = vmatpush1.msra.mxu0 0.0
      %1267 = vmatprep.subr.mxu0 0.0
      %1268 = vmatpush1.msra.mxu0 0.0
      %1269 = vmatprep.subr.mxu0 0.0
      %1270 = vmatpush1.msra.mxu0 0.0
      %1271 = vmatprep.subr.mxu0 0.0
      %1272 = vmatpush1.msra.mxu0 0.0
      %1273 = vmatprep.subr.mxu0 0.0
      %1274 = vmatpush1.msra.mxu0 0.0
      %1275 = vmatprep.subr.mxu0 0.0
      %1276 = vmatpush1.msra.mxu0 0.0
      %1277 = vmatprep.mubr.f32.mxu0 0.0
      %1278 = vmatmul.mubr.f32.gmra.mrb[0].mxu0 %v558
      %v1279 = vpop.f32.mrb[0].mxu0
      %v1280 = vadd.f32 0.0, %v1279
      %v1281 = vpop.f32.mrb[0].mxu0
      %1282 = vmatprep.mubr.f32.mxu0 0.0
      %1283 = vmatmul.mubr.f32.gmra.mrb[0].mxu0 %v560
      %v1284 = vpop.f32.mrb[0].mxu0
      %v1285 = vadd.f32 0.0, %v1284
      %v1286 = vpop.f32.mrb[0].mxu0
      %1287 = vmatprep.mubr.f32.mxu0 0.0
      %1288 = vmatmul.mubr.f32.gmra.mrb[0].mxu0 %v562
      %v1289 = vpop.f32.mrb[0].mxu0
      %v1290 = vadd.f32 0.0, %v1289
      %v1291 = vpop.f32.mrb[0].mxu0
      %1292 = vmatprep.mubr.f32.mxu0 0.0
      %1293 = vmatmul.mubr.f32.gmra.mrb[0].mxu0 %v564
      %v1294 = vpop.f32.mrb[0].mxu0
      %v1295 = vadd.f32 0.0, %v1294
      %v1296 = vpop.f32.mrb[0].mxu0
      %1297 = vmatprep.mubr.f32.mxu0 0.0
      %1298 = vmatmul.mubr.f32.gmra.mrb[0].mxu0 %v566
      %v1299 = vpop.f32.mrb[0].mxu0
      %v1300 = vadd.f32 0.0, %v1299
      %v1301 = vpop.f32.mrb[0].mxu0
      %1302 = vmatprep.mubr.f32.mxu0 0.0
      %1303 = vmatmul.mubr.f32.gmra.mrb[0].mxu0 %v568
      %v1304 = vpop.f32.mrb[0].mxu0
      %v1305 = vadd.f32 0.0, %v1304
      %v1306 = vpop.f32.mrb[0].mxu0
      %1307 = vmatprep.mubr.f32.mxu0 0.0
      %1308 = vmatmul.mubr.f32.gmra.mrb[0].mxu0 %v840
      %v1309 = vpop.f32.mrb[0].mxu0
      %v1310 = vadd.f32 0.0, %v1309
      %v1311 = vpop.f32.mrb[0].mxu0
      %1312 = vmatprep.mubr.f32.mxu0 0.0
      %1313 = vmatmul.mubr.f32.gmra.mrb[0].mxu0 %v1208
      %v1314 = vpop.f32.mrb[0].mxu0
      %v1315 = vadd.f32 0.0, %v1314
      %v1316 = vpop.f32.mrb[0].mxu0
      %1317 = vdwg.mxu0
      %v1318 = vadd.f32 %v1197, %v1280
      %v1319 = vadd.f32 %v1198, %v1285
      %v1320 = vadd.f32 %v1199, %v1290
      %v1321 = vadd.f32 %v1200, %v1295
      %v1322 = vadd.f32 %v1201, %v1300
      %v1323 = vadd.f32 %v1202, %v1305
      %v1324 = vadd.f32 %v1203, %v1310
      %v1325 = vadd.f32 %v1204, %v1315
      %v1327 = vrot.slane %v382, 1
      %v1328 = vrot.slane %v383, 1
      %v1329 = vsel %vm401, %v1327, %v1328
      %s1330 = scalar_lea.vmem %s3, 28
      %v1331 = vld [vmem:[%s1330] sm:$0xf]
      %v1332 = vsel %vm428, %v1329, 0
      %v1335 = vsel %vm445, %v1331, 0
      %1337 = vmatprep.subr.mxu0 0.0
      %1338 = vmatpush1.msra.mxu0 %v1335
      %1339 = vmatprep.subr.mxu0 0.0
      %1340 = vmatpush1.msra.mxu0 0.0
      %1341 = vmatprep.subr.mxu0 0.0
      %1342 = vmatpush1.msra.mxu0 0.0
      %1343 = vmatprep.subr.mxu0 0.0
      %1344 = vmatpush1.msra.mxu0 0.0
      %1345 = vmatprep.subr.mxu0 0.0
      %1346 = vmatpush1.msra.mxu0 0.0
      %1347 = vmatprep.subr.mxu0 0.0
      %1348 = vmatpush1.msra.mxu0 0.0
      %1349 = vmatprep.subr.mxu0 0.0
      %1350 = vmatpush1.msra.mxu0 0.0
      %1351 = vmatprep.subr.mxu0 0.0
      %1352 = vmatpush1.msra.mxu0 0.0
      %1353 = vmatprep.subr.mxu0 0.0
      %1354 = vmatpush1.msra.mxu0 0.0
      %1355 = vmatprep.subr.mxu0 0.0
      %1356 = vmatpush1.msra.mxu0 0.0
      %1357 = vmatprep.subr.mxu0 0.0
      %1358 = vmatpush1.msra.mxu0 0.0
      %1359 = vmatprep.subr.mxu0 0.0
      %1360 = vmatpush1.msra.mxu0 0.0
      %1361 = vmatprep.subr.mxu0 0.0
      %1362 = vmatpush1.msra.mxu0 0.0
      %1363 = vmatprep.subr.mxu0 0.0
      %1364 = vmatpush1.msra.mxu0 0.0
      %1365 = vmatprep.subr.mxu0 0.0
      %1366 = vmatpush1.msra.mxu0 0.0
      %1367 = vmatprep.subr.mxu0 0.0
      %1368 = vmatpush1.msra.mxu0 0.0
      %1369 = vmatprep.subr.mxu0 0.0
      %1370 = vmatpush1.msra.mxu0 0.0
      %1371 = vmatprep.subr.mxu0 0.0
      %1372 = vmatpush1.msra.mxu0 0.0
      %1373 = vmatprep.subr.mxu0 0.0
      %1374 = vmatpush1.msra.mxu0 0.0
      %1375 = vmatprep.subr.mxu0 0.0
      %1376 = vmatpush1.msra.mxu0 0.0
      %1377 = vmatprep.subr.mxu0 0.0
      %1378 = vmatpush1.msra.mxu0 0.0
      %1379 = vmatprep.subr.mxu0 0.0
      %1380 = vmatpush1.msra.mxu0 0.0
      %1381 = vmatprep.subr.mxu0 0.0
      %1382 = vmatpush1.msra.mxu0 0.0
      %1383 = vmatprep.subr.mxu0 0.0
      %1384 = vmatpush1.msra.mxu0 0.0
      %1385 = vmatprep.subr.mxu0 0.0
      %1386 = vmatpush1.msra.mxu0 0.0
      %1387 = vmatprep.subr.mxu0 0.0
      %1388 = vmatpush1.msra.mxu0 0.0
      %1389 = vmatprep.subr.mxu0 0.0
      %1390 = vmatpush1.msra.mxu0 0.0
      %1391 = vmatprep.subr.mxu0 0.0
      %1392 = vmatpush1.msra.mxu0 0.0
      %1393 = vmatprep.subr.mxu0 0.0
      %1394 = vmatpush1.msra.mxu0 0.0
      %1395 = vmatprep.subr.mxu0 0.0
      %1396 = vmatpush1.msra.mxu0 0.0
      %1397 = vmatprep.subr.mxu0 0.0
      %1398 = vmatpush1.msra.mxu0 0.0
      %1399 = vmatprep.subr.mxu0 0.0
      %1400 = vmatpush1.msra.mxu0 0.0
      %1401 = vmatprep.mubr.f32.mxu0 0.0
      %1402 = vmatmul.mubr.f32.gmra.mrb[0].mxu0 %v433
      %v1403 = vpop.f32.mrb[0].mxu0
      %v1404 = vadd.f32 0.0, %v1403
      %v1405 = vpop.f32.mrb[0].mxu0
      %1406 = vmatprep.mubr.f32.mxu0 0.0
      %1407 = vmatmul.mubr.f32.gmra.mrb[0].mxu0 %v435
      %v1408 = vpop.f32.mrb[0].mxu0
      %v1409 = vadd.f32 0.0, %v1408
      %v1410 = vpop.f32.mrb[0].mxu0
      %1411 = vmatprep.mubr.f32.mxu0 0.0
      %1412 = vmatmul.mubr.f32.gmra.mrb[0].mxu0 %v437
      %v1413 = vpop.f32.mrb[0].mxu0
      %v1414 = vadd.f32 0.0, %v1413
      %v1415 = vpop.f32.mrb[0].mxu0
      %1416 = vmatprep.mubr.f32.mxu0 0.0
      %1417 = vmatmul.mubr.f32.gmra.mrb[0].mxu0 %v439
      %v1418 = vpop.f32.mrb[0].mxu0
      %v1419 = vadd.f32 0.0, %v1418
      %v1420 = vpop.f32.mrb[0].mxu0
      %1421 = vmatprep.mubr.f32.mxu0 0.0
      %1422 = vmatmul.mubr.f32.gmra.mrb[0].mxu0 %v441
      %v1423 = vpop.f32.mrb[0].mxu0
      %v1424 = vadd.f32 0.0, %v1423
      %v1425 = vpop.f32.mrb[0].mxu0
      %1426 = vmatprep.mubr.f32.mxu0 0.0
      %1427 = vmatmul.mubr.f32.gmra.mrb[0].mxu0 %v443
      %v1428 = vpop.f32.mrb[0].mxu0
      %v1429 = vadd.f32 0.0, %v1428
      %v1430 = vpop.f32.mrb[0].mxu0
      %1431 = vmatprep.mubr.f32.mxu0 0.0
      %1432 = vmatmul.mubr.f32.gmra.mrb[0].mxu0 %v964
      %v1433 = vpop.f32.mrb[0].mxu0
      %v1434 = vadd.f32 0.0, %v1433
      %v1435 = vpop.f32.mrb[0].mxu0
      %1436 = vmatprep.mubr.f32.mxu0 0.0
      %1437 = vmatmul.mubr.f32.gmra.mrb[0].mxu0 %v1332
      %v1438 = vpop.f32.mrb[0].mxu0
      %v1439 = vadd.f32 0.0, %v1438
      %v1440 = vpop.f32.mrb[0].mxu0
      %1441 = vdwg.mxu0
      %v1442 = vadd.f32 %v1318, %v1404
      %v1443 = vadd.f32 %v1319, %v1409
      %v1444 = vadd.f32 %v1320, %v1414
      %v1445 = vadd.f32 %v1321, %v1419
      %v1446 = vadd.f32 %v1322, %v1424
      %v1447 = vadd.f32 %v1323, %v1429
      %v1448 = vadd.f32 %v1324, %v1434
      %v1449 = vadd.f32 %v1325, %v1439
      %v1450 = vrot.slane %v382, 2
      %v1451 = vrot.slane %v383, 2
      %v1452 = vsel %vm678, %v1450, %v1451
      %s1453 = scalar_lea.vmem %s3, 32
      %v1454 = vld [vmem:[%s1453] sm:$0xf]
      %v1455 = vsel %vm428, %v1452, 0
      %v1458 = vsel %vm445, %v1454, 0
      %1460 = vmatprep.subr.mxu0 0.0
      %1461 = vmatpush1.msra.mxu0 %v1458
      %1462 = vmatprep.subr.mxu0 0.0
      %1463 = vmatpush1.msra.mxu0 0.0
      %1464 = vmatprep.subr.mxu0 0.0
      %1465 = vmatpush1.msra.mxu0 0.0
      %1466 = vmatprep.subr.mxu0 0.0
      %1467 = vmatpush1.msra.mxu0 0.0
      %1468 = vmatprep.subr.mxu0 0.0
      %1469 = vmatpush1.msra.mxu0 0.0
      %1470 = vmatprep.subr.mxu0 0.0
      %1471 = vmatpush1.msra.mxu0 0.0
      %1472 = vmatprep.subr.mxu0 0.0
      %1473 = vmatpush1.msra.mxu0 0.0
      %1474 = vmatprep.subr.mxu0 0.0
      %1475 = vmatpush1.msra.mxu0 0.0
      %1476 = vmatprep.subr.mxu0 0.0
      %1477 = vmatpush1.msra.mxu0 0.0
      %1478 = vmatprep.subr.mxu0 0.0
      %1479 = vmatpush1.msra.mxu0 0.0
      %1480 = vmatprep.subr.mxu0 0.0
      %1481 = vmatpush1.msra.mxu0 0.0
      %1482 = vmatprep.subr.mxu0 0.0
      %1483 = vmatpush1.msra.mxu0 0.0
      %1484 = vmatprep.subr.mxu0 0.0
      %1485 = vmatpush1.msra.mxu0 0.0
      %1486 = vmatprep.subr.mxu0 0.0
      %1487 = vmatpush1.msra.mxu0 0.0
      %1488 = vmatprep.subr.mxu0 0.0
      %1489 = vmatpush1.msra.mxu0 0.0
      %1490 = vmatprep.subr.mxu0 0.0
      %1491 = vmatpush1.msra.mxu0 0.0
      %1492 = vmatprep.subr.mxu0 0.0
      %1493 = vmatpush1.msra.mxu0 0.0
      %1494 = vmatprep.subr.mxu0 0.0
      %1495 = vmatpush1.msra.mxu0 0.0
      %1496 = vmatprep.subr.mxu0 0.0
      %1497 = vmatpush1.msra.mxu0 0.0
      %1498 = vmatprep.subr.mxu0 0.0
      %1499 = vmatpush1.msra.mxu0 0.0
      %1500 = vmatprep.subr.mxu0 0.0
      %1501 = vmatpush1.msra.mxu0 0.0
      %1502 = vmatprep.subr.mxu0 0.0
      %1503 = vmatpush1.msra.mxu0 0.0
      %1504 = vmatprep.subr.mxu0 0.0
      %1505 = vmatpush1.msra.mxu0 0.0
      %1506 = vmatprep.subr.mxu0 0.0
      %1507 = vmatpush1.msra.mxu0 0.0
      %1508 = vmatprep.subr.mxu0 0.0
      %1509 = vmatpush1.msra.mxu0 0.0
      %1510 = vmatprep.subr.mxu0 0.0
      %1511 = vmatpush1.msra.mxu0 0.0
      %1512 = vmatprep.subr.mxu0 0.0
      %1513 = vmatpush1.msra.mxu0 0.0
      %1514 = vmatprep.subr.mxu0 0.0
      %1515 = vmatpush1.msra.mxu0 0.0
      %1516 = vmatprep.subr.mxu0 0.0
      %1517 = vmatpush1.msra.mxu0 0.0
      %1518 = vmatprep.subr.mxu0 0.0
      %1519 = vmatpush1.msra.mxu0 0.0
      %1520 = vmatprep.subr.mxu0 0.0
      %1521 = vmatpush1.msra.mxu0 0.0
      %1522 = vmatprep.subr.mxu0 0.0
      %1523 = vmatpush1.msra.mxu0 0.0
      %1524 = vmatprep.mubr.f32.mxu0 0.0
      %1525 = vmatmul.mubr.f32.gmra.mrb[0].mxu0 %v709
      %v1526 = vpop.f32.mrb[0].mxu0
      %v1527 = vadd.f32 0.0, %v1526
      %v1528 = vpop.f32.mrb[0].mxu0
      %1529 = vmatprep.mubr.f32.mxu0 0.0
      %1530 = vmatmul.mubr.f32.gmra.mrb[0].mxu0 %v711
      %v1531 = vpop.f32.mrb[0].mxu0
      %v1532 = vadd.f32 0.0, %v1531
      %v1533 = vpop.f32.mrb[0].mxu0
      %1534 = vmatprep.mubr.f32.mxu0 0.0
      %1535 = vmatmul.mubr.f32.gmra.mrb[0].mxu0 %v713
      %v1536 = vpop.f32.mrb[0].mxu0
      %v1537 = vadd.f32 0.0, %v1536
      %v1538 = vpop.f32.mrb[0].mxu0
      %1539 = vmatprep.mubr.f32.mxu0 0.0
      %1540 = vmatmul.mubr.f32.gmra.mrb[0].mxu0 %v715
      %v1541 = vpop.f32.mrb[0].mxu0
      %v1542 = vadd.f32 0.0, %v1541
      %v1543 = vpop.f32.mrb[0].mxu0
      %1544 = vmatprep.mubr.f32.mxu0 0.0
      %1545 = vmatmul.mubr.f32.gmra.mrb[0].mxu0 %v717
      %v1546 = vpop.f32.mrb[0].mxu0
      %v1547 = vadd.f32 0.0, %v1546
      %v1548 = vpop.f32.mrb[0].mxu0
      %1549 = vmatprep.mubr.f32.mxu0 0.0
      %1550 = vmatmul.mubr.f32.gmra.mrb[0].mxu0 %v719
      %v1551 = vpop.f32.mrb[0].mxu0
      %v1552 = vadd.f32 0.0, %v1551
      %v1553 = vpop.f32.mrb[0].mxu0
      %1554 = vmatprep.mubr.f32.mxu0 0.0
      %1555 = vmatmul.mubr.f32.gmra.mrb[0].mxu0 %v1087
      %v1556 = vpop.f32.mrb[0].mxu0
      %v1557 = vadd.f32 0.0, %v1556
      %v1558 = vpop.f32.mrb[0].mxu0
      %1559 = vmatprep.mubr.f32.mxu0 0.0
      %1560 = vmatmul.mubr.f32.gmra.mrb[0].mxu0 %v1455
      %v1561 = vpop.f32.mrb[0].mxu0
      %v1562 = vadd.f32 0.0, %v1561
      %v1563 = vpop.f32.mrb[0].mxu0
      %1564 = vdwg.mxu0
      %v1565 = vadd.f32 %v1442, %v1527
      %v1566 = vadd.f32 %v1443, %v1532
      %v1567 = vadd.f32 %v1444, %v1537
      %v1568 = vadd.f32 %v1445, %v1542
      %v1569 = vadd.f32 %v1446, %v1547
      %v1570 = vadd.f32 %v1447, %v1552
      %v1571 = vadd.f32 %v1448, %v1557
      %v1572 = vadd.f32 %v1449, %v1562
      %v1573 = vld [vmem:[%s334] sm:$0xff]
      %v1574 = vld [vmem:[%s334 + $0x8] sm:$0x3]
      %v1575 = vld [vmem:[%s334 + $0x10] sm:$0xff]
      %v1576 = vld [vmem:[%s334 + $0x18] sm:$0x3]
      %v1577 = vld [vmem:[%s334 + $0x20] sm:$0xff]
      %v1578 = vld [vmem:[%s334 + $0x28] sm:$0x3]
      %v1579 = vld [vmem:[%s334 + $0x30] sm:$0xff]
      %v1580 = vld [vmem:[%s334 + $0x38] sm:$0x3]
      %v1581 = vld [vmem:[%s334 + $0x40] sm:$0xff]
      %v1582 = vld [vmem:[%s334 + $0x48] sm:$0x3]
      %v1583 = vld [vmem:[%s334 + $0x50] sm:$0xff]
      %v1584 = vld [vmem:[%s334 + $0x58] sm:$0x3]
      %v1585 = vld [vmem:[%s334 + $0x60] sm:$0xff]
      %v1586 = vld [vmem:[%s334 + $0x68] sm:$0x3]
      %v1587 = vld [vmem:[%s334 + $0x70] sm:$0xff]
      %v1588 = vld [vmem:[%s334 + $0x78] sm:$0x3]
      %v1589 = vld [vmem:[%s334 + $0x80] sm:$0xff]
      %v1590 = vld [vmem:[%s334 + $0x88] sm:$0x3]
      %v1591 = vld [vmem:[%s334 + $0x90] sm:$0xff]
      %v1592 = vld [vmem:[%s334 + $0x98] sm:$0x3]
      %s1593 = scalar_lea.vmem %s3, 36
      %v1594 = vld [vmem:[%s1593] sm:$0xf]
      %v1596 = vsel %vm428, %v1573, 0
      %v1599 = vsel %vm428, %v1575, 0
      %v1602 = vsel %vm428, %v1577, 0
      %v1605 = vsel %vm428, %v1579, 0
      %v1608 = vsel %vm428, %v1581, 0
      %v1611 = vsel %vm428, %v1583, 0
      %v1614 = vsel %vm428, %v1585, 0
      %v1617 = vsel %vm428, %v1587, 0
      %v1620 = vsel %vm445, %v1594, 0
      %1622 = vmatprep.subr.mxu0 0.0
      %1623 = vmatpush1.msra.mxu0 %v1620
      %1624 = vmatprep.subr.mxu0 0.0
      %1625 = vmatpush1.msra.mxu0 0.0
      %1626 = vmatprep.subr.mxu0 0.0
      %1627 = vmatpush1.msra.mxu0 0.0
      %1628 = vmatprep.subr.mxu0 0.0
      %1629 = vmatpush1.msra.mxu0 0.0
      %1630 = vmatprep.subr.mxu0 0.0
      %1631 = vmatpush1.msra.mxu0 0.0
      %1632 = vmatprep.subr.mxu0 0.0
      %1633 = vmatpush1.msra.mxu0 0.0
      %1634 = vmatprep.subr.mxu0 0.0
      %1635 = vmatpush1.msra.mxu0 0.0
      %1636 = vmatprep.subr.mxu0 0.0
      %1637 = vmatpush1.msra.mxu0 0.0
      %1638 = vmatprep.subr.mxu0 0.0
      %1639 = vmatpush1.msra.mxu0 0.0
      %1640 = vmatprep.subr.mxu0 0.0
      %1641 = vmatpush1.msra.mxu0 0.0
      %1642 = vmatprep.subr.mxu0 0.0
      %1643 = vmatpush1.msra.mxu0 0.0
      %1644 = vmatprep.subr.mxu0 0.0
      %1645 = vmatpush1.msra.mxu0 0.0
      %1646 = vmatprep.subr.mxu0 0.0
      %1647 = vmatpush1.msra.mxu0 0.0
      %1648 = vmatprep.subr.mxu0 0.0
      %1649 = vmatpush1.msra.mxu0 0.0
      %1650 = vmatprep.subr.mxu0 0.0
      %1651 = vmatpush1.msra.mxu0 0.0
      %1652 = vmatprep.subr.mxu0 0.0
      %1653 = vmatpush1.msra.mxu0 0.0
      %1654 = vmatprep.subr.mxu0 0.0
      %1655 = vmatpush1.msra.mxu0 0.0
      %1656 = vmatprep.subr.mxu0 0.0
      %1657 = vmatpush1.msra.mxu0 0.0
      %1658 = vmatprep.subr.mxu0 0.0
      %1659 = vmatpush1.msra.mxu0 0.0
      %1660 = vmatprep.subr.mxu0 0.0
      %1661 = vmatpush1.msra.mxu0 0.0
      %1662 = vmatprep.subr.mxu0 0.0
      %1663 = vmatpush1.msra.mxu0 0.0
      %1664 = vmatprep.subr.mxu0 0.0
      %1665 = vmatpush1.msra.mxu0 0.0
      %1666 = vmatprep.subr.mxu0 0.0
      %1667 = vmatpush1.msra.mxu0 0.0
      %1668 = vmatprep.subr.mxu0 0.0
      %1669 = vmatpush1.msra.mxu0 0.0
      %1670 = vmatprep.subr.mxu0 0.0
      %1671 = vmatpush1.msra.mxu0 0.0
      %1672 = vmatprep.subr.mxu0 0.0
      %1673 = vmatpush1.msra.mxu0 0.0
      %1674 = vmatprep.subr.mxu0 0.0
      %1675 = vmatpush1.msra.mxu0 0.0
      %1676 = vmatprep.subr.mxu0 0.0
      %1677 = vmatpush1.msra.mxu0 0.0
      %1678 = vmatprep.subr.mxu0 0.0
      %1679 = vmatpush1.msra.mxu0 0.0
      %1680 = vmatprep.subr.mxu0 0.0
      %1681 = vmatpush1.msra.mxu0 0.0
      %1682 = vmatprep.subr.mxu0 0.0
      %1683 = vmatpush1.msra.mxu0 0.0
      %1684 = vmatprep.subr.mxu0 0.0
      %1685 = vmatpush1.msra.mxu0 0.0
      %1686 = vmatprep.mubr.f32.mxu0 0.0
      %1687 = vmatmul.mubr.f32.gmra.mrb[0].mxu0 %v1596
      %v1688 = vpop.f32.mrb[0].mxu0
      %v1689 = vadd.f32 0.0, %v1688
      %v1690 = vpop.f32.mrb[0].mxu0
      %1691 = vmatprep.mubr.f32.mxu0 0.0
      %1692 = vmatmul.mubr.f32.gmra.mrb[0].mxu0 %v1599
      %v1693 = vpop.f32.mrb[0].mxu0
      %v1694 = vadd.f32 0.0, %v1693
      %v1695 = vpop.f32.mrb[0].mxu0
      %1696 = vmatprep.mubr.f32.mxu0 0.0
      %1697 = vmatmul.mubr.f32.gmra.mrb[0].mxu0 %v1602
      %v1698 = vpop.f32.mrb[0].mxu0
      %v1699 = vadd.f32 0.0, %v1698
      %v1700 = vpop.f32.mrb[0].mxu0
      %1701 = vmatprep.mubr.f32.mxu0 0.0
      %1702 = vmatmul.mubr.f32.gmra.mrb[0].mxu0 %v1605
      %v1703 = vpop.f32.mrb[0].mxu0
      %v1704 = vadd.f32 0.0, %v1703
      %v1705 = vpop.f32.mrb[0].mxu0
      %1706 = vmatprep.mubr.f32.mxu0 0.0
      %1707 = vmatmul.mubr.f32.gmra.mrb[0].mxu0 %v1608
      %v1708 = vpop.f32.mrb[0].mxu0
      %v1709 = vadd.f32 0.0, %v1708
      %v1710 = vpop.f32.mrb[0].mxu0
      %1711 = vmatprep.mubr.f32.mxu0 0.0
      %1712 = vmatmul.mubr.f32.gmra.mrb[0].mxu0 %v1611
      %v1713 = vpop.f32.mrb[0].mxu0
      %v1714 = vadd.f32 0.0, %v1713
      %v1715 = vpop.f32.mrb[0].mxu0
      %1716 = vmatprep.mubr.f32.mxu0 0.0
      %1717 = vmatmul.mubr.f32.gmra.mrb[0].mxu0 %v1614
      %v1718 = vpop.f32.mrb[0].mxu0
      %v1719 = vadd.f32 0.0, %v1718
      %v1720 = vpop.f32.mrb[0].mxu0
      %1721 = vmatprep.mubr.f32.mxu0 0.0
      %1722 = vmatmul.mubr.f32.gmra.mrb[0].mxu0 %v1617
      %v1723 = vpop.f32.mrb[0].mxu0
      %v1724 = vadd.f32 0.0, %v1723
      %v1725 = vpop.f32.mrb[0].mxu0
      %1726 = vdwg.mxu0
      %v1727 = vadd.f32 %v1565, %v1689
      %v1728 = vadd.f32 %v1566, %v1694
      %v1729 = vadd.f32 %v1567, %v1699
      %v1730 = vadd.f32 %v1568, %v1704
      %v1731 = vadd.f32 %v1569, %v1709
      %v1732 = vadd.f32 %v1570, %v1714
      %v1733 = vadd.f32 %v1571, %v1719
      %v1734 = vadd.f32 %v1572, %v1724
      %v1743 = vrot.slane %v1573, 1
      %v1744 = vrot.slane %v1574, 1
      %v1745 = vsel %vm401, %v1743, %v1744
      %v1746 = vrot.slane %v1575, 1
      %v1747 = vrot.slane %v1576, 1
      %v1748 = vsel %vm401, %v1746, %v1747
      %v1749 = vrot.slane %v1577, 1
      %v1750 = vrot.slane %v1578, 1
      %v1751 = vsel %vm401, %v1749, %v1750
      %v1752 = vrot.slane %v1579, 1
      %v1753 = vrot.slane %v1580, 1
      %v1754 = vsel %vm401, %v1752, %v1753
      %v1755 = vrot.slane %v1581, 1
      %v1756 = vrot.slane %v1582, 1
      %v1757 = vsel %vm401, %v1755, %v1756
      %v1758 = vrot.slane %v1583, 1
      %v1759 = vrot.slane %v1584, 1
      %v1760 = vsel %vm401, %v1758, %v1759
      %v1761 = vrot.slane %v1585, 1
      %v1762 = vrot.slane %v1586, 1
      %v1763 = vsel %vm401, %v1761, %v1762
      %v1764 = vrot.slane %v1587, 1
      %v1765 = vrot.slane %v1588, 1
      %v1766 = vsel %vm401, %v1764, %v1765
      %s1767 = scalar_lea.vmem %s3, 40
      %v1768 = vld [vmem:[%s1767] sm:$0xf]
      %v1769 = vsel %vm428, %v1745, 0
      %v1771 = vsel %vm428, %v1748, 0
      %v1773 = vsel %vm428, %v1751, 0
      %v1775 = vsel %vm428, %v1754, 0
      %v1777 = vsel %vm428, %v1757, 0
      %v1779 = vsel %vm428, %v1760, 0
      %v1781 = vsel %vm428, %v1763, 0
      %v1783 = vsel %vm428, %v1766, 0
      %v1786 = vsel %vm445, %v1768, 0
      %1788 = vmatprep.subr.mxu0 0.0
      %1789 = vmatpush1.msra.mxu0 %v1786
      %1790 = vmatprep.subr.mxu0 0.0
      %1791 = vmatpush1.msra.mxu0 0.0
      %1792 = vmatprep.subr.mxu0 0.0
      %1793 = vmatpush1.msra.mxu0 0.0
      %1794 = vmatprep.subr.mxu0 0.0
      %1795 = vmatpush1.msra.mxu0 0.0
      %1796 = vmatprep.subr.mxu0 0.0
      %1797 = vmatpush1.msra.mxu0 0.0
      %1798 = vmatprep.subr.mxu0 0.0
      %1799 = vmatpush1.msra.mxu0 0.0
      %1800 = vmatprep.subr.mxu0 0.0
      %1801 = vmatpush1.msra.mxu0 0.0
      %1802 = vmatprep.subr.mxu0 0.0
      %1803 = vmatpush1.msra.mxu0 0.0
      %1804 = vmatprep.subr.mxu0 0.0
      %1805 = vmatpush1.msra.mxu0 0.0
      %1806 = vmatprep.subr.mxu0 0.0
      %1807 = vmatpush1.msra.mxu0 0.0
      %1808 = vmatprep.subr.mxu0 0.0
      %1809 = vmatpush1.msra.mxu0 0.0
      %1810 = vmatprep.subr.mxu0 0.0
      %1811 = vmatpush1.msra.mxu0 0.0
      %1812 = vmatprep.subr.mxu0 0.0
      %1813 = vmatpush1.msra.mxu0 0.0
      %1814 = vmatprep.subr.mxu0 0.0
      %1815 = vmatpush1.msra.mxu0 0.0
      %1816 = vmatprep.subr.mxu0 0.0
      %1817 = vmatpush1.msra.mxu0 0.0
      %1818 = vmatprep.subr.mxu0 0.0
      %1819 = vmatpush1.msra.mxu0 0.0
      %1820 = vmatprep.subr.mxu0 0.0
      %1821 = vmatpush1.msra.mxu0 0.0
      %1822 = vmatprep.subr.mxu0 0.0
      %1823 = vmatpush1.msra.mxu0 0.0
      %1824 = vmatprep.subr.mxu0 0.0
      %1825 = vmatpush1.msra.mxu0 0.0
      %1826 = vmatprep.subr.mxu0 0.0
      %1827 = vmatpush1.msra.mxu0 0.0
      %1828 = vmatprep.subr.mxu0 0.0
      %1829 = vmatpush1.msra.mxu0 0.0
      %1830 = vmatprep.subr.mxu0 0.0
      %1831 = vmatpush1.msra.mxu0 0.0
      %1832 = vmatprep.subr.mxu0 0.0
      %1833 = vmatpush1.msra.mxu0 0.0
      %1834 = vmatprep.subr.mxu0 0.0
      %1835 = vmatpush1.msra.mxu0 0.0
      %1836 = vmatprep.subr.mxu0 0.0
      %1837 = vmatpush1.msra.mxu0 0.0
      %1838 = vmatprep.subr.mxu0 0.0
      %1839 = vmatpush1.msra.mxu0 0.0
      %1840 = vmatprep.subr.mxu0 0.0
      %1841 = vmatpush1.msra.mxu0 0.0
      %1842 = vmatprep.subr.mxu0 0.0
      %1843 = vmatpush1.msra.mxu0 0.0
      %1844 = vmatprep.subr.mxu0 0.0
      %1845 = vmatpush1.msra.mxu0 0.0
      %1846 = vmatprep.subr.mxu0 0.0
      %1847 = vmatpush1.msra.mxu0 0.0
      %1848 = vmatprep.subr.mxu0 0.0
      %1849 = vmatpush1.msra.mxu0 0.0
      %1850 = vmatprep.subr.mxu0 0.0
      %1851 = vmatpush1.msra.mxu0 0.0
      %1852 = vmatprep.mubr.f32.mxu0 0.0
      %1853 = vmatmul.mubr.f32.gmra.mrb[0].mxu0 %v1769
      %v1854 = vpop.f32.mrb[0].mxu0
      %v1855 = vadd.f32 0.0, %v1854
      %v1856 = vpop.f32.mrb[0].mxu0
      %1857 = vmatprep.mubr.f32.mxu0 0.0
      %1858 = vmatmul.mubr.f32.gmra.mrb[0].mxu0 %v1771
      %v1859 = vpop.f32.mrb[0].mxu0
      %v1860 = vadd.f32 0.0, %v1859
      %v1861 = vpop.f32.mrb[0].mxu0
      %1862 = vmatprep.mubr.f32.mxu0 0.0
      %1863 = vmatmul.mubr.f32.gmra.mrb[0].mxu0 %v1773
      %v1864 = vpop.f32.mrb[0].mxu0
      %v1865 = vadd.f32 0.0, %v1864
      %v1866 = vpop.f32.mrb[0].mxu0
      %1867 = vmatprep.mubr.f32.mxu0 0.0
      %1868 = vmatmul.mubr.f32.gmra.mrb[0].mxu0 %v1775
      %v1869 = vpop.f32.mrb[0].mxu0
      %v1870 = vadd.f32 0.0, %v1869
      %v1871 = vpop.f32.mrb[0].mxu0
      %1872 = vmatprep.mubr.f32.mxu0 0.0
      %1873 = vmatmul.mubr.f32.gmra.mrb[0].mxu0 %v1777
      %v1874 = vpop.f32.mrb[0].mxu0
      %v1875 = vadd.f32 0.0, %v1874
      %v1876 = vpop.f32.mrb[0].mxu0
      %1877 = vmatprep.mubr.f32.mxu0 0.0
      %1878 = vmatmul.mubr.f32.gmra.mrb[0].mxu0 %v1779
      %v1879 = vpop.f32.mrb[0].mxu0
      %v1880 = vadd.f32 0.0, %v1879
      %v1881 = vpop.f32.mrb[0].mxu0
      %1882 = vmatprep.mubr.f32.mxu0 0.0
      %1883 = vmatmul.mubr.f32.gmra.mrb[0].mxu0 %v1781
      %v1884 = vpop.f32.mrb[0].mxu0
      %v1885 = vadd.f32 0.0, %v1884
      %v1886 = vpop.f32.mrb[0].mxu0
      %1887 = vmatprep.mubr.f32.mxu0 0.0
      %1888 = vmatmul.mubr.f32.gmra.mrb[0].mxu0 %v1783
      %v1889 = vpop.f32.mrb[0].mxu0
      %v1890 = vadd.f32 0.0, %v1889
      %v1891 = vpop.f32.mrb[0].mxu0
      %1892 = vdwg.mxu0
      %v1893 = vadd.f32 %v1727, %v1855
      %v1894 = vadd.f32 %v1728, %v1860
      %v1895 = vadd.f32 %v1729, %v1865
      %v1896 = vadd.f32 %v1730, %v1870
      %v1897 = vadd.f32 %v1731, %v1875
      %v1898 = vadd.f32 %v1732, %v1880
      %v1899 = vadd.f32 %v1733, %v1885
      %v1900 = vadd.f32 %v1734, %v1890
      %v1901 = vrot.slane %v1573, 2
      %v1902 = vrot.slane %v1574, 2
      %v1903 = vsel %vm678, %v1901, %v1902
      %v1904 = vrot.slane %v1575, 2
      %v1905 = vrot.slane %v1576, 2
      %v1906 = vsel %vm678, %v1904, %v1905
      %v1907 = vrot.slane %v1577, 2
      %v1908 = vrot.slane %v1578, 2
      %v1909 = vsel %vm678, %v1907, %v1908
      %v1910 = vrot.slane %v1579, 2
      %v1911 = vrot.slane %v1580, 2
      %v1912 = vsel %vm678, %v1910, %v1911
      %v1913 = vrot.slane %v1581, 2
      %v1914 = vrot.slane %v1582, 2
      %v1915 = vsel %vm678, %v1913, %v1914
      %v1916 = vrot.slane %v1583, 2
      %v1917 = vrot.slane %v1584, 2
      %v1918 = vsel %vm678, %v1916, %v1917
      %v1919 = vrot.slane %v1585, 2
      %v1920 = vrot.slane %v1586, 2
      %v1921 = vsel %vm678, %v1919, %v1920
      %v1922 = vrot.slane %v1587, 2
      %v1923 = vrot.slane %v1588, 2
      %v1924 = vsel %vm678, %v1922, %v1923
      %s1925 = scalar_lea.vmem %s3, 44
      %v1926 = vld [vmem:[%s1925] sm:$0xf]
      %v1927 = vsel %vm428, %v1903, 0
      %v1929 = vsel %vm428, %v1906, 0
      %v1931 = vsel %vm428, %v1909, 0
      %v1933 = vsel %vm428, %v1912, 0
      %v1935 = vsel %vm428, %v1915, 0
      %v1937 = vsel %vm428, %v1918, 0
      %v1939 = vsel %vm428, %v1921, 0
      %v1941 = vsel %vm428, %v1924, 0
      %v1944 = vsel %vm445, %v1926, 0
      %1946 = vmatprep.subr.mxu0 0.0
      %1947 = vmatpush1.msra.mxu0 %v1944
      %1948 = vmatprep.subr.mxu0 0.0
      %1949 = vmatpush1.msra.mxu0 0.0
      %1950 = vmatprep.subr.mxu0 0.0
      %1951 = vmatpush1.msra.mxu0 0.0
      %1952 = vmatprep.subr.mxu0 0.0
      %1953 = vmatpush1.msra.mxu0 0.0
      %1954 = vmatprep.subr.mxu0 0.0
      %1955 = vmatpush1.msra.mxu0 0.0
      %1956 = vmatprep.subr.mxu0 0.0
      %1957 = vmatpush1.msra.mxu0 0.0
      %1958 = vmatprep.subr.mxu0 0.0
      %1959 = vmatpush1.msra.mxu0 0.0
      %1960 = vmatprep.subr.mxu0 0.0
      %1961 = vmatpush1.msra.mxu0 0.0
      %1962 = vmatprep.subr.mxu0 0.0
      %1963 = vmatpush1.msra.mxu0 0.0
      %1964 = vmatprep.subr.mxu0 0.0
      %1965 = vmatpush1.msra.mxu0 0.0
      %1966 = vmatprep.subr.mxu0 0.0
      %1967 = vmatpush1.msra.mxu0 0.0
      %1968 = vmatprep.subr.mxu0 0.0
      %1969 = vmatpush1.msra.mxu0 0.0
      %1970 = vmatprep.subr.mxu0 0.0
      %1971 = vmatpush1.msra.mxu0 0.0
      %1972 = vmatprep.subr.mxu0 0.0
      %1973 = vmatpush1.msra.mxu0 0.0
      %1974 = vmatprep.subr.mxu0 0.0
      %1975 = vmatpush1.msra.mxu0 0.0
      %1976 = vmatprep.subr.mxu0 0.0
      %1977 = vmatpush1.msra.mxu0 0.0
      %1978 = vmatprep.subr.mxu0 0.0
      %1979 = vmatpush1.msra.mxu0 0.0
      %1980 = vmatprep.subr.mxu0 0.0
      %1981 = vmatpush1.msra.mxu0 0.0
      %1982 = vmatprep.subr.mxu0 0.0
      %1983 = vmatpush1.msra.mxu0 0.0
      %1984 = vmatprep.subr.mxu0 0.0
      %1985 = vmatpush1.msra.mxu0 0.0
      %1986 = vmatprep.subr.mxu0 0.0
      %1987 = vmatpush1.msra.mxu0 0.0
      %1988 = vmatprep.subr.mxu0 0.0
      %1989 = vmatpush1.msra.mxu0 0.0
      %1990 = vmatprep.subr.mxu0 0.0
      %1991 = vmatpush1.msra.mxu0 0.0
      %1992 = vmatprep.subr.mxu0 0.0
      %1993 = vmatpush1.msra.mxu0 0.0
      %1994 = vmatprep.subr.mxu0 0.0
      %1995 = vmatpush1.msra.mxu0 0.0
      %1996 = vmatprep.subr.mxu0 0.0
      %1997 = vmatpush1.msra.mxu0 0.0
      %1998 = vmatprep.subr.mxu0 0.0
      %1999 = vmatpush1.msra.mxu0 0.0
      %2000 = vmatprep.subr.mxu0 0.0
      %2001 = vmatpush1.msra.mxu0 0.0
      %2002 = vmatprep.subr.mxu0 0.0
      %2003 = vmatpush1.msra.mxu0 0.0
      %2004 = vmatprep.subr.mxu0 0.0
      %2005 = vmatpush1.msra.mxu0 0.0
      %2006 = vmatprep.subr.mxu0 0.0
      %2007 = vmatpush1.msra.mxu0 0.0
      %2008 = vmatprep.subr.mxu0 0.0
      %2009 = vmatpush1.msra.mxu0 0.0
      %2010 = vmatprep.mubr.f32.mxu0 0.0
      %2011 = vmatmul.mubr.f32.gmra.mrb[0].mxu0 %v1927
      %v2012 = vpop.f32.mrb[0].mxu0
      %v2013 = vadd.f32 0.0, %v2012
      %v2014 = vpop.f32.mrb[0].mxu0
      %2015 = vmatprep.mubr.f32.mxu0 0.0
      %2016 = vmatmul.mubr.f32.gmra.mrb[0].mxu0 %v1929
      %v2017 = vpop.f32.mrb[0].mxu0
      %v2018 = vadd.f32 0.0, %v2017
      %v2019 = vpop.f32.mrb[0].mxu0
      %2020 = vmatprep.mubr.f32.mxu0 0.0
      %2021 = vmatmul.mubr.f32.gmra.mrb[0].mxu0 %v1931
      %v2022 = vpop.f32.mrb[0].mxu0
      %v2023 = vadd.f32 0.0, %v2022
      %v2024 = vpop.f32.mrb[0].mxu0
      %2025 = vmatprep.mubr.f32.mxu0 0.0
      %2026 = vmatmul.mubr.f32.gmra.mrb[0].mxu0 %v1933
      %v2027 = vpop.f32.mrb[0].mxu0
      %v2028 = vadd.f32 0.0, %v2027
      %v2029 = vpop.f32.mrb[0].mxu0
      %2030 = vmatprep.mubr.f32.mxu0 0.0
      %2031 = vmatmul.mubr.f32.gmra.mrb[0].mxu0 %v1935
      %v2032 = vpop.f32.mrb[0].mxu0
      %v2033 = vadd.f32 0.0, %v2032
      %v2034 = vpop.f32.mrb[0].mxu0
      %2035 = vmatprep.mubr.f32.mxu0 0.0
      %2036 = vmatmul.mubr.f32.gmra.mrb[0].mxu0 %v1937
      %v2037 = vpop.f32.mrb[0].mxu0
      %v2038 = vadd.f32 0.0, %v2037
      %v2039 = vpop.f32.mrb[0].mxu0
      %2040 = vmatprep.mubr.f32.mxu0 0.0
      %2041 = vmatmul.mubr.f32.gmra.mrb[0].mxu0 %v1939
      %v2042 = vpop.f32.mrb[0].mxu0
      %v2043 = vadd.f32 0.0, %v2042
      %v2044 = vpop.f32.mrb[0].mxu0
      %2045 = vmatprep.mubr.f32.mxu0 0.0
      %2046 = vmatmul.mubr.f32.gmra.mrb[0].mxu0 %v1941
      %v2047 = vpop.f32.mrb[0].mxu0
      %v2048 = vadd.f32 0.0, %v2047
      %v2049 = vpop.f32.mrb[0].mxu0
      %2050 = vdwg.mxu0
      %v2051 = vadd.f32 %v1893, %v2013
      %v2052 = vadd.f32 %v1894, %v2018
      %v2053 = vadd.f32 %v1895, %v2023
      %v2054 = vadd.f32 %v1896, %v2028
      %v2055 = vadd.f32 %v1897, %v2033
      %v2056 = vadd.f32 %v1898, %v2038
      %v2057 = vadd.f32 %v1899, %v2043
      %v2058 = vadd.f32 %v1900, %v2048
      %s2059 = scalar_lea.vmem %s3, 48
      %v2060 = vld [vmem:[%s2059] sm:$0xf]
      %v2062 = vsel %vm428, %v1589, 0
      %v2065 = vsel %vm445, %v2060, 0
      %2067 = vmatprep.subr.mxu0 0.0
      %2068 = vmatpush1.msra.mxu0 %v2065
      %2069 = vmatprep.subr.mxu0 0.0
      %2070 = vmatpush1.msra.mxu0 0.0
      %2071 = vmatprep.subr.mxu0 0.0
      %2072 = vmatpush1.msra.mxu0 0.0
      %2073 = vmatprep.subr.mxu0 0.0
      %2074 = vmatpush1.msra.mxu0 0.0
      %2075 = vmatprep.subr.mxu0 0.0
      %2076 = vmatpush1.msra.mxu0 0.0
      %2077 = vmatprep.subr.mxu0 0.0
      %2078 = vmatpush1.msra.mxu0 0.0
      %2079 = vmatprep.subr.mxu0 0.0
      %2080 = vmatpush1.msra.mxu0 0.0
      %2081 = vmatprep.subr.mxu0 0.0
      %2082 = vmatpush1.msra.mxu0 0.0
      %2083 = vmatprep.subr.mxu0 0.0
      %2084 = vmatpush1.msra.mxu0 0.0
      %2085 = vmatprep.subr.mxu0 0.0
      %2086 = vmatpush1.msra.mxu0 0.0
      %2087 = vmatprep.subr.mxu0 0.0
      %2088 = vmatpush1.msra.mxu0 0.0
      %2089 = vmatprep.subr.mxu0 0.0
      %2090 = vmatpush1.msra.mxu0 0.0
      %2091 = vmatprep.subr.mxu0 0.0
      %2092 = vmatpush1.msra.mxu0 0.0
      %2093 = vmatprep.subr.mxu0 0.0
      %2094 = vmatpush1.msra.mxu0 0.0
      %2095 = vmatprep.subr.mxu0 0.0
      %2096 = vmatpush1.msra.mxu0 0.0
      %2097 = vmatprep.subr.mxu0 0.0
      %2098 = vmatpush1.msra.mxu0 0.0
      %2099 = vmatprep.subr.mxu0 0.0
      %2100 = vmatpush1.msra.mxu0 0.0
      %2101 = vmatprep.subr.mxu0 0.0
      %2102 = vmatpush1.msra.mxu0 0.0
      %2103 = vmatprep.subr.mxu0 0.0
      %2104 = vmatpush1.msra.mxu0 0.0
      %2105 = vmatprep.subr.mxu0 0.0
      %2106 = vmatpush1.msra.mxu0 0.0
      %2107 = vmatprep.subr.mxu0 0.0
      %2108 = vmatpush1.msra.mxu0 0.0
      %2109 = vmatprep.subr.mxu0 0.0
      %2110 = vmatpush1.msra.mxu0 0.0
      %2111 = vmatprep.subr.mxu0 0.0
      %2112 = vmatpush1.msra.mxu0 0.0
      %2113 = vmatprep.subr.mxu0 0.0
      %2114 = vmatpush1.msra.mxu0 0.0
      %2115 = vmatprep.subr.mxu0 0.0
      %2116 = vmatpush1.msra.mxu0 0.0
      %2117 = vmatprep.subr.mxu0 0.0
      %2118 = vmatpush1.msra.mxu0 0.0
      %2119 = vmatprep.subr.mxu0 0.0
      %2120 = vmatpush1.msra.mxu0 0.0
      %2121 = vmatprep.subr.mxu0 0.0
      %2122 = vmatpush1.msra.mxu0 0.0
      %2123 = vmatprep.subr.mxu0 0.0
      %2124 = vmatpush1.msra.mxu0 0.0
      %2125 = vmatprep.subr.mxu0 0.0
      %2126 = vmatpush1.msra.mxu0 0.0
      %2127 = vmatprep.subr.mxu0 0.0
      %2128 = vmatpush1.msra.mxu0 0.0
      %2129 = vmatprep.subr.mxu0 0.0
      %2130 = vmatpush1.msra.mxu0 0.0
      %2131 = vmatprep.mubr.f32.mxu0 0.0
      %2132 = vmatmul.mubr.f32.gmra.mrb[0].mxu0 %v1599
      %v2133 = vpop.f32.mrb[0].mxu0
      %v2134 = vadd.f32 0.0, %v2133
      %v2135 = vpop.f32.mrb[0].mxu0
      %2136 = vmatprep.mubr.f32.mxu0 0.0
      %2137 = vmatmul.mubr.f32.gmra.mrb[0].mxu0 %v1602
      %v2138 = vpop.f32.mrb[0].mxu0
      %v2139 = vadd.f32 0.0, %v2138
      %v2140 = vpop.f32.mrb[0].mxu0
      %2141 = vmatprep.mubr.f32.mxu0 0.0
      %2142 = vmatmul.mubr.f32.gmra.mrb[0].mxu0 %v1605
      %v2143 = vpop.f32.mrb[0].mxu0
      %v2144 = vadd.f32 0.0, %v2143
      %v2145 = vpop.f32.mrb[0].mxu0
      %2146 = vmatprep.mubr.f32.mxu0 0.0
      %2147 = vmatmul.mubr.f32.gmra.mrb[0].mxu0 %v1608
      %v2148 = vpop.f32.mrb[0].mxu0
      %v2149 = vadd.f32 0.0, %v2148
      %v2150 = vpop.f32.mrb[0].mxu0
      %2151 = vmatprep.mubr.f32.mxu0 0.0
      %2152 = vmatmul.mubr.f32.gmra.mrb[0].mxu0 %v1611
      %v2153 = vpop.f32.mrb[0].mxu0
      %v2154 = vadd.f32 0.0, %v2153
      %v2155 = vpop.f32.mrb[0].mxu0
      %2156 = vmatprep.mubr.f32.mxu0 0.0
      %2157 = vmatmul.mubr.f32.gmra.mrb[0].mxu0 %v1614
      %v2158 = vpop.f32.mrb[0].mxu0
      %v2159 = vadd.f32 0.0, %v2158
      %v2160 = vpop.f32.mrb[0].mxu0
      %2161 = vmatprep.mubr.f32.mxu0 0.0
      %2162 = vmatmul.mubr.f32.gmra.mrb[0].mxu0 %v1617
      %v2163 = vpop.f32.mrb[0].mxu0
      %v2164 = vadd.f32 0.0, %v2163
      %v2165 = vpop.f32.mrb[0].mxu0
      %2166 = vmatprep.mubr.f32.mxu0 0.0
      %2167 = vmatmul.mubr.f32.gmra.mrb[0].mxu0 %v2062
      %v2168 = vpop.f32.mrb[0].mxu0
      %v2169 = vadd.f32 0.0, %v2168
      %v2170 = vpop.f32.mrb[0].mxu0
      %2171 = vdwg.mxu0
      %v2172 = vadd.f32 %v2051, %v2134
      %v2173 = vadd.f32 %v2052, %v2139
      %v2174 = vadd.f32 %v2053, %v2144
      %v2175 = vadd.f32 %v2054, %v2149
      %v2176 = vadd.f32 %v2055, %v2154
      %v2177 = vadd.f32 %v2056, %v2159
      %v2178 = vadd.f32 %v2057, %v2164
      %v2179 = vadd.f32 %v2058, %v2169
      %v2181 = vrot.slane %v1589, 1
      %v2182 = vrot.slane %v1590, 1
      %v2183 = vsel %vm401, %v2181, %v2182
      %s2184 = scalar_lea.vmem %s3, 52
      %v2185 = vld [vmem:[%s2184] sm:$0xf]
      %v2186 = vsel %vm428, %v2183, 0
      %v2189 = vsel %vm445, %v2185, 0
      %2191 = vmatprep.subr.mxu0 0.0
      %2192 = vmatpush1.msra.mxu0 %v2189
      %2193 = vmatprep.subr.mxu0 0.0
      %2194 = vmatpush1.msra.mxu0 0.0
      %2195 = vmatprep.subr.mxu0 0.0
      %2196 = vmatpush1.msra.mxu0 0.0
      %2197 = vmatprep.subr.mxu0 0.0
      %2198 = vmatpush1.msra.mxu0 0.0
      %2199 = vmatprep.subr.mxu0 0.0
      %2200 = vmatpush1.msra.mxu0 0.0
      %2201 = vmatprep.subr.mxu0 0.0
      %2202 = vmatpush1.msra.mxu0 0.0
      %2203 = vmatprep.subr.mxu0 0.0
      %2204 = vmatpush1.msra.mxu0 0.0
      %2205 = vmatprep.subr.mxu0 0.0
      %2206 = vmatpush1.msra.mxu0 0.0
      %2207 = vmatprep.subr.mxu0 0.0
      %2208 = vmatpush1.msra.mxu0 0.0
      %2209 = vmatprep.subr.mxu0 0.0
      %2210 = vmatpush1.msra.mxu0 0.0
      %2211 = vmatprep.subr.mxu0 0.0
      %2212 = vmatpush1.msra.mxu0 0.0
      %2213 = vmatprep.subr.mxu0 0.0
      %2214 = vmatpush1.msra.mxu0 0.0
      %2215 = vmatprep.subr.mxu0 0.0
      %2216 = vmatpush1.msra.mxu0 0.0
      %2217 = vmatprep.subr.mxu0 0.0
      %2218 = vmatpush1.msra.mxu0 0.0
      %2219 = vmatprep.subr.mxu0 0.0
      %2220 = vmatpush1.msra.mxu0 0.0
      %2221 = vmatprep.subr.mxu0 0.0
      %2222 = vmatpush1.msra.mxu0 0.0
      %2223 = vmatprep.subr.mxu0 0.0
      %2224 = vmatpush1.msra.mxu0 0.0
      %2225 = vmatprep.subr.mxu0 0.0
      %2226 = vmatpush1.msra.mxu0 0.0
      %2227 = vmatprep.subr.mxu0 0.0
      %2228 = vmatpush1.msra.mxu0 0.0
      %2229 = vmatprep.subr.mxu0 0.0
      %2230 = vmatpush1.msra.mxu0 0.0
      %2231 = vmatprep.subr.mxu0 0.0
      %2232 = vmatpush1.msra.mxu0 0.0
      %2233 = vmatprep.subr.mxu0 0.0
      %2234 = vmatpush1.msra.mxu0 0.0
      %2235 = vmatprep.subr.mxu0 0.0
      %2236 = vmatpush1.msra.mxu0 0.0
      %2237 = vmatprep.subr.mxu0 0.0
      %2238 = vmatpush1.msra.mxu0 0.0
      %2239 = vmatprep.subr.mxu0 0.0
      %2240 = vmatpush1.msra.mxu0 0.0
      %2241 = vmatprep.subr.mxu0 0.0
      %2242 = vmatpush1.msra.mxu0 0.0
      %2243 = vmatprep.subr.mxu0 0.0
      %2244 = vmatpush1.msra.mxu0 0.0
      %2245 = vmatprep.subr.mxu0 0.0
      %2246 = vmatpush1.msra.mxu0 0.0
      %2247 = vmatprep.subr.mxu0 0.0
      %2248 = vmatpush1.msra.mxu0 0.0
      %2249 = vmatprep.subr.mxu0 0.0
      %2250 = vmatpush1.msra.mxu0 0.0
      %2251 = vmatprep.subr.mxu0 0.0
      %2252 = vmatpush1.msra.mxu0 0.0
      %2253 = vmatprep.subr.mxu0 0.0
      %2254 = vmatpush1.msra.mxu0 0.0
      %2255 = vmatprep.mubr.f32.mxu0 0.0
      %2256 = vmatmul.mubr.f32.gmra.mrb[0].mxu0 %v1771
      %v2257 = vpop.f32.mrb[0].mxu0
      %v2258 = vadd.f32 0.0, %v2257
      %v2259 = vpop.f32.mrb[0].mxu0
      %2260 = vmatprep.mubr.f32.mxu0 0.0
      %2261 = vmatmul.mubr.f32.gmra.mrb[0].mxu0 %v1773
      %v2262 = vpop.f32.mrb[0].mxu0
      %v2263 = vadd.f32 0.0, %v2262
      %v2264 = vpop.f32.mrb[0].mxu0
      %2265 = vmatprep.mubr.f32.mxu0 0.0
      %2266 = vmatmul.mubr.f32.gmra.mrb[0].mxu0 %v1775
      %v2267 = vpop.f32.mrb[0].mxu0
      %v2268 = vadd.f32 0.0, %v2267
      %v2269 = vpop.f32.mrb[0].mxu0
      %2270 = vmatprep.mubr.f32.mxu0 0.0
      %2271 = vmatmul.mubr.f32.gmra.mrb[0].mxu0 %v1777
      %v2272 = vpop.f32.mrb[0].mxu0
      %v2273 = vadd.f32 0.0, %v2272
      %v2274 = vpop.f32.mrb[0].mxu0
      %2275 = vmatprep.mubr.f32.mxu0 0.0
      %2276 = vmatmul.mubr.f32.gmra.mrb[0].mxu0 %v1779
      %v2277 = vpop.f32.mrb[0].mxu0
      %v2278 = vadd.f32 0.0, %v2277
      %v2279 = vpop.f32.mrb[0].mxu0
      %2280 = vmatprep.mubr.f32.mxu0 0.0
      %2281 = vmatmul.mubr.f32.gmra.mrb[0].mxu0 %v1781
      %v2282 = vpop.f32.mrb[0].mxu0
      %v2283 = vadd.f32 0.0, %v2282
      %v2284 = vpop.f32.mrb[0].mxu0
      %2285 = vmatprep.mubr.f32.mxu0 0.0
      %2286 = vmatmul.mubr.f32.gmra.mrb[0].mxu0 %v1783
      %v2287 = vpop.f32.mrb[0].mxu0
      %v2288 = vadd.f32 0.0, %v2287
      %v2289 = vpop.f32.mrb[0].mxu0
      %2290 = vmatprep.mubr.f32.mxu0 0.0
      %2291 = vmatmul.mubr.f32.gmra.mrb[0].mxu0 %v2186
      %v2292 = vpop.f32.mrb[0].mxu0
      %v2293 = vadd.f32 0.0, %v2292
      %v2294 = vpop.f32.mrb[0].mxu0
      %2295 = vdwg.mxu0
      %v2296 = vadd.f32 %v2172, %v2258
      %v2297 = vadd.f32 %v2173, %v2263
      %v2298 = vadd.f32 %v2174, %v2268
      %v2299 = vadd.f32 %v2175, %v2273
      %v2300 = vadd.f32 %v2176, %v2278
      %v2301 = vadd.f32 %v2177, %v2283
      %v2302 = vadd.f32 %v2178, %v2288
      %v2303 = vadd.f32 %v2179, %v2293
      %v2304 = vrot.slane %v1589, 2
      %v2305 = vrot.slane %v1590, 2
      %v2306 = vsel %vm678, %v2304, %v2305
      %s2307 = scalar_lea.vmem %s3, 56
      %v2308 = vld [vmem:[%s2307] sm:$0xf]
      %v2309 = vsel %vm428, %v2306, 0
      %v2312 = vsel %vm445, %v2308, 0
      %2314 = vmatprep.subr.mxu0 0.0
      %2315 = vmatpush1.msra.mxu0 %v2312
      %2316 = vmatprep.subr.mxu0 0.0
      %2317 = vmatpush1.msra.mxu0 0.0
      %2318 = vmatprep.subr.mxu0 0.0
      %2319 = vmatpush1.msra.mxu0 0.0
      %2320 = vmatprep.subr.mxu0 0.0
      %2321 = vmatpush1.msra.mxu0 0.0
      %2322 = vmatprep.subr.mxu0 0.0
      %2323 = vmatpush1.msra.mxu0 0.0
      %2324 = vmatprep.subr.mxu0 0.0
      %2325 = vmatpush1.msra.mxu0 0.0
      %2326 = vmatprep.subr.mxu0 0.0
      %2327 = vmatpush1.msra.mxu0 0.0
      %2328 = vmatprep.subr.mxu0 0.0
      %2329 = vmatpush1.msra.mxu0 0.0
      %2330 = vmatprep.subr.mxu0 0.0
      %2331 = vmatpush1.msra.mxu0 0.0
      %2332 = vmatprep.subr.mxu0 0.0
      %2333 = vmatpush1.msra.mxu0 0.0
      %2334 = vmatprep.subr.mxu0 0.0
      %2335 = vmatpush1.msra.mxu0 0.0
      %2336 = vmatprep.subr.mxu0 0.0
      %2337 = vmatpush1.msra.mxu0 0.0
      %2338 = vmatprep.subr.mxu0 0.0
      %2339 = vmatpush1.msra.mxu0 0.0
      %2340 = vmatprep.subr.mxu0 0.0
      %2341 = vmatpush1.msra.mxu0 0.0
      %2342 = vmatprep.subr.mxu0 0.0
      %2343 = vmatpush1.msra.mxu0 0.0
      %2344 = vmatprep.subr.mxu0 0.0
      %2345 = vmatpush1.msra.mxu0 0.0
      %2346 = vmatprep.subr.mxu0 0.0
      %2347 = vmatpush1.msra.mxu0 0.0
      %2348 = vmatprep.subr.mxu0 0.0
      %2349 = vmatpush1.msra.mxu0 0.0
      %2350 = vmatprep.subr.mxu0 0.0
      %2351 = vmatpush1.msra.mxu0 0.0
      %2352 = vmatprep.subr.mxu0 0.0
      %2353 = vmatpush1.msra.mxu0 0.0
      %2354 = vmatprep.subr.mxu0 0.0
      %2355 = vmatpush1.msra.mxu0 0.0
      %2356 = vmatprep.subr.mxu0 0.0
      %2357 = vmatpush1.msra.mxu0 0.0
      %2358 = vmatprep.subr.mxu0 0.0
      %2359 = vmatpush1.msra.mxu0 0.0
      %2360 = vmatprep.subr.mxu0 0.0
      %2361 = vmatpush1.msra.mxu0 0.0
      %2362 = vmatprep.subr.mxu0 0.0
      %2363 = vmatpush1.msra.mxu0 0.0
      %2364 = vmatprep.subr.mxu0 0.0
      %2365 = vmatpush1.msra.mxu0 0.0
      %2366 = vmatprep.subr.mxu0 0.0
      %2367 = vmatpush1.msra.mxu0 0.0
      %2368 = vmatprep.subr.mxu0 0.0
      %2369 = vmatpush1.msra.mxu0 0.0
      %2370 = vmatprep.subr.mxu0 0.0
      %2371 = vmatpush1.msra.mxu0 0.0
      %2372 = vmatprep.subr.mxu0 0.0
      %2373 = vmatpush1.msra.mxu0 0.0
      %2374 = vmatprep.subr.mxu0 0.0
      %2375 = vmatpush1.msra.mxu0 0.0
      %2376 = vmatprep.subr.mxu0 0.0
      %2377 = vmatpush1.msra.mxu0 0.0
      %2378 = vmatprep.mubr.f32.mxu0 0.0
      %2379 = vmatmul.mubr.f32.gmra.mrb[0].mxu0 %v1929
      %v2380 = vpop.f32.mrb[0].mxu0
      %v2381 = vadd.f32 0.0, %v2380
      %v2382 = vpop.f32.mrb[0].mxu0
      %2383 = vmatprep.mubr.f32.mxu0 0.0
      %2384 = vmatmul.mubr.f32.gmra.mrb[0].mxu0 %v1931
      %v2385 = vpop.f32.mrb[0].mxu0
      %v2386 = vadd.f32 0.0, %v2385
      %v2387 = vpop.f32.mrb[0].mxu0
      %2388 = vmatprep.mubr.f32.mxu0 0.0
      %2389 = vmatmul.mubr.f32.gmra.mrb[0].mxu0 %v1933
      %v2390 = vpop.f32.mrb[0].mxu0
      %v2391 = vadd.f32 0.0, %v2390
      %v2392 = vpop.f32.mrb[0].mxu0
      %2393 = vmatprep.mubr.f32.mxu0 0.0
      %2394 = vmatmul.mubr.f32.gmra.mrb[0].mxu0 %v1935
      %v2395 = vpop.f32.mrb[0].mxu0
      %v2396 = vadd.f32 0.0, %v2395
      %v2397 = vpop.f32.mrb[0].mxu0
      %2398 = vmatprep.mubr.f32.mxu0 0.0
      %2399 = vmatmul.mubr.f32.gmra.mrb[0].mxu0 %v1937
      %v2400 = vpop.f32.mrb[0].mxu0
      %v2401 = vadd.f32 0.0, %v2400
      %v2402 = vpop.f32.mrb[0].mxu0
      %2403 = vmatprep.mubr.f32.mxu0 0.0
      %2404 = vmatmul.mubr.f32.gmra.mrb[0].mxu0 %v1939
      %v2405 = vpop.f32.mrb[0].mxu0
      %v2406 = vadd.f32 0.0, %v2405
      %v2407 = vpop.f32.mrb[0].mxu0
      %2408 = vmatprep.mubr.f32.mxu0 0.0
      %2409 = vmatmul.mubr.f32.gmra.mrb[0].mxu0 %v1941
      %v2410 = vpop.f32.mrb[0].mxu0
      %v2411 = vadd.f32 0.0, %v2410
      %v2412 = vpop.f32.mrb[0].mxu0
      %2413 = vmatprep.mubr.f32.mxu0 0.0
      %2414 = vmatmul.mubr.f32.gmra.mrb[0].mxu0 %v2309
      %v2415 = vpop.f32.mrb[0].mxu0
      %v2416 = vadd.f32 0.0, %v2415
      %v2417 = vpop.f32.mrb[0].mxu0
      %2418 = vdwg.mxu0
      %v2419 = vadd.f32 %v2296, %v2381
      %v2420 = vadd.f32 %v2297, %v2386
      %v2421 = vadd.f32 %v2298, %v2391
      %v2422 = vadd.f32 %v2299, %v2396
      %v2423 = vadd.f32 %v2300, %v2401
      %v2424 = vadd.f32 %v2301, %v2406
      %v2425 = vadd.f32 %v2302, %v2411
      %v2426 = vadd.f32 %v2303, %v2416
      %s2427 = scalar_lea.vmem %s3, 60
      %v2428 = vld [vmem:[%s2427] sm:$0xf]
      %v2430 = vsel %vm428, %v1591, 0
      %v2433 = vsel %vm445, %v2428, 0
      %2435 = vmatprep.subr.mxu0 0.0
      %2436 = vmatpush1.msra.mxu0 %v2433
      %2437 = vmatprep.subr.mxu0 0.0
      %2438 = vmatpush1.msra.mxu0 0.0
      %2439 = vmatprep.subr.mxu0 0.0
      %2440 = vmatpush1.msra.mxu0 0.0
      %2441 = vmatprep.subr.mxu0 0.0
      %2442 = vmatpush1.msra.mxu0 0.0
      %2443 = vmatprep.subr.mxu0 0.0
      %2444 = vmatpush1.msra.mxu0 0.0
      %2445 = vmatprep.subr.mxu0 0.0
      %2446 = vmatpush1.msra.mxu0 0.0
      %2447 = vmatprep.subr.mxu0 0.0
      %2448 = vmatpush1.msra.mxu0 0.0
      %2449 = vmatprep.subr.mxu0 0.0
      %2450 = vmatpush1.msra.mxu0 0.0
      %2451 = vmatprep.subr.mxu0 0.0
      %2452 = vmatpush1.msra.mxu0 0.0
      %2453 = vmatprep.subr.mxu0 0.0
      %2454 = vmatpush1.msra.mxu0 0.0
      %2455 = vmatprep.subr.mxu0 0.0
      %2456 = vmatpush1.msra.mxu0 0.0
      %2457 = vmatprep.subr.mxu0 0.0
      %2458 = vmatpush1.msra.mxu0 0.0
      %2459 = vmatprep.subr.mxu0 0.0
      %2460 = vmatpush1.msra.mxu0 0.0
      %2461 = vmatprep.subr.mxu0 0.0
      %2462 = vmatpush1.msra.mxu0 0.0
      %2463 = vmatprep.subr.mxu0 0.0
      %2464 = vmatpush1.msra.mxu0 0.0
      %2465 = vmatprep.subr.mxu0 0.0
      %2466 = vmatpush1.msra.mxu0 0.0
      %2467 = vmatprep.subr.mxu0 0.0
      %2468 = vmatpush1.msra.mxu0 0.0
      %2469 = vmatprep.subr.mxu0 0.0
      %2470 = vmatpush1.msra.mxu0 0.0
      %2471 = vmatprep.subr.mxu0 0.0
      %2472 = vmatpush1.msra.mxu0 0.0
      %2473 = vmatprep.subr.mxu0 0.0
      %2474 = vmatpush1.msra.mxu0 0.0
      %2475 = vmatprep.subr.mxu0 0.0
      %2476 = vmatpush1.msra.mxu0 0.0
      %2477 = vmatprep.subr.mxu0 0.0
      %2478 = vmatpush1.msra.mxu0 0.0
      %2479 = vmatprep.subr.mxu0 0.0
      %2480 = vmatpush1.msra.mxu0 0.0
      %2481 = vmatprep.subr.mxu0 0.0
      %2482 = vmatpush1.msra.mxu0 0.0
      %2483 = vmatprep.subr.mxu0 0.0
      %2484 = vmatpush1.msra.mxu0 0.0
      %2485 = vmatprep.subr.mxu0 0.0
      %2486 = vmatpush1.msra.mxu0 0.0
      %2487 = vmatprep.subr.mxu0 0.0
      %2488 = vmatpush1.msra.mxu0 0.0
      %2489 = vmatprep.subr.mxu0 0.0
      %2490 = vmatpush1.msra.mxu0 0.0
      %2491 = vmatprep.subr.mxu0 0.0
      %2492 = vmatpush1.msra.mxu0 0.0
      %2493 = vmatprep.subr.mxu0 0.0
      %2494 = vmatpush1.msra.mxu0 0.0
      %2495 = vmatprep.subr.mxu0 0.0
      %2496 = vmatpush1.msra.mxu0 0.0
      %2497 = vmatprep.subr.mxu0 0.0
      %2498 = vmatpush1.msra.mxu0 0.0
      %2499 = vmatprep.mubr.f32.mxu0 0.0
      %2500 = vmatmul.mubr.f32.gmra.mrb[0].mxu0 %v1602
      %v2501 = vpop.f32.mrb[0].mxu0
      %v2502 = vadd.f32 0.0, %v2501
      %v2503 = vpop.f32.mrb[0].mxu0
      %2504 = vmatprep.mubr.f32.mxu0 0.0
      %2505 = vmatmul.mubr.f32.gmra.mrb[0].mxu0 %v1605
      %v2506 = vpop.f32.mrb[0].mxu0
      %v2507 = vadd.f32 0.0, %v2506
      %v2508 = vpop.f32.mrb[0].mxu0
      %2509 = vmatprep.mubr.f32.mxu0 0.0
      %2510 = vmatmul.mubr.f32.gmra.mrb[0].mxu0 %v1608
      %v2511 = vpop.f32.mrb[0].mxu0
      %v2512 = vadd.f32 0.0, %v2511
      %v2513 = vpop.f32.mrb[0].mxu0
      %2514 = vmatprep.mubr.f32.mxu0 0.0
      %2515 = vmatmul.mubr.f32.gmra.mrb[0].mxu0 %v1611
      %v2516 = vpop.f32.mrb[0].mxu0
      %v2517 = vadd.f32 0.0, %v2516
      %v2518 = vpop.f32.mrb[0].mxu0
      %2519 = vmatprep.mubr.f32.mxu0 0.0
      %2520 = vmatmul.mubr.f32.gmra.mrb[0].mxu0 %v1614
      %v2521 = vpop.f32.mrb[0].mxu0
      %v2522 = vadd.f32 0.0, %v2521
      %v2523 = vpop.f32.mrb[0].mxu0
      %2524 = vmatprep.mubr.f32.mxu0 0.0
      %2525 = vmatmul.mubr.f32.gmra.mrb[0].mxu0 %v1617
      %v2526 = vpop.f32.mrb[0].mxu0
      %v2527 = vadd.f32 0.0, %v2526
      %v2528 = vpop.f32.mrb[0].mxu0
      %2529 = vmatprep.mubr.f32.mxu0 0.0
      %2530 = vmatmul.mubr.f32.gmra.mrb[0].mxu0 %v2062
      %v2531 = vpop.f32.mrb[0].mxu0
      %v2532 = vadd.f32 0.0, %v2531
      %v2533 = vpop.f32.mrb[0].mxu0
      %2534 = vmatprep.mubr.f32.mxu0 0.0
      %2535 = vmatmul.mubr.f32.gmra.mrb[0].mxu0 %v2430
      %v2536 = vpop.f32.mrb[0].mxu0
      %v2537 = vadd.f32 0.0, %v2536
      %v2538 = vpop.f32.mrb[0].mxu0
      %2539 = vdwg.mxu0
      %v2540 = vadd.f32 %v2419, %v2502
      %v2541 = vadd.f32 %v2420, %v2507
      %v2542 = vadd.f32 %v2421, %v2512
      %v2543 = vadd.f32 %v2422, %v2517
      %v2544 = vadd.f32 %v2423, %v2522
      %v2545 = vadd.f32 %v2424, %v2527
      %v2546 = vadd.f32 %v2425, %v2532
      %v2547 = vadd.f32 %v2426, %v2537
      %v2549 = vrot.slane %v1591, 1
      %v2550 = vrot.slane %v1592, 1
      %v2551 = vsel %vm401, %v2549, %v2550
      %s2552 = scalar_lea.vmem %s3, 64
      %v2553 = vld [vmem:[%s2552] sm:$0xf]
      %v2554 = vsel %vm428, %v2551, 0
      %v2557 = vsel %vm445, %v2553, 0
      %2559 = vmatprep.subr.mxu0 0.0
      %2560 = vmatpush1.msra.mxu0 %v2557
      %2561 = vmatprep.subr.mxu0 0.0
      %2562 = vmatpush1.msra.mxu0 0.0
      %2563 = vmatprep.subr.mxu0 0.0
      %2564 = vmatpush1.msra.mxu0 0.0
      %2565 = vmatprep.subr.mxu0 0.0
      %2566 = vmatpush1.msra.mxu0 0.0
      %2567 = vmatprep.subr.mxu0 0.0
      %2568 = vmatpush1.msra.mxu0 0.0
      %2569 = vmatprep.subr.mxu0 0.0
      %2570 = vmatpush1.msra.mxu0 0.0
      %2571 = vmatprep.subr.mxu0 0.0
      %2572 = vmatpush1.msra.mxu0 0.0
      %2573 = vmatprep.subr.mxu0 0.0
      %2574 = vmatpush1.msra.mxu0 0.0
      %2575 = vmatprep.subr.mxu0 0.0
      %2576 = vmatpush1.msra.mxu0 0.0
      %2577 = vmatprep.subr.mxu0 0.0
      %2578 = vmatpush1.msra.mxu0 0.0
      %2579 = vmatprep.subr.mxu0 0.0
      %2580 = vmatpush1.msra.mxu0 0.0
      %2581 = vmatprep.subr.mxu0 0.0
      %2582 = vmatpush1.msra.mxu0 0.0
      %2583 = vmatprep.subr.mxu0 0.0
      %2584 = vmatpush1.msra.mxu0 0.0
      %2585 = vmatprep.subr.mxu0 0.0
      %2586 = vmatpush1.msra.mxu0 0.0
      %2587 = vmatprep.subr.mxu0 0.0
      %2588 = vmatpush1.msra.mxu0 0.0
      %2589 = vmatprep.subr.mxu0 0.0
      %2590 = vmatpush1.msra.mxu0 0.0
      %2591 = vmatprep.subr.mxu0 0.0
      %2592 = vmatpush1.msra.mxu0 0.0
      %2593 = vmatprep.subr.mxu0 0.0
      %2594 = vmatpush1.msra.mxu0 0.0
      %2595 = vmatprep.subr.mxu0 0.0
      %2596 = vmatpush1.msra.mxu0 0.0
      %2597 = vmatprep.subr.mxu0 0.0
      %2598 = vmatpush1.msra.mxu0 0.0
      %2599 = vmatprep.subr.mxu0 0.0
      %2600 = vmatpush1.msra.mxu0 0.0
      %2601 = vmatprep.subr.mxu0 0.0
      %2602 = vmatpush1.msra.mxu0 0.0
      %2603 = vmatprep.subr.mxu0 0.0
      %2604 = vmatpush1.msra.mxu0 0.0
      %2605 = vmatprep.subr.mxu0 0.0
      %2606 = vmatpush1.msra.mxu0 0.0
      %2607 = vmatprep.subr.mxu0 0.0
      %2608 = vmatpush1.msra.mxu0 0.0
      %2609 = vmatprep.subr.mxu0 0.0
      %2610 = vmatpush1.msra.mxu0 0.0
      %2611 = vmatprep.subr.mxu0 0.0
      %2612 = vmatpush1.msra.mxu0 0.0
      %2613 = vmatprep.subr.mxu0 0.0
      %2614 = vmatpush1.msra.mxu0 0.0
      %2615 = vmatprep.subr.mxu0 0.0
      %2616 = vmatpush1.msra.mxu0 0.0
      %2617 = vmatprep.subr.mxu0 0.0
      %2618 = vmatpush1.msra.mxu0 0.0
      %2619 = vmatprep.subr.mxu0 0.0
      %2620 = vmatpush1.msra.mxu0 0.0
      %2621 = vmatprep.subr.mxu0 0.0
      %2622 = vmatpush1.msra.mxu0 0.0
      %2623 = vmatprep.mubr.f32.mxu0 0.0
      %2624 = vmatmul.mubr.f32.gmra.mrb[0].mxu0 %v1773
      %v2625 = vpop.f32.mrb[0].mxu0
      %v2626 = vadd.f32 0.0, %v2625
      %v2627 = vpop.f32.mrb[0].mxu0
      %2628 = vmatprep.mubr.f32.mxu0 0.0
      %2629 = vmatmul.mubr.f32.gmra.mrb[0].mxu0 %v1775
      %v2630 = vpop.f32.mrb[0].mxu0
      %v2631 = vadd.f32 0.0, %v2630
      %v2632 = vpop.f32.mrb[0].mxu0
      %2633 = vmatprep.mubr.f32.mxu0 0.0
      %2634 = vmatmul.mubr.f32.gmra.mrb[0].mxu0 %v1777
      %v2635 = vpop.f32.mrb[0].mxu0
      %v2636 = vadd.f32 0.0, %v2635
      %v2637 = vpop.f32.mrb[0].mxu0
      %2638 = vmatprep.mubr.f32.mxu0 0.0
      %2639 = vmatmul.mubr.f32.gmra.mrb[0].mxu0 %v1779
      %v2640 = vpop.f32.mrb[0].mxu0
      %v2641 = vadd.f32 0.0, %v2640
      %v2642 = vpop.f32.mrb[0].mxu0
      %2643 = vmatprep.mubr.f32.mxu0 0.0
      %2644 = vmatmul.mubr.f32.gmra.mrb[0].mxu0 %v1781
      %v2645 = vpop.f32.mrb[0].mxu0
      %v2646 = vadd.f32 0.0, %v2645
      %v2647 = vpop.f32.mrb[0].mxu0
      %2648 = vmatprep.mubr.f32.mxu0 0.0
      %2649 = vmatmul.mubr.f32.gmra.mrb[0].mxu0 %v1783
      %v2650 = vpop.f32.mrb[0].mxu0
      %v2651 = vadd.f32 0.0, %v2650
      %v2652 = vpop.f32.mrb[0].mxu0
      %2653 = vmatprep.mubr.f32.mxu0 0.0
      %2654 = vmatmul.mubr.f32.gmra.mrb[0].mxu0 %v2186
      %v2655 = vpop.f32.mrb[0].mxu0
      %v2656 = vadd.f32 0.0, %v2655
      %v2657 = vpop.f32.mrb[0].mxu0
      %2658 = vmatprep.mubr.f32.mxu0 0.0
      %2659 = vmatmul.mubr.f32.gmra.mrb[0].mxu0 %v2554
      %v2660 = vpop.f32.mrb[0].mxu0
      %v2661 = vadd.f32 0.0, %v2660
      %v2662 = vpop.f32.mrb[0].mxu0
      %2663 = vdwg.mxu0
      %v2664 = vadd.f32 %v2540, %v2626
      %v2665 = vadd.f32 %v2541, %v2631
      %v2666 = vadd.f32 %v2542, %v2636
      %v2667 = vadd.f32 %v2543, %v2641
      %v2668 = vadd.f32 %v2544, %v2646
      %v2669 = vadd.f32 %v2545, %v2651
      %v2670 = vadd.f32 %v2546, %v2656
      %v2671 = vadd.f32 %v2547, %v2661
      %v2672 = vrot.slane %v1591, 2
      %v2673 = vrot.slane %v1592, 2
      %v2674 = vsel %vm678, %v2672, %v2673
      %s2675 = scalar_lea.vmem %s3, 68
      %v2676 = vld [vmem:[%s2675] sm:$0xf]
      %v2677 = vsel %vm428, %v2674, 0
      %v2680 = vsel %vm445, %v2676, 0
      %2682 = vmatprep.subr.mxu0 0.0
      %2683 = vmatpush1.msra.mxu0 %v2680
      %2684 = vmatprep.subr.mxu0 0.0
      %2685 = vmatpush1.msra.mxu0 0.0
      %2686 = vmatprep.subr.mxu0 0.0
      %2687 = vmatpush1.msra.mxu0 0.0
      %2688 = vmatprep.subr.mxu0 0.0
      %2689 = vmatpush1.msra.mxu0 0.0
      %2690 = vmatprep.subr.mxu0 0.0
      %2691 = vmatpush1.msra.mxu0 0.0
      %2692 = vmatprep.subr.mxu0 0.0
      %2693 = vmatpush1.msra.mxu0 0.0
      %2694 = vmatprep.subr.mxu0 0.0
      %2695 = vmatpush1.msra.mxu0 0.0
      %2696 = vmatprep.subr.mxu0 0.0
      %2697 = vmatpush1.msra.mxu0 0.0
      %2698 = vmatprep.subr.mxu0 0.0
      %2699 = vmatpush1.msra.mxu0 0.0
      %2700 = vmatprep.subr.mxu0 0.0
      %2701 = vmatpush1.msra.mxu0 0.0
      %2702 = vmatprep.subr.mxu0 0.0
      %2703 = vmatpush1.msra.mxu0 0.0
      %2704 = vmatprep.subr.mxu0 0.0
      %2705 = vmatpush1.msra.mxu0 0.0
      %2706 = vmatprep.subr.mxu0 0.0
      %2707 = vmatpush1.msra.mxu0 0.0
      %2708 = vmatprep.subr.mxu0 0.0
      %2709 = vmatpush1.msra.mxu0 0.0
      %2710 = vmatprep.subr.mxu0 0.0
      %2711 = vmatpush1.msra.mxu0 0.0
      %2712 = vmatprep.subr.mxu0 0.0
      %2713 = vmatpush1.msra.mxu0 0.0
      %2714 = vmatprep.subr.mxu0 0.0
      %2715 = vmatpush1.msra.mxu0 0.0
      %2716 = vmatprep.subr.mxu0 0.0
      %2717 = vmatpush1.msra.mxu0 0.0
      %2718 = vmatprep.subr.mxu0 0.0
      %2719 = vmatpush1.msra.mxu0 0.0
      %2720 = vmatprep.subr.mxu0 0.0
      %2721 = vmatpush1.msra.mxu0 0.0
      %2722 = vmatprep.subr.mxu0 0.0
      %2723 = vmatpush1.msra.mxu0 0.0
      %2724 = vmatprep.subr.mxu0 0.0
      %2725 = vmatpush1.msra.mxu0 0.0
      %2726 = vmatprep.subr.mxu0 0.0
      %2727 = vmatpush1.msra.mxu0 0.0
      %2728 = vmatprep.subr.mxu0 0.0
      %2729 = vmatpush1.msra.mxu0 0.0
      %2730 = vmatprep.subr.mxu0 0.0
      %2731 = vmatpush1.msra.mxu0 0.0
      %2732 = vmatprep.subr.mxu0 0.0
      %2733 = vmatpush1.msra.mxu0 0.0
      %2734 = vmatprep.subr.mxu0 0.0
      %2735 = vmatpush1.msra.mxu0 0.0
      %2736 = vmatprep.subr.mxu0 0.0
      %2737 = vmatpush1.msra.mxu0 0.0
      %2738 = vmatprep.subr.mxu0 0.0
      %2739 = vmatpush1.msra.mxu0 0.0
      %2740 = vmatprep.subr.mxu0 0.0
      %2741 = vmatpush1.msra.mxu0 0.0
      %2742 = vmatprep.subr.mxu0 0.0
      %2743 = vmatpush1.msra.mxu0 0.0
      %2744 = vmatprep.subr.mxu0 0.0
      %2745 = vmatpush1.msra.mxu0 0.0
      %2746 = vmatprep.mubr.f32.mxu0 0.0
      %2747 = vmatmul.mubr.f32.gmra.mrb[0].mxu0 %v1931
      %v2748 = vpop.f32.mrb[0].mxu0
      %v2749 = vadd.f32 0.0, %v2748
      %v2750 = vpop.f32.mrb[0].mxu0
      %2751 = vmatprep.mubr.f32.mxu0 0.0
      %2752 = vmatmul.mubr.f32.gmra.mrb[0].mxu0 %v1933
      %v2753 = vpop.f32.mrb[0].mxu0
      %v2754 = vadd.f32 0.0, %v2753
      %v2755 = vpop.f32.mrb[0].mxu0
      %2756 = vmatprep.mubr.f32.mxu0 0.0
      %2757 = vmatmul.mubr.f32.gmra.mrb[0].mxu0 %v1935
      %v2758 = vpop.f32.mrb[0].mxu0
      %v2759 = vadd.f32 0.0, %v2758
      %v2760 = vpop.f32.mrb[0].mxu0
      %2761 = vmatprep.mubr.f32.mxu0 0.0
      %2762 = vmatmul.mubr.f32.gmra.mrb[0].mxu0 %v1937
      %v2763 = vpop.f32.mrb[0].mxu0
      %v2764 = vadd.f32 0.0, %v2763
      %v2765 = vpop.f32.mrb[0].mxu0
      %2766 = vmatprep.mubr.f32.mxu0 0.0
      %2767 = vmatmul.mubr.f32.gmra.mrb[0].mxu0 %v1939
      %v2768 = vpop.f32.mrb[0].mxu0
      %v2769 = vadd.f32 0.0, %v2768
      %v2770 = vpop.f32.mrb[0].mxu0
      %2771 = vmatprep.mubr.f32.mxu0 0.0
      %2772 = vmatmul.mubr.f32.gmra.mrb[0].mxu0 %v1941
      %v2773 = vpop.f32.mrb[0].mxu0
      %v2774 = vadd.f32 0.0, %v2773
      %v2775 = vpop.f32.mrb[0].mxu0
      %2776 = vmatprep.mubr.f32.mxu0 0.0
      %2777 = vmatmul.mubr.f32.gmra.mrb[0].mxu0 %v2309
      %v2778 = vpop.f32.mrb[0].mxu0
      %v2779 = vadd.f32 0.0, %v2778
      %v2780 = vpop.f32.mrb[0].mxu0
      %2781 = vmatprep.mubr.f32.mxu0 0.0
      %2782 = vmatmul.mubr.f32.gmra.mrb[0].mxu0 %v2677
      %v2783 = vpop.f32.mrb[0].mxu0
      %v2784 = vadd.f32 0.0, %v2783
      %v2785 = vpop.f32.mrb[0].mxu0
      %2786 = vdwg.mxu0
      %v2787 = vadd.f32 %v2664, %v2749
      %v2788 = vadd.f32 %v2665, %v2754
      %v2789 = vadd.f32 %v2666, %v2759
      %v2790 = vadd.f32 %v2667, %v2764
      %v2791 = vadd.f32 %v2668, %v2769
      %v2792 = vadd.f32 %v2669, %v2774
      %v2793 = vadd.f32 %v2670, %v2779
      %v2794 = vadd.f32 %v2671, %v2784
      %v2795 = vld [vmem:[%s345] sm:$0xff]
      %v2796 = vld [vmem:[%s345 + $0x8] sm:$0x3]
      %v2797 = vld [vmem:[%s345 + $0x10] sm:$0xff]
      %v2798 = vld [vmem:[%s345 + $0x18] sm:$0x3]
      %v2799 = vld [vmem:[%s345 + $0x20] sm:$0xff]
      %v2800 = vld [vmem:[%s345 + $0x28] sm:$0x3]
      %v2801 = vld [vmem:[%s345 + $0x30] sm:$0xff]
      %v2802 = vld [vmem:[%s345 + $0x38] sm:$0x3]
      %v2803 = vld [vmem:[%s345 + $0x40] sm:$0xff]
      %v2804 = vld [vmem:[%s345 + $0x48] sm:$0x3]
      %v2805 = vld [vmem:[%s345 + $0x50] sm:$0xff]
      %v2806 = vld [vmem:[%s345 + $0x58] sm:$0x3]
      %v2807 = vld [vmem:[%s345 + $0x60] sm:$0xff]
      %v2808 = vld [vmem:[%s345 + $0x68] sm:$0x3]
      %v2809 = vld [vmem:[%s345 + $0x70] sm:$0xff]
      %v2810 = vld [vmem:[%s345 + $0x78] sm:$0x3]
      %v2811 = vld [vmem:[%s345 + $0x80] sm:$0xff]
      %v2812 = vld [vmem:[%s345 + $0x88] sm:$0x3]
      %v2813 = vld [vmem:[%s345 + $0x90] sm:$0xff]
      %v2814 = vld [vmem:[%s345 + $0x98] sm:$0x3]
      %s2815 = scalar_lea.vmem %s3, 72
      %v2816 = vld [vmem:[%s2815] sm:$0xf]
      %v2818 = vsel %vm428, %v2795, 0
      %v2821 = vsel %vm428, %v2797, 0
      %v2824 = vsel %vm428, %v2799, 0
      %v2827 = vsel %vm428, %v2801, 0
      %v2830 = vsel %vm428, %v2803, 0
      %v2833 = vsel %vm428, %v2805, 0
      %v2836 = vsel %vm428, %v2807, 0
      %v2839 = vsel %vm428, %v2809, 0
      %v2842 = vsel %vm445, %v2816, 0
      %2844 = vmatprep.subr.mxu0 0.0
      %2845 = vmatpush1.msra.mxu0 %v2842
      %2846 = vmatprep.subr.mxu0 0.0
      %2847 = vmatpush1.msra.mxu0 0.0
      %2848 = vmatprep.subr.mxu0 0.0
      %2849 = vmatpush1.msra.mxu0 0.0
      %2850 = vmatprep.subr.mxu0 0.0
      %2851 = vmatpush1.msra.mxu0 0.0
      %2852 = vmatprep.subr.mxu0 0.0
      %2853 = vmatpush1.msra.mxu0 0.0
      %2854 = vmatprep.subr.mxu0 0.0
      %2855 = vmatpush1.msra.mxu0 0.0
      %2856 = vmatprep.subr.mxu0 0.0
      %2857 = vmatpush1.msra.mxu0 0.0
      %2858 = vmatprep.subr.mxu0 0.0
      %2859 = vmatpush1.msra.mxu0 0.0
      %2860 = vmatprep.subr.mxu0 0.0
      %2861 = vmatpush1.msra.mxu0 0.0
      %2862 = vmatprep.subr.mxu0 0.0
      %2863 = vmatpush1.msra.mxu0 0.0
      %2864 = vmatprep.subr.mxu0 0.0
      %2865 = vmatpush1.msra.mxu0 0.0
      %2866 = vmatprep.subr.mxu0 0.0
      %2867 = vmatpush1.msra.mxu0 0.0
      %2868 = vmatprep.subr.mxu0 0.0
      %2869 = vmatpush1.msra.mxu0 0.0
      %2870 = vmatprep.subr.mxu0 0.0
      %2871 = vmatpush1.msra.mxu0 0.0
      %2872 = vmatprep.subr.mxu0 0.0
      %2873 = vmatpush1.msra.mxu0 0.0
      %2874 = vmatprep.subr.mxu0 0.0
      %2875 = vmatpush1.msra.mxu0 0.0
      %2876 = vmatprep.subr.mxu0 0.0
      %2877 = vmatpush1.msra.mxu0 0.0
      %2878 = vmatprep.subr.mxu0 0.0
      %2879 = vmatpush1.msra.mxu0 0.0
      %2880 = vmatprep.subr.mxu0 0.0
      %2881 = vmatpush1.msra.mxu0 0.0
      %2882 = vmatprep.subr.mxu0 0.0
      %2883 = vmatpush1.msra.mxu0 0.0
      %2884 = vmatprep.subr.mxu0 0.0
      %2885 = vmatpush1.msra.mxu0 0.0
      %2886 = vmatprep.subr.mxu0 0.0
      %2887 = vmatpush1.msra.mxu0 0.0
      %2888 = vmatprep.subr.mxu0 0.0
      %2889 = vmatpush1.msra.mxu0 0.0
      %2890 = vmatprep.subr.mxu0 0.0
      %2891 = vmatpush1.msra.mxu0 0.0
      %2892 = vmatprep.subr.mxu0 0.0
      %2893 = vmatpush1.msra.mxu0 0.0
      %2894 = vmatprep.subr.mxu0 0.0
      %2895 = vmatpush1.msra.mxu0 0.0
      %2896 = vmatprep.subr.mxu0 0.0
      %2897 = vmatpush1.msra.mxu0 0.0
      %2898 = vmatprep.subr.mxu0 0.0
      %2899 = vmatpush1.msra.mxu0 0.0
      %2900 = vmatprep.subr.mxu0 0.0
      %2901 = vmatpush1.msra.mxu0 0.0
      %2902 = vmatprep.subr.mxu0 0.0
      %2903 = vmatpush1.msra.mxu0 0.0
      %2904 = vmatprep.subr.mxu0 0.0
      %2905 = vmatpush1.msra.mxu0 0.0
      %2906 = vmatprep.subr.mxu0 0.0
      %2907 = vmatpush1.msra.mxu0 0.0
      %2908 = vmatprep.mubr.f32.mxu0 0.0
      %2909 = vmatmul.mubr.f32.gmra.mrb[0].mxu0 %v2818
      %v2910 = vpop.f32.mrb[0].mxu0
      %v2911 = vadd.f32 0.0, %v2910
      %v2912 = vpop.f32.mrb[0].mxu0
      %2913 = vmatprep.mubr.f32.mxu0 0.0
      %2914 = vmatmul.mubr.f32.gmra.mrb[0].mxu0 %v2821
      %v2915 = vpop.f32.mrb[0].mxu0
      %v2916 = vadd.f32 0.0, %v2915
      %v2917 = vpop.f32.mrb[0].mxu0
      %2918 = vmatprep.mubr.f32.mxu0 0.0
      %2919 = vmatmul.mubr.f32.gmra.mrb[0].mxu0 %v2824
      %v2920 = vpop.f32.mrb[0].mxu0
      %v2921 = vadd.f32 0.0, %v2920
      %v2922 = vpop.f32.mrb[0].mxu0
      %2923 = vmatprep.mubr.f32.mxu0 0.0
      %2924 = vmatmul.mubr.f32.gmra.mrb[0].mxu0 %v2827
      %v2925 = vpop.f32.mrb[0].mxu0
      %v2926 = vadd.f32 0.0, %v2925
      %v2927 = vpop.f32.mrb[0].mxu0
      %2928 = vmatprep.mubr.f32.mxu0 0.0
      %2929 = vmatmul.mubr.f32.gmra.mrb[0].mxu0 %v2830
      %v2930 = vpop.f32.mrb[0].mxu0
      %v2931 = vadd.f32 0.0, %v2930
      %v2932 = vpop.f32.mrb[0].mxu0
      %2933 = vmatprep.mubr.f32.mxu0 0.0
      %2934 = vmatmul.mubr.f32.gmra.mrb[0].mxu0 %v2833
      %v2935 = vpop.f32.mrb[0].mxu0
      %v2936 = vadd.f32 0.0, %v2935
      %v2937 = vpop.f32.mrb[0].mxu0
      %2938 = vmatprep.mubr.f32.mxu0 0.0
      %2939 = vmatmul.mubr.f32.gmra.mrb[0].mxu0 %v2836
      %v2940 = vpop.f32.mrb[0].mxu0
      %v2941 = vadd.f32 0.0, %v2940
      %v2942 = vpop.f32.mrb[0].mxu0
      %2943 = vmatprep.mubr.f32.mxu0 0.0
      %2944 = vmatmul.mubr.f32.gmra.mrb[0].mxu0 %v2839
      %v2945 = vpop.f32.mrb[0].mxu0
      %v2946 = vadd.f32 0.0, %v2945
      %v2947 = vpop.f32.mrb[0].mxu0
      %2948 = vdwg.mxu0
      %v2949 = vadd.f32 %v2787, %v2911
      %v2950 = vadd.f32 %v2788, %v2916
      %v2951 = vadd.f32 %v2789, %v2921
      %v2952 = vadd.f32 %v2790, %v2926
      %v2953 = vadd.f32 %v2791, %v2931
      %v2954 = vadd.f32 %v2792, %v2936
      %v2955 = vadd.f32 %v2793, %v2941
      %v2956 = vadd.f32 %v2794, %v2946
      %v2965 = vrot.slane %v2795, 1
      %v2966 = vrot.slane %v2796, 1
      %v2967 = vsel %vm401, %v2965, %v2966
      %v2968 = vrot.slane %v2797, 1
      %v2969 = vrot.slane %v2798, 1
      %v2970 = vsel %vm401, %v2968, %v2969
      %v2971 = vrot.slane %v2799, 1
      %v2972 = vrot.slane %v2800, 1
      %v2973 = vsel %vm401, %v2971, %v2972
      %v2974 = vrot.slane %v2801, 1
      %v2975 = vrot.slane %v2802, 1
      %v2976 = vsel %vm401, %v2974, %v2975
      %v2977 = vrot.slane %v2803, 1
      %v2978 = vrot.slane %v2804, 1
      %v2979 = vsel %vm401, %v2977, %v2978
      %v2980 = vrot.slane %v2805, 1
      %v2981 = vrot.slane %v2806, 1
      %v2982 = vsel %vm401, %v2980, %v2981
      %v2983 = vrot.slane %v2807, 1
      %v2984 = vrot.slane %v2808, 1
      %v2985 = vsel %vm401, %v2983, %v2984
      %v2986 = vrot.slane %v2809, 1
      %v2987 = vrot.slane %v2810, 1
      %v2988 = vsel %vm401, %v2986, %v2987
      %s2989 = scalar_lea.vmem %s3, 76
      %v2990 = vld [vmem:[%s2989] sm:$0xf]
      %v2991 = vsel %vm428, %v2967, 0
      %v2993 = vsel %vm428, %v2970, 0
      %v2995 = vsel %vm428, %v2973, 0
      %v2997 = vsel %vm428, %v2976, 0
      %v2999 = vsel %vm428, %v2979, 0
      %v3001 = vsel %vm428, %v2982, 0
      %v3003 = vsel %vm428, %v2985, 0
      %v3005 = vsel %vm428, %v2988, 0
      %v3008 = vsel %vm445, %v2990, 0
      %3010 = vmatprep.subr.mxu0 0.0
      %3011 = vmatpush1.msra.mxu0 %v3008
      %3012 = vmatprep.subr.mxu0 0.0
      %3013 = vmatpush1.msra.mxu0 0.0
      %3014 = vmatprep.subr.mxu0 0.0
      %3015 = vmatpush1.msra.mxu0 0.0
      %3016 = vmatprep.subr.mxu0 0.0
      %3017 = vmatpush1.msra.mxu0 0.0
      %3018 = vmatprep.subr.mxu0 0.0
      %3019 = vmatpush1.msra.mxu0 0.0
      %3020 = vmatprep.subr.mxu0 0.0
      %3021 = vmatpush1.msra.mxu0 0.0
      %3022 = vmatprep.subr.mxu0 0.0
      %3023 = vmatpush1.msra.mxu0 0.0
      %3024 = vmatprep.subr.mxu0 0.0
      %3025 = vmatpush1.msra.mxu0 0.0
      %3026 = vmatprep.subr.mxu0 0.0
      %3027 = vmatpush1.msra.mxu0 0.0
      %3028 = vmatprep.subr.mxu0 0.0
      %3029 = vmatpush1.msra.mxu0 0.0
      %3030 = vmatprep.subr.mxu0 0.0
      %3031 = vmatpush1.msra.mxu0 0.0
      %3032 = vmatprep.subr.mxu0 0.0
      %3033 = vmatpush1.msra.mxu0 0.0
      %3034 = vmatprep.subr.mxu0 0.0
      %3035 = vmatpush1.msra.mxu0 0.0
      %3036 = vmatprep.subr.mxu0 0.0
      %3037 = vmatpush1.msra.mxu0 0.0
      %3038 = vmatprep.subr.mxu0 0.0
      %3039 = vmatpush1.msra.mxu0 0.0
      %3040 = vmatprep.subr.mxu0 0.0
      %3041 = vmatpush1.msra.mxu0 0.0
      %3042 = vmatprep.subr.mxu0 0.0
      %3043 = vmatpush1.msra.mxu0 0.0
      %3044 = vmatprep.subr.mxu0 0.0
      %3045 = vmatpush1.msra.mxu0 0.0
      %3046 = vmatprep.subr.mxu0 0.0
      %3047 = vmatpush1.msra.mxu0 0.0
      %3048 = vmatprep.subr.mxu0 0.0
      %3049 = vmatpush1.msra.mxu0 0.0
      %3050 = vmatprep.subr.mxu0 0.0
      %3051 = vmatpush1.msra.mxu0 0.0
      %3052 = vmatprep.subr.mxu0 0.0
      %3053 = vmatpush1.msra.mxu0 0.0
      %3054 = vmatprep.subr.mxu0 0.0
      %3055 = vmatpush1.msra.mxu0 0.0
      %3056 = vmatprep.subr.mxu0 0.0
      %3057 = vmatpush1.msra.mxu0 0.0
      %3058 = vmatprep.subr.mxu0 0.0
      %3059 = vmatpush1.msra.mxu0 0.0
      %3060 = vmatprep.subr.mxu0 0.0
      %3061 = vmatpush1.msra.mxu0 0.0
      %3062 = vmatprep.subr.mxu0 0.0
      %3063 = vmatpush1.msra.mxu0 0.0
      %3064 = vmatprep.subr.mxu0 0.0
      %3065 = vmatpush1.msra.mxu0 0.0
      %3066 = vmatprep.subr.mxu0 0.0
      %3067 = vmatpush1.msra.mxu0 0.0
      %3068 = vmatprep.subr.mxu0 0.0
      %3069 = vmatpush1.msra.mxu0 0.0
      %3070 = vmatprep.subr.mxu0 0.0
      %3071 = vmatpush1.msra.mxu0 0.0
      %3072 = vmatprep.subr.mxu0 0.0
      %3073 = vmatpush1.msra.mxu0 0.0
      %3074 = vmatprep.mubr.f32.mxu0 0.0
      %3075 = vmatmul.mubr.f32.gmra.mrb[0].mxu0 %v2991
      %v3076 = vpop.f32.mrb[0].mxu0
      %v3077 = vadd.f32 0.0, %v3076
      %v3078 = vpop.f32.mrb[0].mxu0
      %3079 = vmatprep.mubr.f32.mxu0 0.0
      %3080 = vmatmul.mubr.f32.gmra.mrb[0].mxu0 %v2993
      %v3081 = vpop.f32.mrb[0].mxu0
      %v3082 = vadd.f32 0.0, %v3081
      %v3083 = vpop.f32.mrb[0].mxu0
      %3084 = vmatprep.mubr.f32.mxu0 0.0
      %3085 = vmatmul.mubr.f32.gmra.mrb[0].mxu0 %v2995
      %v3086 = vpop.f32.mrb[0].mxu0
      %v3087 = vadd.f32 0.0, %v3086
      %v3088 = vpop.f32.mrb[0].mxu0
      %3089 = vmatprep.mubr.f32.mxu0 0.0
      %3090 = vmatmul.mubr.f32.gmra.mrb[0].mxu0 %v2997
      %v3091 = vpop.f32.mrb[0].mxu0
      %v3092 = vadd.f32 0.0, %v3091
      %v3093 = vpop.f32.mrb[0].mxu0
      %3094 = vmatprep.mubr.f32.mxu0 0.0
      %3095 = vmatmul.mubr.f32.gmra.mrb[0].mxu0 %v2999
      %v3096 = vpop.f32.mrb[0].mxu0
      %v3097 = vadd.f32 0.0, %v3096
      %v3098 = vpop.f32.mrb[0].mxu0
      %3099 = vmatprep.mubr.f32.mxu0 0.0
      %3100 = vmatmul.mubr.f32.gmra.mrb[0].mxu0 %v3001
      %v3101 = vpop.f32.mrb[0].mxu0
      %v3102 = vadd.f32 0.0, %v3101
      %v3103 = vpop.f32.mrb[0].mxu0
      %3104 = vmatprep.mubr.f32.mxu0 0.0
      %3105 = vmatmul.mubr.f32.gmra.mrb[0].mxu0 %v3003
      %v3106 = vpop.f32.mrb[0].mxu0
      %v3107 = vadd.f32 0.0, %v3106
      %v3108 = vpop.f32.mrb[0].mxu0
      %3109 = vmatprep.mubr.f32.mxu0 0.0
      %3110 = vmatmul.mubr.f32.gmra.mrb[0].mxu0 %v3005
      %v3111 = vpop.f32.mrb[0].mxu0
      %v3112 = vadd.f32 0.0, %v3111
      %v3113 = vpop.f32.mrb[0].mxu0
      %3114 = vdwg.mxu0
      %v3115 = vadd.f32 %v2949, %v3077
      %v3116 = vadd.f32 %v2950, %v3082
      %v3117 = vadd.f32 %v2951, %v3087
      %v3118 = vadd.f32 %v2952, %v3092
      %v3119 = vadd.f32 %v2953, %v3097
      %v3120 = vadd.f32 %v2954, %v3102
      %v3121 = vadd.f32 %v2955, %v3107
      %v3122 = vadd.f32 %v2956, %v3112
      %v3123 = vrot.slane %v2795, 2
      %v3124 = vrot.slane %v2796, 2
      %v3125 = vsel %vm678, %v3123, %v3124
      %v3126 = vrot.slane %v2797, 2
      %v3127 = vrot.slane %v2798, 2
      %v3128 = vsel %vm678, %v3126, %v3127
      %v3129 = vrot.slane %v2799, 2
      %v3130 = vrot.slane %v2800, 2
      %v3131 = vsel %vm678, %v3129, %v3130
      %v3132 = vrot.slane %v2801, 2
      %v3133 = vrot.slane %v2802, 2
      %v3134 = vsel %vm678, %v3132, %v3133
      %v3135 = vrot.slane %v2803, 2
      %v3136 = vrot.slane %v2804, 2
      %v3137 = vsel %vm678, %v3135, %v3136
      %v3138 = vrot.slane %v2805, 2
      %v3139 = vrot.slane %v2806, 2
      %v3140 = vsel %vm678, %v3138, %v3139
      %v3141 = vrot.slane %v2807, 2
      %v3142 = vrot.slane %v2808, 2
      %v3143 = vsel %vm678, %v3141, %v3142
      %v3144 = vrot.slane %v2809, 2
      %v3145 = vrot.slane %v2810, 2
      %v3146 = vsel %vm678, %v3144, %v3145
      %s3147 = scalar_lea.vmem %s3, 80
      %v3148 = vld [vmem:[%s3147] sm:$0xf]
      %v3149 = vsel %vm428, %v3125, 0
      %v3151 = vsel %vm428, %v3128, 0
      %v3153 = vsel %vm428, %v3131, 0
      %v3155 = vsel %vm428, %v3134, 0
      %v3157 = vsel %vm428, %v3137, 0
      %v3159 = vsel %vm428, %v3140, 0
      %v3161 = vsel %vm428, %v3143, 0
      %v3163 = vsel %vm428, %v3146, 0
      %v3166 = vsel %vm445, %v3148, 0
      %3168 = vmatprep.subr.mxu0 0.0
      %3169 = vmatpush1.msra.mxu0 %v3166
      %3170 = vmatprep.subr.mxu0 0.0
      %3171 = vmatpush1.msra.mxu0 0.0
      %3172 = vmatprep.subr.mxu0 0.0
      %3173 = vmatpush1.msra.mxu0 0.0
      %3174 = vmatprep.subr.mxu0 0.0
      %3175 = vmatpush1.msra.mxu0 0.0
      %3176 = vmatprep.subr.mxu0 0.0
      %3177 = vmatpush1.msra.mxu0 0.0
      %3178 = vmatprep.subr.mxu0 0.0
      %3179 = vmatpush1.msra.mxu0 0.0
      %3180 = vmatprep.subr.mxu0 0.0
      %3181 = vmatpush1.msra.mxu0 0.0
      %3182 = vmatprep.subr.mxu0 0.0
      %3183 = vmatpush1.msra.mxu0 0.0
      %3184 = vmatprep.subr.mxu0 0.0
      %3185 = vmatpush1.msra.mxu0 0.0
      %3186 = vmatprep.subr.mxu0 0.0
      %3187 = vmatpush1.msra.mxu0 0.0
      %3188 = vmatprep.subr.mxu0 0.0
      %3189 = vmatpush1.msra.mxu0 0.0
      %3190 = vmatprep.subr.mxu0 0.0
      %3191 = vmatpush1.msra.mxu0 0.0
      %3192 = vmatprep.subr.mxu0 0.0
      %3193 = vmatpush1.msra.mxu0 0.0
      %3194 = vmatprep.subr.mxu0 0.0
      %3195 = vmatpush1.msra.mxu0 0.0
      %3196 = vmatprep.subr.mxu0 0.0
      %3197 = vmatpush1.msra.mxu0 0.0
      %3198 = vmatprep.subr.mxu0 0.0
      %3199 = vmatpush1.msra.mxu0 0.0
      %3200 = vmatprep.subr.mxu0 0.0
      %3201 = vmatpush1.msra.mxu0 0.0
      %3202 = vmatprep.subr.mxu0 0.0
      %3203 = vmatpush1.msra.mxu0 0.0
      %3204 = vmatprep.subr.mxu0 0.0
      %3205 = vmatpush1.msra.mxu0 0.0
      %3206 = vmatprep.subr.mxu0 0.0
      %3207 = vmatpush1.msra.mxu0 0.0
      %3208 = vmatprep.subr.mxu0 0.0
      %3209 = vmatpush1.msra.mxu0 0.0
      %3210 = vmatprep.subr.mxu0 0.0
      %3211 = vmatpush1.msra.mxu0 0.0
      %3212 = vmatprep.subr.mxu0 0.0
      %3213 = vmatpush1.msra.mxu0 0.0
      %3214 = vmatprep.subr.mxu0 0.0
      %3215 = vmatpush1.msra.mxu0 0.0
      %3216 = vmatprep.subr.mxu0 0.0
      %3217 = vmatpush1.msra.mxu0 0.0
      %3218 = vmatprep.subr.mxu0 0.0
      %3219 = vmatpush1.msra.mxu0 0.0
      %3220 = vmatprep.subr.mxu0 0.0
      %3221 = vmatpush1.msra.mxu0 0.0
      %3222 = vmatprep.subr.mxu0 0.0
      %3223 = vmatpush1.msra.mxu0 0.0
      %3224 = vmatprep.subr.mxu0 0.0
      %3225 = vmatpush1.msra.mxu0 0.0
      %3226 = vmatprep.subr.mxu0 0.0
      %3227 = vmatpush1.msra.mxu0 0.0
      %3228 = vmatprep.subr.mxu0 0.0
      %3229 = vmatpush1.msra.mxu0 0.0
      %3230 = vmatprep.subr.mxu0 0.0
      %3231 = vmatpush1.msra.mxu0 0.0
      %3232 = vmatprep.mubr.f32.mxu0 0.0
      %3233 = vmatmul.mubr.f32.gmra.mrb[0].mxu0 %v3149
      %v3234 = vpop.f32.mrb[0].mxu0
      %v3235 = vadd.f32 0.0, %v3234
      %v3236 = vpop.f32.mrb[0].mxu0
      %3237 = vmatprep.mubr.f32.mxu0 0.0
      %3238 = vmatmul.mubr.f32.gmra.mrb[0].mxu0 %v3151
      %v3239 = vpop.f32.mrb[0].mxu0
      %v3240 = vadd.f32 0.0, %v3239
      %v3241 = vpop.f32.mrb[0].mxu0
      %3242 = vmatprep.mubr.f32.mxu0 0.0
      %3243 = vmatmul.mubr.f32.gmra.mrb[0].mxu0 %v3153
      %v3244 = vpop.f32.mrb[0].mxu0
      %v3245 = vadd.f32 0.0, %v3244
      %v3246 = vpop.f32.mrb[0].mxu0
      %3247 = vmatprep.mubr.f32.mxu0 0.0
      %3248 = vmatmul.mubr.f32.gmra.mrb[0].mxu0 %v3155
      %v3249 = vpop.f32.mrb[0].mxu0
      %v3250 = vadd.f32 0.0, %v3249
      %v3251 = vpop.f32.mrb[0].mxu0
      %3252 = vmatprep.mubr.f32.mxu0 0.0
      %3253 = vmatmul.mubr.f32.gmra.mrb[0].mxu0 %v3157
      %v3254 = vpop.f32.mrb[0].mxu0
      %v3255 = vadd.f32 0.0, %v3254
      %v3256 = vpop.f32.mrb[0].mxu0
      %3257 = vmatprep.mubr.f32.mxu0 0.0
      %3258 = vmatmul.mubr.f32.gmra.mrb[0].mxu0 %v3159
      %v3259 = vpop.f32.mrb[0].mxu0
      %v3260 = vadd.f32 0.0, %v3259
      %v3261 = vpop.f32.mrb[0].mxu0
      %3262 = vmatprep.mubr.f32.mxu0 0.0
      %3263 = vmatmul.mubr.f32.gmra.mrb[0].mxu0 %v3161
      %v3264 = vpop.f32.mrb[0].mxu0
      %v3265 = vadd.f32 0.0, %v3264
      %v3266 = vpop.f32.mrb[0].mxu0
      %3267 = vmatprep.mubr.f32.mxu0 0.0
      %3268 = vmatmul.mubr.f32.gmra.mrb[0].mxu0 %v3163
      %v3269 = vpop.f32.mrb[0].mxu0
      %v3270 = vadd.f32 0.0, %v3269
      %v3271 = vpop.f32.mrb[0].mxu0
      %3272 = vdwg.mxu0
      %v3273 = vadd.f32 %v3115, %v3235
      %v3274 = vadd.f32 %v3116, %v3240
      %v3275 = vadd.f32 %v3117, %v3245
      %v3276 = vadd.f32 %v3118, %v3250
      %v3277 = vadd.f32 %v3119, %v3255
      %v3278 = vadd.f32 %v3120, %v3260
      %v3279 = vadd.f32 %v3121, %v3265
      %v3280 = vadd.f32 %v3122, %v3270
      %s3281 = scalar_lea.vmem %s3, 84
      %v3282 = vld [vmem:[%s3281] sm:$0xf]
      %v3284 = vsel %vm428, %v2811, 0
      %v3287 = vsel %vm445, %v3282, 0
      %3289 = vmatprep.subr.mxu0 0.0
      %3290 = vmatpush1.msra.mxu0 %v3287
      %3291 = vmatprep.subr.mxu0 0.0
      %3292 = vmatpush1.msra.mxu0 0.0
      %3293 = vmatprep.subr.mxu0 0.0
      %3294 = vmatpush1.msra.mxu0 0.0
      %3295 = vmatprep.subr.mxu0 0.0
      %3296 = vmatpush1.msra.mxu0 0.0
      %3297 = vmatprep.subr.mxu0 0.0
      %3298 = vmatpush1.msra.mxu0 0.0
      %3299 = vmatprep.subr.mxu0 0.0
      %3300 = vmatpush1.msra.mxu0 0.0
      %3301 = vmatprep.subr.mxu0 0.0
      %3302 = vmatpush1.msra.mxu0 0.0
      %3303 = vmatprep.subr.mxu0 0.0
      %3304 = vmatpush1.msra.mxu0 0.0
      %3305 = vmatprep.subr.mxu0 0.0
      %3306 = vmatpush1.msra.mxu0 0.0
      %3307 = vmatprep.subr.mxu0 0.0
      %3308 = vmatpush1.msra.mxu0 0.0
      %3309 = vmatprep.subr.mxu0 0.0
      %3310 = vmatpush1.msra.mxu0 0.0
      %3311 = vmatprep.subr.mxu0 0.0
      %3312 = vmatpush1.msra.mxu0 0.0
      %3313 = vmatprep.subr.mxu0 0.0
      %3314 = vmatpush1.msra.mxu0 0.0
      %3315 = vmatprep.subr.mxu0 0.0
      %3316 = vmatpush1.msra.mxu0 0.0
      %3317 = vmatprep.subr.mxu0 0.0
      %3318 = vmatpush1.msra.mxu0 0.0
      %3319 = vmatprep.subr.mxu0 0.0
      %3320 = vmatpush1.msra.mxu0 0.0
      %3321 = vmatprep.subr.mxu0 0.0
      %3322 = vmatpush1.msra.mxu0 0.0
      %3323 = vmatprep.subr.mxu0 0.0
      %3324 = vmatpush1.msra.mxu0 0.0
      %3325 = vmatprep.subr.mxu0 0.0
      %3326 = vmatpush1.msra.mxu0 0.0
      %3327 = vmatprep.subr.mxu0 0.0
      %3328 = vmatpush1.msra.mxu0 0.0
      %3329 = vmatprep.subr.mxu0 0.0
      %3330 = vmatpush1.msra.mxu0 0.0
      %3331 = vmatprep.subr.mxu0 0.0
      %3332 = vmatpush1.msra.mxu0 0.0
      %3333 = vmatprep.subr.mxu0 0.0
      %3334 = vmatpush1.msra.mxu0 0.0
      %3335 = vmatprep.subr.mxu0 0.0
      %3336 = vmatpush1.msra.mxu0 0.0
      %3337 = vmatprep.subr.mxu0 0.0
      %3338 = vmatpush1.msra.mxu0 0.0
      %3339 = vmatprep.subr.mxu0 0.0
      %3340 = vmatpush1.msra.mxu0 0.0
      %3341 = vmatprep.subr.mxu0 0.0
      %3342 = vmatpush1.msra.mxu0 0.0
      %3343 = vmatprep.subr.mxu0 0.0
      %3344 = vmatpush1.msra.mxu0 0.0
      %3345 = vmatprep.subr.mxu0 0.0
      %3346 = vmatpush1.msra.mxu0 0.0
      %3347 = vmatprep.subr.mxu0 0.0
      %3348 = vmatpush1.msra.mxu0 0.0
      %3349 = vmatprep.subr.mxu0 0.0
      %3350 = vmatpush1.msra.mxu0 0.0
      %3351 = vmatprep.subr.mxu0 0.0
      %3352 = vmatpush1.msra.mxu0 0.0
      %3353 = vmatprep.mubr.f32.mxu0 0.0
      %3354 = vmatmul.mubr.f32.gmra.mrb[0].mxu0 %v2821
      %v3355 = vpop.f32.mrb[0].mxu0
      %v3356 = vadd.f32 0.0, %v3355
      %v3357 = vpop.f32.mrb[0].mxu0
      %3358 = vmatprep.mubr.f32.mxu0 0.0
      %3359 = vmatmul.mubr.f32.gmra.mrb[0].mxu0 %v2824
      %v3360 = vpop.f32.mrb[0].mxu0
      %v3361 = vadd.f32 0.0, %v3360
      %v3362 = vpop.f32.mrb[0].mxu0
      %3363 = vmatprep.mubr.f32.mxu0 0.0
      %3364 = vmatmul.mubr.f32.gmra.mrb[0].mxu0 %v2827
      %v3365 = vpop.f32.mrb[0].mxu0
      %v3366 = vadd.f32 0.0, %v3365
      %v3367 = vpop.f32.mrb[0].mxu0
      %3368 = vmatprep.mubr.f32.mxu0 0.0
      %3369 = vmatmul.mubr.f32.gmra.mrb[0].mxu0 %v2830
      %v3370 = vpop.f32.mrb[0].mxu0
      %v3371 = vadd.f32 0.0, %v3370
      %v3372 = vpop.f32.mrb[0].mxu0
      %3373 = vmatprep.mubr.f32.mxu0 0.0
      %3374 = vmatmul.mubr.f32.gmra.mrb[0].mxu0 %v2833
      %v3375 = vpop.f32.mrb[0].mxu0
      %v3376 = vadd.f32 0.0, %v3375
      %v3377 = vpop.f32.mrb[0].mxu0
      %3378 = vmatprep.mubr.f32.mxu0 0.0
      %3379 = vmatmul.mubr.f32.gmra.mrb[0].mxu0 %v2836
      %v3380 = vpop.f32.mrb[0].mxu0
      %v3381 = vadd.f32 0.0, %v3380
      %v3382 = vpop.f32.mrb[0].mxu0
      %3383 = vmatprep.mubr.f32.mxu0 0.0
      %3384 = vmatmul.mubr.f32.gmra.mrb[0].mxu0 %v2839
      %v3385 = vpop.f32.mrb[0].mxu0
      %v3386 = vadd.f32 0.0, %v3385
      %v3387 = vpop.f32.mrb[0].mxu0
      %3388 = vmatprep.mubr.f32.mxu0 0.0
      %3389 = vmatmul.mubr.f32.gmra.mrb[0].mxu0 %v3284
      %v3390 = vpop.f32.mrb[0].mxu0
      %v3391 = vadd.f32 0.0, %v3390
      %v3392 = vpop.f32.mrb[0].mxu0
      %3393 = vdwg.mxu0
      %v3394 = vadd.f32 %v3273, %v3356
      %v3395 = vadd.f32 %v3274, %v3361
      %v3396 = vadd.f32 %v3275, %v3366
      %v3397 = vadd.f32 %v3276, %v3371
      %v3398 = vadd.f32 %v3277, %v3376
      %v3399 = vadd.f32 %v3278, %v3381
      %v3400 = vadd.f32 %v3279, %v3386
      %v3401 = vadd.f32 %v3280, %v3391
      %v3403 = vrot.slane %v2811, 1
      %v3404 = vrot.slane %v2812, 1
      %v3405 = vsel %vm401, %v3403, %v3404
      %s3406 = scalar_lea.vmem %s3, 88
      %v3407 = vld [vmem:[%s3406] sm:$0xf]
      %v3408 = vsel %vm428, %v3405, 0
      %v3411 = vsel %vm445, %v3407, 0
      %3413 = vmatprep.subr.mxu0 0.0
      %3414 = vmatpush1.msra.mxu0 %v3411
      %3415 = vmatprep.subr.mxu0 0.0
      %3416 = vmatpush1.msra.mxu0 0.0
      %3417 = vmatprep.subr.mxu0 0.0
      %3418 = vmatpush1.msra.mxu0 0.0
      %3419 = vmatprep.subr.mxu0 0.0
      %3420 = vmatpush1.msra.mxu0 0.0
      %3421 = vmatprep.subr.mxu0 0.0
      %3422 = vmatpush1.msra.mxu0 0.0
      %3423 = vmatprep.subr.mxu0 0.0
      %3424 = vmatpush1.msra.mxu0 0.0
      %3425 = vmatprep.subr.mxu0 0.0
      %3426 = vmatpush1.msra.mxu0 0.0
      %3427 = vmatprep.subr.mxu0 0.0
      %3428 = vmatpush1.msra.mxu0 0.0
      %3429 = vmatprep.subr.mxu0 0.0
      %3430 = vmatpush1.msra.mxu0 0.0
      %3431 = vmatprep.subr.mxu0 0.0
      %3432 = vmatpush1.msra.mxu0 0.0
      %3433 = vmatprep.subr.mxu0 0.0
      %3434 = vmatpush1.msra.mxu0 0.0
      %3435 = vmatprep.subr.mxu0 0.0
      %3436 = vmatpush1.msra.mxu0 0.0
      %3437 = vmatprep.subr.mxu0 0.0
      %3438 = vmatpush1.msra.mxu0 0.0
      %3439 = vmatprep.subr.mxu0 0.0
      %3440 = vmatpush1.msra.mxu0 0.0
      %3441 = vmatprep.subr.mxu0 0.0
      %3442 = vmatpush1.msra.mxu0 0.0
      %3443 = vmatprep.subr.mxu0 0.0
      %3444 = vmatpush1.msra.mxu0 0.0
      %3445 = vmatprep.subr.mxu0 0.0
      %3446 = vmatpush1.msra.mxu0 0.0
      %3447 = vmatprep.subr.mxu0 0.0
      %3448 = vmatpush1.msra.mxu0 0.0
      %3449 = vmatprep.subr.mxu0 0.0
      %3450 = vmatpush1.msra.mxu0 0.0
      %3451 = vmatprep.subr.mxu0 0.0
      %3452 = vmatpush1.msra.mxu0 0.0
      %3453 = vmatprep.subr.mxu0 0.0
      %3454 = vmatpush1.msra.mxu0 0.0
      %3455 = vmatprep.subr.mxu0 0.0
      %3456 = vmatpush1.msra.mxu0 0.0
      %3457 = vmatprep.subr.mxu0 0.0
      %3458 = vmatpush1.msra.mxu0 0.0
      %3459 = vmatprep.subr.mxu0 0.0
      %3460 = vmatpush1.msra.mxu0 0.0
      %3461 = vmatprep.subr.mxu0 0.0
      %3462 = vmatpush1.msra.mxu0 0.0
      %3463 = vmatprep.subr.mxu0 0.0
      %3464 = vmatpush1.msra.mxu0 0.0
      %3465 = vmatprep.subr.mxu0 0.0
      %3466 = vmatpush1.msra.mxu0 0.0
      %3467 = vmatprep.subr.mxu0 0.0
      %3468 = vmatpush1.msra.mxu0 0.0
      %3469 = vmatprep.subr.mxu0 0.0
      %3470 = vmatpush1.msra.mxu0 0.0
      %3471 = vmatprep.subr.mxu0 0.0
      %3472 = vmatpush1.msra.mxu0 0.0
      %3473 = vmatprep.subr.mxu0 0.0
      %3474 = vmatpush1.msra.mxu0 0.0
      %3475 = vmatprep.subr.mxu0 0.0
      %3476 = vmatpush1.msra.mxu0 0.0
      %3477 = vmatprep.mubr.f32.mxu0 0.0
      %3478 = vmatmul.mubr.f32.gmra.mrb[0].mxu0 %v2993
      %v3479 = vpop.f32.mrb[0].mxu0
      %v3480 = vadd.f32 0.0, %v3479
      %v3481 = vpop.f32.mrb[0].mxu0
      %3482 = vmatprep.mubr.f32.mxu0 0.0
      %3483 = vmatmul.mubr.f32.gmra.mrb[0].mxu0 %v2995
      %v3484 = vpop.f32.mrb[0].mxu0
      %v3485 = vadd.f32 0.0, %v3484
      %v3486 = vpop.f32.mrb[0].mxu0
      %3487 = vmatprep.mubr.f32.mxu0 0.0
      %3488 = vmatmul.mubr.f32.gmra.mrb[0].mxu0 %v2997
      %v3489 = vpop.f32.mrb[0].mxu0
      %v3490 = vadd.f32 0.0, %v3489
      %v3491 = vpop.f32.mrb[0].mxu0
      %3492 = vmatprep.mubr.f32.mxu0 0.0
      %3493 = vmatmul.mubr.f32.gmra.mrb[0].mxu0 %v2999
      %v3494 = vpop.f32.mrb[0].mxu0
      %v3495 = vadd.f32 0.0, %v3494
      %v3496 = vpop.f32.mrb[0].mxu0
      %3497 = vmatprep.mubr.f32.mxu0 0.0
      %3498 = vmatmul.mubr.f32.gmra.mrb[0].mxu0 %v3001
      %v3499 = vpop.f32.mrb[0].mxu0
      %v3500 = vadd.f32 0.0, %v3499
      %v3501 = vpop.f32.mrb[0].mxu0
      %3502 = vmatprep.mubr.f32.mxu0 0.0
      %3503 = vmatmul.mubr.f32.gmra.mrb[0].mxu0 %v3003
      %v3504 = vpop.f32.mrb[0].mxu0
      %v3505 = vadd.f32 0.0, %v3504
      %v3506 = vpop.f32.mrb[0].mxu0
      %3507 = vmatprep.mubr.f32.mxu0 0.0
      %3508 = vmatmul.mubr.f32.gmra.mrb[0].mxu0 %v3005
      %v3509 = vpop.f32.mrb[0].mxu0
      %v3510 = vadd.f32 0.0, %v3509
      %v3511 = vpop.f32.mrb[0].mxu0
      %3512 = vmatprep.mubr.f32.mxu0 0.0
      %3513 = vmatmul.mubr.f32.gmra.mrb[0].mxu0 %v3408
      %v3514 = vpop.f32.mrb[0].mxu0
      %v3515 = vadd.f32 0.0, %v3514
      %v3516 = vpop.f32.mrb[0].mxu0
      %3517 = vdwg.mxu0
      %v3518 = vadd.f32 %v3394, %v3480
      %v3519 = vadd.f32 %v3395, %v3485
      %v3520 = vadd.f32 %v3396, %v3490
      %v3521 = vadd.f32 %v3397, %v3495
      %v3522 = vadd.f32 %v3398, %v3500
      %v3523 = vadd.f32 %v3399, %v3505
      %v3524 = vadd.f32 %v3400, %v3510
      %v3525 = vadd.f32 %v3401, %v3515
      %v3526 = vrot.slane %v2811, 2
      %v3527 = vrot.slane %v2812, 2
      %v3528 = vsel %vm678, %v3526, %v3527
      %s3529 = scalar_lea.vmem %s3, 92
      %v3530 = vld [vmem:[%s3529] sm:$0xf]
      %v3531 = vsel %vm428, %v3528, 0
      %v3534 = vsel %vm445, %v3530, 0
      %3536 = vmatprep.subr.mxu0 0.0
      %3537 = vmatpush1.msra.mxu0 %v3534
      %3538 = vmatprep.subr.mxu0 0.0
      %3539 = vmatpush1.msra.mxu0 0.0
      %3540 = vmatprep.subr.mxu0 0.0
      %3541 = vmatpush1.msra.mxu0 0.0
      %3542 = vmatprep.subr.mxu0 0.0
      %3543 = vmatpush1.msra.mxu0 0.0
      %3544 = vmatprep.subr.mxu0 0.0
      %3545 = vmatpush1.msra.mxu0 0.0
      %3546 = vmatprep.subr.mxu0 0.0
      %3547 = vmatpush1.msra.mxu0 0.0
      %3548 = vmatprep.subr.mxu0 0.0
      %3549 = vmatpush1.msra.mxu0 0.0
      %3550 = vmatprep.subr.mxu0 0.0
      %3551 = vmatpush1.msra.mxu0 0.0
      %3552 = vmatprep.subr.mxu0 0.0
      %3553 = vmatpush1.msra.mxu0 0.0
      %3554 = vmatprep.subr.mxu0 0.0
      %3555 = vmatpush1.msra.mxu0 0.0
      %3556 = vmatprep.subr.mxu0 0.0
      %3557 = vmatpush1.msra.mxu0 0.0
      %3558 = vmatprep.subr.mxu0 0.0
      %3559 = vmatpush1.msra.mxu0 0.0
      %3560 = vmatprep.subr.mxu0 0.0
      %3561 = vmatpush1.msra.mxu0 0.0
      %3562 = vmatprep.subr.mxu0 0.0
      %3563 = vmatpush1.msra.mxu0 0.0
      %3564 = vmatprep.subr.mxu0 0.0
      %3565 = vmatpush1.msra.mxu0 0.0
      %3566 = vmatprep.subr.mxu0 0.0
      %3567 = vmatpush1.msra.mxu0 0.0
      %3568 = vmatprep.subr.mxu0 0.0
      %3569 = vmatpush1.msra.mxu0 0.0
      %3570 = vmatprep.subr.mxu0 0.0
      %3571 = vmatpush1.msra.mxu0 0.0
      %3572 = vmatprep.subr.mxu0 0.0
      %3573 = vmatpush1.msra.mxu0 0.0
      %3574 = vmatprep.subr.mxu0 0.0
      %3575 = vmatpush1.msra.mxu0 0.0
      %3576 = vmatprep.subr.mxu0 0.0
      %3577 = vmatpush1.msra.mxu0 0.0
      %3578 = vmatprep.subr.mxu0 0.0
      %3579 = vmatpush1.msra.mxu0 0.0
      %3580 = vmatprep.subr.mxu0 0.0
      %3581 = vmatpush1.msra.mxu0 0.0
      %3582 = vmatprep.subr.mxu0 0.0
      %3583 = vmatpush1.msra.mxu0 0.0
      %3584 = vmatprep.subr.mxu0 0.0
      %3585 = vmatpush1.msra.mxu0 0.0
      %3586 = vmatprep.subr.mxu0 0.0
      %3587 = vmatpush1.msra.mxu0 0.0
      %3588 = vmatprep.subr.mxu0 0.0
      %3589 = vmatpush1.msra.mxu0 0.0
      %3590 = vmatprep.subr.mxu0 0.0
      %3591 = vmatpush1.msra.mxu0 0.0
      %3592 = vmatprep.subr.mxu0 0.0
      %3593 = vmatpush1.msra.mxu0 0.0
      %3594 = vmatprep.subr.mxu0 0.0
      %3595 = vmatpush1.msra.mxu0 0.0
      %3596 = vmatprep.subr.mxu0 0.0
      %3597 = vmatpush1.msra.mxu0 0.0
      %3598 = vmatprep.subr.mxu0 0.0
      %3599 = vmatpush1.msra.mxu0 0.0
      %3600 = vmatprep.mubr.f32.mxu0 0.0
      %3601 = vmatmul.mubr.f32.gmra.mrb[0].mxu0 %v3151
      %v3602 = vpop.f32.mrb[0].mxu0
      %v3603 = vadd.f32 0.0, %v3602
      %v3604 = vpop.f32.mrb[0].mxu0
      %3605 = vmatprep.mubr.f32.mxu0 0.0
      %3606 = vmatmul.mubr.f32.gmra.mrb[0].mxu0 %v3153
      %v3607 = vpop.f32.mrb[0].mxu0
      %v3608 = vadd.f32 0.0, %v3607
      %v3609 = vpop.f32.mrb[0].mxu0
      %3610 = vmatprep.mubr.f32.mxu0 0.0
      %3611 = vmatmul.mubr.f32.gmra.mrb[0].mxu0 %v3155
      %v3612 = vpop.f32.mrb[0].mxu0
      %v3613 = vadd.f32 0.0, %v3612
      %v3614 = vpop.f32.mrb[0].mxu0
      %3615 = vmatprep.mubr.f32.mxu0 0.0
      %3616 = vmatmul.mubr.f32.gmra.mrb[0].mxu0 %v3157
      %v3617 = vpop.f32.mrb[0].mxu0
      %v3618 = vadd.f32 0.0, %v3617
      %v3619 = vpop.f32.mrb[0].mxu0
      %3620 = vmatprep.mubr.f32.mxu0 0.0
      %3621 = vmatmul.mubr.f32.gmra.mrb[0].mxu0 %v3159
      %v3622 = vpop.f32.mrb[0].mxu0
      %v3623 = vadd.f32 0.0, %v3622
      %v3624 = vpop.f32.mrb[0].mxu0
      %3625 = vmatprep.mubr.f32.mxu0 0.0
      %3626 = vmatmul.mubr.f32.gmra.mrb[0].mxu0 %v3161
      %v3627 = vpop.f32.mrb[0].mxu0
      %v3628 = vadd.f32 0.0, %v3627
      %v3629 = vpop.f32.mrb[0].mxu0
      %3630 = vmatprep.mubr.f32.mxu0 0.0
      %3631 = vmatmul.mubr.f32.gmra.mrb[0].mxu0 %v3163
      %v3632 = vpop.f32.mrb[0].mxu0
      %v3633 = vadd.f32 0.0, %v3632
      %v3634 = vpop.f32.mrb[0].mxu0
      %3635 = vmatprep.mubr.f32.mxu0 0.0
      %3636 = vmatmul.mubr.f32.gmra.mrb[0].mxu0 %v3531
      %v3637 = vpop.f32.mrb[0].mxu0
      %v3638 = vadd.f32 0.0, %v3637
      %v3639 = vpop.f32.mrb[0].mxu0
      %3640 = vdwg.mxu0
      %v3641 = vadd.f32 %v3518, %v3603
      %v3642 = vadd.f32 %v3519, %v3608
      %v3643 = vadd.f32 %v3520, %v3613
      %v3644 = vadd.f32 %v3521, %v3618
      %v3645 = vadd.f32 %v3522, %v3623
      %v3646 = vadd.f32 %v3523, %v3628
      %v3647 = vadd.f32 %v3524, %v3633
      %v3648 = vadd.f32 %v3525, %v3638
      %s3649 = scalar_lea.vmem %s3, 96
      %v3650 = vld [vmem:[%s3649] sm:$0xf]
      %v3652 = vsel %vm428, %v2813, 0
      %v3655 = vsel %vm445, %v3650, 0
      %3657 = vmatprep.subr.mxu0 0.0
      %3658 = vmatpush1.msra.mxu0 %v3655
      %3659 = vmatprep.subr.mxu0 0.0
      %3660 = vmatpush1.msra.mxu0 0.0
      %3661 = vmatprep.subr.mxu0 0.0
      %3662 = vmatpush1.msra.mxu0 0.0
      %3663 = vmatprep.subr.mxu0 0.0
      %3664 = vmatpush1.msra.mxu0 0.0
      %3665 = vmatprep.subr.mxu0 0.0
      %3666 = vmatpush1.msra.mxu0 0.0
      %3667 = vmatprep.subr.mxu0 0.0
      %3668 = vmatpush1.msra.mxu0 0.0
      %3669 = vmatprep.subr.mxu0 0.0
      %3670 = vmatpush1.msra.mxu0 0.0
      %3671 = vmatprep.subr.mxu0 0.0
      %3672 = vmatpush1.msra.mxu0 0.0
      %3673 = vmatprep.subr.mxu0 0.0
      %3674 = vmatpush1.msra.mxu0 0.0
      %3675 = vmatprep.subr.mxu0 0.0
      %3676 = vmatpush1.msra.mxu0 0.0
      %3677 = vmatprep.subr.mxu0 0.0
      %3678 = vmatpush1.msra.mxu0 0.0
      %3679 = vmatprep.subr.mxu0 0.0
      %3680 = vmatpush1.msra.mxu0 0.0
      %3681 = vmatprep.subr.mxu0 0.0
      %3682 = vmatpush1.msra.mxu0 0.0
      %3683 = vmatprep.subr.mxu0 0.0
      %3684 = vmatpush1.msra.mxu0 0.0
      %3685 = vmatprep.subr.mxu0 0.0
      %3686 = vmatpush1.msra.mxu0 0.0
      %3687 = vmatprep.subr.mxu0 0.0
      %3688 = vmatpush1.msra.mxu0 0.0
      %3689 = vmatprep.subr.mxu0 0.0
      %3690 = vmatpush1.msra.mxu0 0.0
      %3691 = vmatprep.subr.mxu0 0.0
      %3692 = vmatpush1.msra.mxu0 0.0
      %3693 = vmatprep.subr.mxu0 0.0
      %3694 = vmatpush1.msra.mxu0 0.0
      %3695 = vmatprep.subr.mxu0 0.0
      %3696 = vmatpush1.msra.mxu0 0.0
      %3697 = vmatprep.subr.mxu0 0.0
      %3698 = vmatpush1.msra.mxu0 0.0
      %3699 = vmatprep.subr.mxu0 0.0
      %3700 = vmatpush1.msra.mxu0 0.0
      %3701 = vmatprep.subr.mxu0 0.0
      %3702 = vmatpush1.msra.mxu0 0.0
      %3703 = vmatprep.subr.mxu0 0.0
      %3704 = vmatpush1.msra.mxu0 0.0
      %3705 = vmatprep.subr.mxu0 0.0
      %3706 = vmatpush1.msra.mxu0 0.0
      %3707 = vmatprep.subr.mxu0 0.0
      %3708 = vmatpush1.msra.mxu0 0.0
      %3709 = vmatprep.subr.mxu0 0.0
      %3710 = vmatpush1.msra.mxu0 0.0
      %3711 = vmatprep.subr.mxu0 0.0
      %3712 = vmatpush1.msra.mxu0 0.0
      %3713 = vmatprep.subr.mxu0 0.0
      %3714 = vmatpush1.msra.mxu0 0.0
      %3715 = vmatprep.subr.mxu0 0.0
      %3716 = vmatpush1.msra.mxu0 0.0
      %3717 = vmatprep.subr.mxu0 0.0
      %3718 = vmatpush1.msra.mxu0 0.0
      %3719 = vmatprep.subr.mxu0 0.0
      %3720 = vmatpush1.msra.mxu0 0.0
      %3721 = vmatprep.mubr.f32.mxu0 0.0
      %3722 = vmatmul.mubr.f32.gmra.mrb[0].mxu0 %v2824
      %v3723 = vpop.f32.mrb[0].mxu0
      %v3724 = vadd.f32 0.0, %v3723
      %v3725 = vpop.f32.mrb[0].mxu0
      %3726 = vmatprep.mubr.f32.mxu0 0.0
      %3727 = vmatmul.mubr.f32.gmra.mrb[0].mxu0 %v2827
      %v3728 = vpop.f32.mrb[0].mxu0
      %v3729 = vadd.f32 0.0, %v3728
      %v3730 = vpop.f32.mrb[0].mxu0
      %3731 = vmatprep.mubr.f32.mxu0 0.0
      %3732 = vmatmul.mubr.f32.gmra.mrb[0].mxu0 %v2830
      %v3733 = vpop.f32.mrb[0].mxu0
      %v3734 = vadd.f32 0.0, %v3733
      %v3735 = vpop.f32.mrb[0].mxu0
      %3736 = vmatprep.mubr.f32.mxu0 0.0
      %3737 = vmatmul.mubr.f32.gmra.mrb[0].mxu0 %v2833
      %v3738 = vpop.f32.mrb[0].mxu0
      %v3739 = vadd.f32 0.0, %v3738
      %v3740 = vpop.f32.mrb[0].mxu0
      %3741 = vmatprep.mubr.f32.mxu0 0.0
      %3742 = vmatmul.mubr.f32.gmra.mrb[0].mxu0 %v2836
      %v3743 = vpop.f32.mrb[0].mxu0
      %v3744 = vadd.f32 0.0, %v3743
      %v3745 = vpop.f32.mrb[0].mxu0
      %3746 = vmatprep.mubr.f32.mxu0 0.0
      %3747 = vmatmul.mubr.f32.gmra.mrb[0].mxu0 %v2839
      %v3748 = vpop.f32.mrb[0].mxu0
      %v3749 = vadd.f32 0.0, %v3748
      %v3750 = vpop.f32.mrb[0].mxu0
      %3751 = vmatprep.mubr.f32.mxu0 0.0
      %3752 = vmatmul.mubr.f32.gmra.mrb[0].mxu0 %v3284
      %v3753 = vpop.f32.mrb[0].mxu0
      %v3754 = vadd.f32 0.0, %v3753
      %v3755 = vpop.f32.mrb[0].mxu0
      %3756 = vmatprep.mubr.f32.mxu0 0.0
      %3757 = vmatmul.mubr.f32.gmra.mrb[0].mxu0 %v3652
      %v3758 = vpop.f32.mrb[0].mxu0
      %v3759 = vadd.f32 0.0, %v3758
      %v3760 = vpop.f32.mrb[0].mxu0
      %3761 = vdwg.mxu0
      %v3762 = vadd.f32 %v3641, %v3724
      %v3763 = vadd.f32 %v3642, %v3729
      %v3764 = vadd.f32 %v3643, %v3734
      %v3765 = vadd.f32 %v3644, %v3739
      %v3766 = vadd.f32 %v3645, %v3744
      %v3767 = vadd.f32 %v3646, %v3749
      %v3768 = vadd.f32 %v3647, %v3754
      %v3769 = vadd.f32 %v3648, %v3759
      %v3771 = vrot.slane %v2813, 1
      %v3772 = vrot.slane %v2814, 1
      %v3773 = vsel %vm401, %v3771, %v3772
      %s3774 = scalar_lea.vmem %s3, 100
      %v3775 = vld [vmem:[%s3774] sm:$0xf]
      %v3776 = vsel %vm428, %v3773, 0
      %v3779 = vsel %vm445, %v3775, 0
      %3781 = vmatprep.subr.mxu0 0.0
      %3782 = vmatpush1.msra.mxu0 %v3779
      %3783 = vmatprep.subr.mxu0 0.0
      %3784 = vmatpush1.msra.mxu0 0.0
      %3785 = vmatprep.subr.mxu0 0.0
      %3786 = vmatpush1.msra.mxu0 0.0
      %3787 = vmatprep.subr.mxu0 0.0
      %3788 = vmatpush1.msra.mxu0 0.0
      %3789 = vmatprep.subr.mxu0 0.0
      %3790 = vmatpush1.msra.mxu0 0.0
      %3791 = vmatprep.subr.mxu0 0.0
      %3792 = vmatpush1.msra.mxu0 0.0
      %3793 = vmatprep.subr.mxu0 0.0
      %3794 = vmatpush1.msra.mxu0 0.0
      %3795 = vmatprep.subr.mxu0 0.0
      %3796 = vmatpush1.msra.mxu0 0.0
      %3797 = vmatprep.subr.mxu0 0.0
      %3798 = vmatpush1.msra.mxu0 0.0
      %3799 = vmatprep.subr.mxu0 0.0
      %3800 = vmatpush1.msra.mxu0 0.0
      %3801 = vmatprep.subr.mxu0 0.0
      %3802 = vmatpush1.msra.mxu0 0.0
      %3803 = vmatprep.subr.mxu0 0.0
      %3804 = vmatpush1.msra.mxu0 0.0
      %3805 = vmatprep.subr.mxu0 0.0
      %3806 = vmatpush1.msra.mxu0 0.0
      %3807 = vmatprep.subr.mxu0 0.0
      %3808 = vmatpush1.msra.mxu0 0.0
      %3809 = vmatprep.subr.mxu0 0.0
      %3810 = vmatpush1.msra.mxu0 0.0
      %3811 = vmatprep.subr.mxu0 0.0
      %3812 = vmatpush1.msra.mxu0 0.0
      %3813 = vmatprep.subr.mxu0 0.0
      %3814 = vmatpush1.msra.mxu0 0.0
      %3815 = vmatprep.subr.mxu0 0.0
      %3816 = vmatpush1.msra.mxu0 0.0
      %3817 = vmatprep.subr.mxu0 0.0
      %3818 = vmatpush1.msra.mxu0 0.0
      %3819 = vmatprep.subr.mxu0 0.0
      %3820 = vmatpush1.msra.mxu0 0.0
      %3821 = vmatprep.subr.mxu0 0.0
      %3822 = vmatpush1.msra.mxu0 0.0
      %3823 = vmatprep.subr.mxu0 0.0
      %3824 = vmatpush1.msra.mxu0 0.0
      %3825 = vmatprep.subr.mxu0 0.0
      %3826 = vmatpush1.msra.mxu0 0.0
      %3827 = vmatprep.subr.mxu0 0.0
      %3828 = vmatpush1.msra.mxu0 0.0
      %3829 = vmatprep.subr.mxu0 0.0
      %3830 = vmatpush1.msra.mxu0 0.0
      %3831 = vmatprep.subr.mxu0 0.0
      %3832 = vmatpush1.msra.mxu0 0.0
      %3833 = vmatprep.subr.mxu0 0.0
      %3834 = vmatpush1.msra.mxu0 0.0
      %3835 = vmatprep.subr.mxu0 0.0
      %3836 = vmatpush1.msra.mxu0 0.0
      %3837 = vmatprep.subr.mxu0 0.0
      %3838 = vmatpush1.msra.mxu0 0.0
      %3839 = vmatprep.subr.mxu0 0.0
      %3840 = vmatpush1.msra.mxu0 0.0
      %3841 = vmatprep.subr.mxu0 0.0
      %3842 = vmatpush1.msra.mxu0 0.0
      %3843 = vmatprep.subr.mxu0 0.0
      %3844 = vmatpush1.msra.mxu0 0.0
      %3845 = vmatprep.mubr.f32.mxu0 0.0
      %3846 = vmatmul.mubr.f32.gmra.mrb[0].mxu0 %v2995
      %v3847 = vpop.f32.mrb[0].mxu0
      %v3848 = vadd.f32 0.0, %v3847
      %v3849 = vpop.f32.mrb[0].mxu0
      %3850 = vmatprep.mubr.f32.mxu0 0.0
      %3851 = vmatmul.mubr.f32.gmra.mrb[0].mxu0 %v2997
      %v3852 = vpop.f32.mrb[0].mxu0
      %v3853 = vadd.f32 0.0, %v3852
      %v3854 = vpop.f32.mrb[0].mxu0
      %3855 = vmatprep.mubr.f32.mxu0 0.0
      %3856 = vmatmul.mubr.f32.gmra.mrb[0].mxu0 %v2999
      %v3857 = vpop.f32.mrb[0].mxu0
      %v3858 = vadd.f32 0.0, %v3857
      %v3859 = vpop.f32.mrb[0].mxu0
      %3860 = vmatprep.mubr.f32.mxu0 0.0
      %3861 = vmatmul.mubr.f32.gmra.mrb[0].mxu0 %v3001
      %v3862 = vpop.f32.mrb[0].mxu0
      %v3863 = vadd.f32 0.0, %v3862
      %v3864 = vpop.f32.mrb[0].mxu0
      %3865 = vmatprep.mubr.f32.mxu0 0.0
      %3866 = vmatmul.mubr.f32.gmra.mrb[0].mxu0 %v3003
      %v3867 = vpop.f32.mrb[0].mxu0
      %v3868 = vadd.f32 0.0, %v3867
      %v3869 = vpop.f32.mrb[0].mxu0
      %3870 = vmatprep.mubr.f32.mxu0 0.0
      %3871 = vmatmul.mubr.f32.gmra.mrb[0].mxu0 %v3005
      %v3872 = vpop.f32.mrb[0].mxu0
      %v3873 = vadd.f32 0.0, %v3872
      %v3874 = vpop.f32.mrb[0].mxu0
      %3875 = vmatprep.mubr.f32.mxu0 0.0
      %3876 = vmatmul.mubr.f32.gmra.mrb[0].mxu0 %v3408
      %v3877 = vpop.f32.mrb[0].mxu0
      %v3878 = vadd.f32 0.0, %v3877
      %v3879 = vpop.f32.mrb[0].mxu0
      %3880 = vmatprep.mubr.f32.mxu0 0.0
      %3881 = vmatmul.mubr.f32.gmra.mrb[0].mxu0 %v3776
      %v3882 = vpop.f32.mrb[0].mxu0
      %v3883 = vadd.f32 0.0, %v3882
      %v3884 = vpop.f32.mrb[0].mxu0
      %3885 = vdwg.mxu0
      %v3886 = vadd.f32 %v3762, %v3848
      %v3887 = vadd.f32 %v3763, %v3853
      %v3888 = vadd.f32 %v3764, %v3858
      %v3889 = vadd.f32 %v3765, %v3863
      %v3890 = vadd.f32 %v3766, %v3868
      %v3891 = vadd.f32 %v3767, %v3873
      %v3892 = vadd.f32 %v3768, %v3878
      %v3893 = vadd.f32 %v3769, %v3883
      %v3894 = vrot.slane %v2813, 2
      %v3895 = vrot.slane %v2814, 2
      %v3896 = vsel %vm678, %v3894, %v3895
      %s3897 = scalar_lea.vmem %s3, 104
      %v3898 = vld [vmem:[%s3897] sm:$0xf]
      %v3899 = vsel %vm428, %v3896, 0
      %v3902 = vsel %vm445, %v3898, 0
      %3904 = vmatprep.subr.mxu0 0.0
      %3905 = vmatpush1.msra.mxu0 %v3902
      %3906 = vmatprep.subr.mxu0 0.0
      %3907 = vmatpush1.msra.mxu0 0.0
      %3908 = vmatprep.subr.mxu0 0.0
      %3909 = vmatpush1.msra.mxu0 0.0
      %3910 = vmatprep.subr.mxu0 0.0
      %3911 = vmatpush1.msra.mxu0 0.0
      %3912 = vmatprep.subr.mxu0 0.0
      %3913 = vmatpush1.msra.mxu0 0.0
      %3914 = vmatprep.subr.mxu0 0.0
      %3915 = vmatpush1.msra.mxu0 0.0
      %3916 = vmatprep.subr.mxu0 0.0
      %3917 = vmatpush1.msra.mxu0 0.0
      %3918 = vmatprep.subr.mxu0 0.0
      %3919 = vmatpush1.msra.mxu0 0.0
      %3920 = vmatprep.subr.mxu0 0.0
      %3921 = vmatpush1.msra.mxu0 0.0
      %3922 = vmatprep.subr.mxu0 0.0
      %3923 = vmatpush1.msra.mxu0 0.0
      %3924 = vmatprep.subr.mxu0 0.0
      %3925 = vmatpush1.msra.mxu0 0.0
      %3926 = vmatprep.subr.mxu0 0.0
      %3927 = vmatpush1.msra.mxu0 0.0
      %3928 = vmatprep.subr.mxu0 0.0
      %3929 = vmatpush1.msra.mxu0 0.0
      %3930 = vmatprep.subr.mxu0 0.0
      %3931 = vmatpush1.msra.mxu0 0.0
      %3932 = vmatprep.subr.mxu0 0.0
      %3933 = vmatpush1.msra.mxu0 0.0
      %3934 = vmatprep.subr.mxu0 0.0
      %3935 = vmatpush1.msra.mxu0 0.0
      %3936 = vmatprep.subr.mxu0 0.0
      %3937 = vmatpush1.msra.mxu0 0.0
      %3938 = vmatprep.subr.mxu0 0.0
      %3939 = vmatpush1.msra.mxu0 0.0
      %3940 = vmatprep.subr.mxu0 0.0
      %3941 = vmatpush1.msra.mxu0 0.0
      %3942 = vmatprep.subr.mxu0 0.0
      %3943 = vmatpush1.msra.mxu0 0.0
      %3944 = vmatprep.subr.mxu0 0.0
      %3945 = vmatpush1.msra.mxu0 0.0
      %3946 = vmatprep.subr.mxu0 0.0
      %3947 = vmatpush1.msra.mxu0 0.0
      %3948 = vmatprep.subr.mxu0 0.0
      %3949 = vmatpush1.msra.mxu0 0.0
      %3950 = vmatprep.subr.mxu0 0.0
      %3951 = vmatpush1.msra.mxu0 0.0
      %3952 = vmatprep.subr.mxu0 0.0
      %3953 = vmatpush1.msra.mxu0 0.0
      %3954 = vmatprep.subr.mxu0 0.0
      %3955 = vmatpush1.msra.mxu0 0.0
      %3956 = vmatprep.subr.mxu0 0.0
      %3957 = vmatpush1.msra.mxu0 0.0
      %3958 = vmatprep.subr.mxu0 0.0
      %3959 = vmatpush1.msra.mxu0 0.0
      %3960 = vmatprep.subr.mxu0 0.0
      %3961 = vmatpush1.msra.mxu0 0.0
      %3962 = vmatprep.subr.mxu0 0.0
      %3963 = vmatpush1.msra.mxu0 0.0
      %3964 = vmatprep.subr.mxu0 0.0
      %3965 = vmatpush1.msra.mxu0 0.0
      %3966 = vmatprep.subr.mxu0 0.0
      %3967 = vmatpush1.msra.mxu0 0.0
      %3968 = vmatprep.mubr.f32.mxu0 0.0
      %3969 = vmatmul.mubr.f32.gmra.mrb[0].mxu0 %v3153
      %v3970 = vpop.f32.mrb[0].mxu0
      %v3971 = vadd.f32 0.0, %v3970
      %v3972 = vpop.f32.mrb[0].mxu0
      %3973 = vmatprep.mubr.f32.mxu0 0.0
      %3974 = vmatmul.mubr.f32.gmra.mrb[0].mxu0 %v3155
      %v3975 = vpop.f32.mrb[0].mxu0
      %v3976 = vadd.f32 0.0, %v3975
      %v3977 = vpop.f32.mrb[0].mxu0
      %3978 = vmatprep.mubr.f32.mxu0 0.0
      %3979 = vmatmul.mubr.f32.gmra.mrb[0].mxu0 %v3157
      %v3980 = vpop.f32.mrb[0].mxu0
      %v3981 = vadd.f32 0.0, %v3980
      %v3982 = vpop.f32.mrb[0].mxu0
      %3983 = vmatprep.mubr.f32.mxu0 0.0
      %3984 = vmatmul.mubr.f32.gmra.mrb[0].mxu0 %v3159
      %v3985 = vpop.f32.mrb[0].mxu0
      %v3986 = vadd.f32 0.0, %v3985
      %v3987 = vpop.f32.mrb[0].mxu0
      %3988 = vmatprep.mubr.f32.mxu0 0.0
      %3989 = vmatmul.mubr.f32.gmra.mrb[0].mxu0 %v3161
      %v3990 = vpop.f32.mrb[0].mxu0
      %v3991 = vadd.f32 0.0, %v3990
      %v3992 = vpop.f32.mrb[0].mxu0
      %3993 = vmatprep.mubr.f32.mxu0 0.0
      %3994 = vmatmul.mubr.f32.gmra.mrb[0].mxu0 %v3163
      %v3995 = vpop.f32.mrb[0].mxu0
      %v3996 = vadd.f32 0.0, %v3995
      %v3997 = vpop.f32.mrb[0].mxu0
      %3998 = vmatprep.mubr.f32.mxu0 0.0
      %3999 = vmatmul.mubr.f32.gmra.mrb[0].mxu0 %v3531
      %v4000 = vpop.f32.mrb[0].mxu0
      %v4001 = vadd.f32 0.0, %v4000
      %v4002 = vpop.f32.mrb[0].mxu0
      %4003 = vmatprep.mubr.f32.mxu0 0.0
      %4004 = vmatmul.mubr.f32.gmra.mrb[0].mxu0 %v3899
      %v4005 = vpop.f32.mrb[0].mxu0
      %v4006 = vadd.f32 0.0, %v4005
      %v4007 = vpop.f32.mrb[0].mxu0
      %4008 = vdwg.mxu0
      %v4009 = vadd.f32 %v3886, %v3971
      %v4010 = vadd.f32 %v3887, %v3976
      %v4011 = vadd.f32 %v3888, %v3981
      %v4012 = vadd.f32 %v3889, %v3986
      %v4013 = vadd.f32 %v3890, %v3991
      %v4014 = vadd.f32 %v3891, %v3996
      %v4015 = vadd.f32 %v3892, %v4001
      %v4016 = vadd.f32 %v3893, %v4006
      %4017 = vst.msk [vmem:[%s355] sm:$0xff] %vm428, %v4009
      %4018 = vst.msk [vmem:[%s355 + $0x8] sm:$0xff] %vm428, %v4010
      %4019 = vst.msk [vmem:[%s355 + $0x10] sm:$0xff] %vm428, %v4011
      %4020 = vst.msk [vmem:[%s355 + $0x18] sm:$0xff] %vm428, %v4012
      %4021 = vst.msk [vmem:[%s355 + $0x20] sm:$0xff] %vm428, %v4013
      %4022 = vst.msk [vmem:[%s355 + $0x28] sm:$0xff] %vm428, %v4014
      %4023 = vst.msk [vmem:[%s355 + $0x30] sm:$0xff] %vm428, %v4015
      %4024 = vst.msk [vmem:[%s355 + $0x38] sm:$0xff] %vm428, %v4016
      %v4025 = vsel %vm428, %v4009, 0.0
      %v4026 = vsel %vm428, %v4010, 0.0
      %v4027 = vadd.f32 %v4025, %v4026
      %v4028 = vsel %vm428, %v4011, 0.0
      %v4029 = vadd.f32 %v4027, %v4028
      %v4030 = vsel %vm428, %v4012, 0.0
      %v4031 = vadd.f32 %v4029, %v4030
      %v4032 = vsel %vm428, %v4013, 0.0
      %v4033 = vadd.f32 %v4031, %v4032
      %v4034 = vsel %vm428, %v4014, 0.0
      %v4035 = vadd.f32 %v4033, %v4034
      %v4036 = vsel %vm428, %v4015, 0.0
      %v4037 = vadd.f32 %v4035, %v4036
      %v4038 = vsel %vm428, %v4016, 0.0
      %v4039 = vadd.f32 %v4037, %v4038
      %v4040 = vrot.slane %v4039, 4
      %v4041 = vadd.f32 %v4039, %v4040
      %v4042 = vrot.slane %v4041, 2
      %v4043 = vadd.f32 %v4041, %v4042
      %v4044 = vrot.slane %v4043, 1
      %v4045 = vadd.f32 %v4043, %v4044
      %vm4046 = vcmask 24576
      %4047 = vst.msk [vmem:[%s363] sm:$0x1] %vm4046, %v4045
      %v4048 = vmul.f32 %v4009, %v4009
      %v4049 = vmul.f32 %v4010, %v4010
      %v4050 = vmul.f32 %v4011, %v4011
      %v4051 = vmul.f32 %v4012, %v4012
      %v4052 = vmul.f32 %v4013, %v4013
      %v4053 = vmul.f32 %v4014, %v4014
      %v4054 = vmul.f32 %v4015, %v4015
      %v4055 = vmul.f32 %v4016, %v4016
      %v4056 = vsel %vm428, %v4048, 0.0
      %v4057 = vsel %vm428, %v4049, 0.0
      %v4058 = vadd.f32 %v4056, %v4057
      %v4059 = vsel %vm428, %v4050, 0.0
      %v4060 = vadd.f32 %v4058, %v4059
      %v4061 = vsel %vm428, %v4051, 0.0
      %v4062 = vadd.f32 %v4060, %v4061
      %v4063 = vsel %vm428, %v4052, 0.0
      %v4064 = vadd.f32 %v4062, %v4063
      %v4065 = vsel %vm428, %v4053, 0.0
      %v4066 = vadd.f32 %v4064, %v4065
      %v4067 = vsel %vm428, %v4054, 0.0
      %v4068 = vadd.f32 %v4066, %v4067
      %v4069 = vsel %vm428, %v4055, 0.0
      %v4070 = vadd.f32 %v4068, %v4069
      %v4071 = vrot.slane %v4070, 4
      %v4072 = vadd.f32 %v4070, %v4071
      %v4073 = vrot.slane %v4072, 2
      %v4074 = vadd.f32 %v4072, %v4073
      %v4075 = vrot.slane %v4074, 1
      %v4076 = vadd.f32 %v4074, %v4075
      %4077 = vst.msk [vmem:[%s363 + $0x1] sm:$0x1] %vm4046, %v4076
      %p4078 = scmp.lt.s32.totalorder %s21, 1
      %s4079 = scalar_select %p4078, %s21, 1
      %p4080 = scmp.lt.s32.totalorder %s22, 7
      %s4081 = scalar_select %p4080, %s22, 7
      %s4082 = smul.addr %s4081, 8
      %s4083 = smul.addr %s4079, 64
      %s4084 = sadd.s32 %s4082, %s4083
      %s4085 = smul.addr %s4084, 8
      %s4086 = scalar_lea.vmem %s4, %s4085
      %p4087 = scmp.lt.s32.totalorder %s21, 1
      %s4088 = scalar_select %p4087, %s21, 1
      %p4089 = scmp.lt.s32.totalorder %s22, 7
      %s4090 = scalar_select %p4089, %s22, 7
      %s4091 = smul.addr %s4088, 8
      %s4092 = sadd.s32 %s4090, %s4091
      %s4093 = smul.addr %s4092, 2
      %s4094 = scalar_lea.vmem %s5, %s4093
      // Predicated region
      $region37: #{_residual_block_impl.4} parent=35 // pred_check
        %p4095 = pneg %p158
      $region38: #{_residual_block_impl.4} parent=35 // pred_check_branch
        %4097 = sbr.rel (%p4095) target = $region40
      $region39: #{_residual_block_impl.4} parent=35 // pred_region
        _
      $region40: #{_residual_block_impl.4} parent=35 // pred_fallthru
        _
      // Predicated region
      $region41: #{_residual_block_impl.4} parent=35 // pred_check
        %p4098 = pneg %p186
      $region42: #{_residual_block_impl.4} parent=35 // pred_check_branch
        %4100 = sbr.rel (%p4098) target = $region44
      $region43: #{_residual_block_impl.4} parent=35 // pred_region
        _
      $region44: #{_residual_block_impl.4} parent=35 // pred_fallthru
        _
    $region36: #{_residual_block_impl.4} parent=5 // pred_fallthru
      _
    %p4101 = scmp.le.s32.totalorder 2, %s12
    // Predicated region
    $region45: #{_residual_block_impl.4} parent=5 // pred_check
      %p4102 = pneg %p4101
    $region46: #{_residual_block_impl.4} parent=5 // pred_check_branch
      %4104 = sbr.rel (%p4102) target = $region48
    $region47: #{_residual_block_impl.4} parent=5 // pred_region
      %s4105 = ssub.s32 %s12, 2
      // Predicated region
      $region49: #{_residual_block_impl.4} parent=47 // pred_check
        %p4106 = pneg %p164
      $region50: #{_residual_block_impl.4} parent=47 // pred_check_branch
        %4108 = sbr.rel (%p4106) target = $region52
      $region51: #{_residual_block_impl.4} parent=47 // pred_region
        %p4109 = scmp.lt.s32.totalorder %s23, 1
        %s4110 = scalar_select %p4109, %s23, 1
        %p4111 = scmp.lt.s32.totalorder %s24, 7
        %s4112 = scalar_select %p4111, %s24, 7
        %s4113 = smul.addr %s4112, 8
        %s4114 = smul.addr %s4110, 64
        %s4115 = sadd.s32 %s4113, %s4114
        %s4116 = smul.addr %s4115, 8
        %s4117 = scalar_lea.vmem %s4, %s4116
      $region52: #{_residual_block_impl.4} parent=47 // pred_fallthru
        _
      // Predicated region
      $region53: #{_residual_block_impl.4} parent=47 // pred_check
        %p4118 = pneg %p192
      $region54: #{_residual_block_impl.4} parent=47 // pred_check_branch
        %4120 = sbr.rel (%p4118) target = $region56
      $region55: #{_residual_block_impl.4} parent=47 // pred_region
        %p4121 = scmp.lt.s32.totalorder %s23, 1
        %s4122 = scalar_select %p4121, %s23, 1
        %p4123 = scmp.lt.s32.totalorder %s24, 7
        %s4124 = scalar_select %p4123, %s24, 7
        %s4125 = smul.addr %s4122, 8
        %s4126 = sadd.s32 %s4124, %s4125
        %s4127 = smul.addr %s4126, 2
        %s4128 = scalar_lea.vmem %s5, %s4127
      $region56: #{_residual_block_impl.4} parent=47 // pred_fallthru
        _
    $region48: #{_residual_block_impl.4} parent=5 // pred_fallthru
      _
  $region6: #{_residual_block_impl.4} parent=0 // loop_footer
    %s16 = sadd.s32 1, %s12
  $region7: #{_residual_block_impl.4} parent=0 // loop_footer_branch
    %11 = sbr.rel target = $region3
  $region8: #{_residual_block_impl.4} parent=0 // loop_exit
    _

// kernel: _residual_block_impl.7
$region0: #{_residual_block_impl.7}
  #allocation0 [shape = 'u32[]', space=smem, size = 0x4, offset = 0x4, fixed_abs, tag = 'smem constant byte address 0x4 - core index']
  #allocation1 [shape = 'u32[144,128]{1,0:T(1,128)}', space=vmem, size = 0x12000, scoped, tag = 'internal scratch']
  %s0 = inlined_call_operand.vmem [shape: f32[16,256], index: 0, kind: input, shape index: {}]
  %s1 = inlined_call_operand.vmem [shape: f32[1,256], index: 1, kind: input, shape index: {}]
  %s2 = inlined_call_operand.vmem [shape: f32[1,256], index: 2, kind: input, shape index: {}]
  %s3 = inlined_call_operand.vmem [shape: f32[16,256], index: 3, kind: input, shape index: {}]
  %s4 = inlined_call_operand.vmem [shape: f32[16,256], index: 4, kind: output, shape index: {}]
  %s5 = sld [smem:[#allocation0]]
  $region49: #{_residual_block_impl.7} parent=0
    _
  %s7 = ssub.s32 1, %s5
  %s8 = scalar_select 0, %s7, %s5
  loop: start=0, step=1, limit=4
  $region2: #{_residual_block_impl.7} parent=0 // loop_pre_header
    _
  $region3: #{_residual_block_impl.7} parent=0 // loop_header
    %s10 = sphi 0, %s14
    %p11 = scmp.ge.s32.totalorder %s10, 4
    %s20 = sphi 0, %s22
    %s23 = sphi 0, %s20
    %s24 = sphi 0, %s23
    %s40 = sphi 0, %s24
    %s44 = sphi 0, %s44
    %s46 = sphi 0, %s44
    %s47 = sphi 0, %s46
    %s61 = sphi 0, %s47
    %s65 = sphi 0, %s65
    %s67 = sphi 0, %s65
    %s68 = sphi 0, %s67
    %s82 = sphi 0, %s68
    %s88 = sphi 0, %s90
    %s91 = sphi 0, %s88
    %s92 = sphi 0, %s91
    %s108 = sphi 0, %s92
    %s114 = sphi 0, %s116
    %s117 = sphi 0, %s114
    %s118 = sphi 0, %s117
    %s134 = sphi 0, %s118
  $region4: #{_residual_block_impl.7} parent=0 // loop_header_branch
    %13 = sbr.rel (%p11) target = $region8
  $region5: #{_residual_block_impl.7} parent=0 // loop_body
    %s15 = ssub.s32 %s10, 1
    %s16 = ssub.s32 %s10, 2
    %s17 = sadd.s32 %s10, 1
    %s18 = ssub.s32 %s10, %s17
    %p19 = scmp.eq.s32.totalorder %s18, 0
    %s21 = sadd.s32 %s20, 1
    %s22 = scalar_select %p19, %s20, %s21
    %p25 = pneg %p19
    %p26 = scmp.eq.s32.totalorder %s10, 1
    %p27 = por %p25, %p26
    %p28 = scmp.ne.s32.totalorder %s20, %s23
    %p29 = scmp.eq.s32.totalorder %s10, 0
    %p30 = por %p28, %p29
    %p31 = scmp.ne.s32.totalorder %s20, %s23
    %p32 = scmp.eq.s32.totalorder %s15, 1
    %p33 = por %p31, %p32
    %p34 = scmp.ne.s32.totalorder %s23, %s24
    %p35 = scmp.eq.s32.totalorder %s15, 0
    %p36 = por %p34, %p35
    %p37 = scmp.ne.s32.totalorder %s23, %s24
    %p38 = scmp.eq.s32.totalorder %s16, 1
    %p39 = por %p37, %p38
    %p41 = scmp.ne.s32.totalorder %s24, %s40
    %p42 = scmp.eq.s32.totalorder %s16, 0
    %p43 = por %p41, %p42
    %s45 = sadd.s32 %s44, 1
    %p48 = scmp.eq.s32.totalorder %s10, 1
    %p49 = scmp.ne.s32.totalorder %s44, %s46
    %p50 = scmp.eq.s32.totalorder %s10, 0
    %p51 = por %p49, %p50
    %p52 = scmp.ne.s32.totalorder %s44, %s46
    %p53 = scmp.eq.s32.totalorder %s15, 1
    %p54 = por %p52, %p53
    %p55 = scmp.ne.s32.totalorder %s46, %s47
    %p56 = scmp.eq.s32.totalorder %s15, 0
    %p57 = por %p55, %p56
    %p58 = scmp.ne.s32.totalorder %s46, %s47
    %p59 = scmp.eq.s32.totalorder %s16, 1
    %p60 = por %p58, %p59
    %p62 = scmp.ne.s32.totalorder %s47, %s61
    %p63 = scmp.eq.s32.totalorder %s16, 0
    %p64 = por %p62, %p63
    %s66 = sadd.s32 %s65, 1
    %p69 = scmp.eq.s32.totalorder %s10, 1
    %p70 = scmp.ne.s32.totalorder %s65, %s67
    %p71 = scmp.eq.s32.totalorder %s10, 0
    %p72 = por %p70, %p71
    %p73 = scmp.ne.s32.totalorder %s65, %s67
    %p74 = scmp.eq.s32.totalorder %s15, 1
    %p75 = por %p73, %p74
    %p76 = scmp.ne.s32.totalorder %s67, %s68
    %p77 = scmp.eq.s32.totalorder %s15, 0
    %p78 = por %p76, %p77
    %p79 = scmp.ne.s32.totalorder %s67, %s68
    %p80 = scmp.eq.s32.totalorder %s16, 1
    %p81 = por %p79, %p80
    %p83 = scmp.ne.s32.totalorder %s68, %s82
    %p84 = scmp.eq.s32.totalorder %s16, 0
    %p85 = por %p83, %p84
    %s86 = ssub.s32 %s10, %s17
    %p87 = scmp.eq.s32.totalorder %s86, 0
    %s89 = sadd.s32 %s88, 1
    %s90 = scalar_select %p87, %s88, %s89
    %p93 = pneg %p87
    %p94 = scmp.eq.s32.totalorder %s10, 1
    %p95 = por %p93, %p94
    %p96 = scmp.ne.s32.totalorder %s88, %s91
    %p97 = scmp.eq.s32.totalorder %s10, 0
    %p98 = por %p96, %p97
    %p99 = scmp.ne.s32.totalorder %s88, %s91
    %p100 = scmp.eq.s32.totalorder %s15, 1
    %p101 = por %p99, %p100
    %p102 = scmp.ne.s32.totalorder %s91, %s92
    %p103 = scmp.eq.s32.totalorder %s15, 0
    %p104 = por %p102, %p103
    %p105 = scmp.ne.s32.totalorder %s91, %s92
    %p106 = scmp.eq.s32.totalorder %s16, 1
    %p107 = por %p105, %p106
    %p109 = scmp.ne.s32.totalorder %s92, %s108
    %p110 = scmp.eq.s32.totalorder %s16, 0
    %p111 = por %p109, %p110
    %s112 = ssub.s32 %s10, %s17
    %p113 = scmp.eq.s32.totalorder %s112, 0
    %s115 = sadd.s32 %s114, 1
    %s116 = scalar_select %p113, %s114, %s115
    %p119 = pneg %p113
    %p120 = scmp.eq.s32.totalorder %s10, 1
    %p121 = por %p119, %p120
    %p122 = scmp.ne.s32.totalorder %s114, %s117
    %p123 = scmp.eq.s32.totalorder %s10, 0
    %p124 = por %p122, %p123
    %p125 = scmp.ne.s32.totalorder %s114, %s117
    %p126 = scmp.eq.s32.totalorder %s15, 1
    %p127 = por %p125, %p126
    %p128 = scmp.ne.s32.totalorder %s117, %s118
    %p129 = scmp.eq.s32.totalorder %s15, 0
    %p130 = por %p128, %p129
    %p131 = scmp.ne.s32.totalorder %s117, %s118
    %p132 = scmp.eq.s32.totalorder %s16, 1
    %p133 = por %p131, %p132
    %p135 = scmp.ne.s32.totalorder %s118, %s134
    %p136 = scmp.eq.s32.totalorder %s16, 0
    %p137 = por %p135, %p136
    %p138 = scmp.le.s32.totalorder 1, %s10
    %p139 = scmp.lt.s32.totalorder %s10, 3
    %p140 = pnand %p138, %p139
    %p141 = pneg %p140
    // Predicated region
    $region9: #{_residual_block_impl.7} parent=5 // pred_check
      _
    $region10: #{_residual_block_impl.7} parent=5 // pred_check_branch
      %143 = sbr.rel (%p140) target = $region12
    $region11: #{_residual_block_impl.7} parent=5 // pred_region
      %s144 = ssub.s32 %s10, 1
      // Predicated region
      $region13: #{_residual_block_impl.7} parent=11 // pred_check
        %p145 = pneg %p57
      $region14: #{_residual_block_impl.7} parent=11 // pred_check_branch
        %147 = sbr.rel (%p145) target = $region16
      $region15: #{_residual_block_impl.7} parent=11 // pred_region
        _
      $region16: #{_residual_block_impl.7} parent=11 // pred_fallthru
        _
      // Predicated region
      $region17: #{_residual_block_impl.7} parent=11 // pred_check
        %p148 = pneg %p78
      $region18: #{_residual_block_impl.7} parent=11 // pred_check_branch
        %150 = sbr.rel (%p148) target = $region20
      $region19: #{_residual_block_impl.7} parent=11 // pred_region
        _
      $region20: #{_residual_block_impl.7} parent=11 // pred_fallthru
        _
    $region12: #{_residual_block_impl.7} parent=5 // pred_fallthru
      _
    %p151 = scmp.lt.s32.totalorder %s10, 2
    // Predicated region
    $region21: #{_residual_block_impl.7} parent=5 // pred_check
      %p152 = pneg %p151
    $region22: #{_residual_block_impl.7} parent=5 // pred_check_branch
      %154 = sbr.rel (%p152) target = $region24
    $region23: #{_residual_block_impl.7} parent=5 // pred_region
      // Predicated region
      $region25: #{_residual_block_impl.7} parent=23 // pred_check
        %p155 = pneg %p30
      $region26: #{_residual_block_impl.7} parent=23 // pred_check_branch
        %157 = sbr.rel (%p155) target = $region28
      $region27: #{_residual_block_impl.7} parent=23 // pred_region
        %p158 = scmp.lt.s32.totalorder %s10, 1
        %s159 = scalar_select %p158, %s10, 1
        %s160 = smul.addr %s159, 2
        %s161 = smul.addr %s160, 8
        %s162 = scalar_lea.vmem %s0, %s161
      $region28: #{_residual_block_impl.7} parent=23 // pred_fallthru
        _
      // Predicated region
      $region29: #{_residual_block_impl.7} parent=23 // pred_check
        %p163 = pneg %p98
      $region30: #{_residual_block_impl.7} parent=23 // pred_check_branch
        %165 = sbr.rel (%p163) target = $region32
      $region31: #{_residual_block_impl.7} parent=23 // pred_region
        %p166 = scmp.lt.s32.totalorder %s10, 1
        %s167 = scalar_select %p166, %s10, 1
        %s168 = smul.addr %s167, 2
        %s169 = smul.addr %s168, 8
        %s170 = scalar_lea.vmem %s3, %s169
      $region32: #{_residual_block_impl.7} parent=23 // pred_fallthru
        _
    $region24: #{_residual_block_impl.7} parent=5 // pred_fallthru
      _
    %p171 = scmp.le.s32.totalorder 1, %s10
    %p172 = scmp.lt.s32.totalorder %s10, 3
    %p173 = pnand %p171, %p172
    %p174 = pneg %p173
    // Predicated region
    $region33: #{_residual_block_impl.7} parent=5 // pred_check
      _
    $region34: #{_residual_block_impl.7} parent=5 // pred_check_branch
      %176 = sbr.rel (%p173) target = $region36
    $region35: #{_residual_block_impl.7} parent=5 // pred_region
      %s177 = ssub.s32 %s10, 1
      %p178 = scmp.lt.s32.totalorder %s15, 1
      %s179 = scalar_select %p178, %s15, 1
      %s180 = smul.addr %s179, 2
      %s181 = smul.addr %s180, 8
      %s182 = scalar_lea.vmem %s0, %s181
      %p183 = pneg %p36
      %p184 = pneg %p33
      %p185 = pneg %p57
      %p186 = pneg %p54
      %p187 = pneg %p78
      %p188 = pneg %p75
      %p189 = scmp.lt.s32.totalorder %s15, 1
      %s190 = scalar_select %p189, %s15, 1
      %s191 = smul.addr %s190, 2
      %s192 = smul.addr %s191, 8
      %s193 = scalar_lea.vmem %s3, %s192
      %p194 = pneg %p104
      %p195 = pneg %p101
      %p196 = pneg %p130
      %p197 = pneg %p127
      %p198 = scmp.lt.s32.totalorder %s15, 1
      %s199 = scalar_select %p198, %s15, 1
      %s200 = smul.addr %s199, 2
      %s201 = smul.addr %s200, 8
      %s202 = scalar_lea.vmem %s4, %s201
      %p203 = scmp.lt.s32.totalorder %s15, 1
      %s204 = scalar_select %p203, %s15, 1
      %s205 = smul.addr %s204, 2
      %s206 = smul.addr %s205, 8
      %s207 = scalar_lea.vmem %s0, %s206
      %p208 = scmp.lt.s32.totalorder %s15, 1
      %s209 = scalar_select %p208, %s15, 1
      %s210 = smul.addr %s209, 2
      %s211 = smul.addr %s210, 8
      %s212 = scalar_lea.vmem %s3, %s211
      %p213 = scmp.lt.s32.totalorder %s15, 1
      %s214 = scalar_select %p213, %s15, 1
      %s215 = smul.addr %s214, 2
      %s216 = smul.addr %s215, 8
      %s217 = scalar_lea.vmem %s4, %s216
      %v218 = vld [vmem:[%s212] sm:$0xff]
      %v219 = vld [vmem:[%s212 + $0x8] sm:$0xff]
      %v220 = vld [vmem:[%s207] sm:$0xff]
      %v221 = vld [vmem:[%s207 + $0x8] sm:$0xff]
      %v222 = vld [vmem:[%s1] sm:$0x3]
      %v224 = vlaneseq
      %v225 = vshrl.u32 %v224, 7
      %v226 = vsub.s32 0, %v225
      %v227 = vrot.slane %v222, %v226
      %v228 = vlaneseq
      %v229 = vshrl.u32 %v228, 7
      %v230 = vsub.s32 1, %v229
      %v231 = vrot.slane %v222, %v230
      %v234 = vmul.f32 %v220, %v227
      %v235 = vmul.f32 %v221, %v231
      %v236 = vld [vmem:[%s2] sm:$0x3]
      %v238 = vlaneseq
      %v239 = vshrl.u32 %v238, 7
      %v240 = vsub.s32 0, %v239
      %v241 = vrot.slane %v236, %v240
      %v242 = vlaneseq
      %v243 = vshrl.u32 %v242, 7
      %v244 = vsub.s32 1, %v243
      %v245 = vrot.slane %v236, %v244
      %v248 = vadd.f32 %v234, %v241
      %v249 = vadd.f32 %v235, %v245
      %v250 = vadd.f32 %v218, %v248
      %v251 = vadd.f32 %v219, %v249
      %252 = vst [vmem:[%s217] sm:$0xff] %v250
      %253 = vst [vmem:[%s217 + $0x8] sm:$0xff] %v251
      %p254 = scmp.lt.s32.totalorder %s15, 1
      %s255 = scalar_select %p254, %s15, 1
      %s256 = smul.addr %s255, 2
      %s257 = smul.addr %s256, 8
      %s258 = scalar_lea.vmem %s4, %s257
      // Predicated region
      $region37: #{_residual_block_impl.7} parent=35 // pred_check
        %p259 = pneg %p127
      $region38: #{_residual_block_impl.7} parent=35 // pred_check_branch
        %261 = sbr.rel (%p259) target = $region40
      $region39: #{_residual_block_impl.7} parent=35 // pred_region
        _
      $region40: #{_residual_block_impl.7} parent=35 // pred_fallthru
        _
    $region36: #{_residual_block_impl.7} parent=5 // pred_fallthru
      _
    %p262 = scmp.le.s32.totalorder 2, %s10
    // Predicated region
    $region41: #{_residual_block_impl.7} parent=5 // pred_check
      %p263 = pneg %p262
    $region42: #{_residual_block_impl.7} parent=5 // pred_check_branch
      %265 = sbr.rel (%p263) target = $region44
    $region43: #{_residual_block_impl.7} parent=5 // pred_region
      %s266 = ssub.s32 %s10, 2
      // Predicated region
      $region45: #{_residual_block_impl.7} parent=43 // pred_check
        %p267 = pneg %p133
      $region46: #{_residual_block_impl.7} parent=43 // pred_check_branch
        %269 = sbr.rel (%p267) target = $region48
      $region47: #{_residual_block_impl.7} parent=43 // pred_region
        %p270 = scmp.lt.s32.totalorder %s16, 1
        %s271 = scalar_select %p270, %s16, 1
        %s272 = smul.addr %s271, 2
        %s273 = smul.addr %s272, 8
        %s274 = scalar_lea.vmem %s4, %s273
      $region48: #{_residual_block_impl.7} parent=43 // pred_fallthru
        _
    $region44: #{_residual_block_impl.7} parent=5 // pred_fallthru
      _
  $region6: #{_residual_block_impl.7} parent=0 // loop_footer
    %s14 = sadd.s32 1, %s10
  $region7: #{_residual_block_impl.7} parent=0 // loop_footer_branch
    %9 = sbr.rel target = $region3
  $region8: #{_residual_block_impl.7} parent=0 // loop_exit
    _

</llo_original>
